<compile_context>
chip_gen: v5e
topology: v5e:2x2
jax: 0.10.0
libtpu: 0.0.40
codegen_flags: <defaults>
</compile_context>

<pallas_src>
import functools

import jax
import jax.numpy as jnp
import numpy as np
from jax import lax
from jax.experimental import pallas as pl
from jax.experimental.pallas import tpu as pltpu


# ----------------------------------------------------------------------------
# Static (shape-only) helper matrices, built with numpy at trace time.
# ----------------------------------------------------------------------------
def _axis_interp_matrix(n):
    """(2n, n) bilinear x2 interpolation weights, align_corners=True."""
    m = 2 * n
    if n == 1:
        return np.ones((m, 1), np.float32)
    pos = np.arange(m, dtype=np.float64) * (n - 1) / (m - 1)
    lo = np.clip(np.floor(pos).astype(np.int64), 0, n - 2)
    frac = pos - lo
    u = np.zeros((m, n), np.float64)
    u[np.arange(m), lo] += 1.0 - frac
    u[np.arange(m), lo + 1] += frac
    return u.astype(np.float32)


def _width_interp_matrix(w, c):
    """(w*c, 2w*c): right-multiply upsamples the W axis of an (H, W*C) tile."""
    return np.kron(_axis_interp_matrix(w).T, np.eye(c, dtype=np.float32))


def _row_shift_matrices(h):
    """(3, h, h): S[kh] @ x reads row (i + kh - 1), zero outside (pad=1)."""
    s = np.zeros((3, h, h), np.float32)
    for kh in range(3):
        for i in range(h):
            j = i + kh - 1
            if 0 <= j < h:
                s[kh, i, j] = 1.0
    return s


def _width_tap_selector(w):
    """(3, w, w): sel[kw, w_in, w_out] = 1 iff w_in == w_out + kw - 1."""
    sel = np.zeros((3, w, w), np.float32)
    for kw in range(3):
        for wi in range(w):
            wo = wi - (kw - 1)
            if 0 <= wo < w:
                sel[kw, wi, wo] = 1.0
    return sel


# ----------------------------------------------------------------------------
# In-kernel helpers (pure matmul + elementwise; no pads/slices/concats).
# ----------------------------------------------------------------------------
def _mm(a, b):
    return jnp.dot(a, b, preferred_element_type=jnp.float32)


def _up_row(x, u, kw):
    """Bilinear x2 (align_corners) upsample of a (H, W*C) tile: U @ x @ Kw."""
    return _mm(_mm(u, x), kw)


def _conv_row(x, s_ref, q_ref, bias):
    """3x3 'same' conv in row layout: (H, W*Cin) -> (H, W*Cout).

    q_ref[kh]: banded (W*Cin, W*Cout) matrix holding the kw taps of the HWIO
    weight; s_ref[kh]: zero-padded (H, H) row shift (kh=1 is identity)."""
    acc = _mm(x, q_ref[1])                      # kh = 1: row shift is identity
    acc += _mm(s_ref[0], _mm(x, q_ref[0]))
    acc += _mm(s_ref[2], _mm(x, q_ref[2]))
    return acc + bias


def _conv_row_cat2(xa, qa_ref, xb, qb_ref, s_ref, bias):
    """3x3 conv of channel-concat(xa, xb) via input-channel-split weights;
    the concat is never materialized (split-weight fusion)."""
    acc = _mm(xa, qa_ref[1]) + _mm(xb, qb_ref[1])
    acc += _mm(s_ref[0], _mm(xa, qa_ref[0]) + _mm(xb, qb_ref[0]))
    acc += _mm(s_ref[2], _mm(xa, qa_ref[2]) + _mm(xb, qb_ref[2]))
    return acc + bias


# ----------------------------------------------------------------------------
# The single fused kernel: whole aggregation forward for one batch element.
# ----------------------------------------------------------------------------
def _aggregation_kernel(
        x1_ref, x2_ref, x3_ref, u1_ref, u2_ref, kw1_ref, kw2c_ref, kw2cc_ref,
        s2_ref, s3_ref,
        q_u1_ref, b_u1_ref, q_u4_ref, b_u4_ref,
        q_u2_ref, b_u2_ref, q_u3_ref, b_u3_ref,
        q_c2a_ref, q_c2b_ref, b_c2_ref,
        q_u5_ref, b_u5_ref,
        q_c3a_ref, q_c3b_ref, b_c3_ref,
        q_45_ref, b_45_ref,
        out_ref):
    f32 = jnp.float32
    x1 = x1_ref[0].astype(f32)            # (H1, W1*C)
    x2 = x2_ref[0].astype(f32)            # (H2, W2*C)
    x3 = x3_ref[0].astype(f32)            # (H3, W3*C)
    u1 = u1_ref[...]
    u2 = u2_ref[...]
    kw1 = kw1_ref[...]
    kw2c = kw2c_ref[...]
    kw2cc = kw2cc_ref[...]

    # --- upsample chain (all values stay in VMEM) ---------------------------
    up_x1 = _up_row(x1, u1, kw1)              # up(x1)        -> (H2, W2*C)
    upup_x1 = _up_row(up_x1, u2, kw2c)        # up(up(x1))    -> (H3, W3*C)
    up_x2 = _up_row(x2, u2, kw2c)             # up(x2)        -> (H3, W3*C)

    # --- conv_upsample1 / conv_upsample4 share the in-VMEM up(x1) -----------
    c1 = _conv_row(up_x1, s2_ref, q_u1_ref, b_u1_ref[...])
    x2_1 = c1 * x2                            # elementwise, no ones tensor
    t4 = _conv_row(up_x1, s2_ref, q_u4_ref, b_u4_ref[...])

    t2 = _conv_row(upup_x1, s3_ref, q_u2_ref, b_u2_ref[...])
    t3 = _conv_row(up_x2, s3_ref, q_u3_ref, b_u3_ref[...])
    x3_1 = t2 * t3 * x3

    # --- conv_concat2(cat(x2_1, t4)) via split weights ----------------------
    x2_2 = _conv_row_cat2(x2_1, q_c2a_ref, t4, q_c2b_ref,
                          s2_ref, b_c2_ref[...])          # (H2, W2*2C)

    up_x2_2 = _up_row(x2_2, u2, kw2cc)                    # (H3, W3*2C)
    t5 = _conv_row(up_x2_2, s3_ref, q_u5_ref, b_u5_ref[...])

    # --- conv_concat3(cat(x3_1, t5)) via split weights ----------------------
    x3_2 = _conv_row_cat2(x3_1, q_c3a_ref, t5, q_c3b_ref,
                          s3_ref, b_c3_ref[...])          # (H3, W3*3C)

    # --- conv5(conv4(.)) as ONE folded 3x3 conv to a single channel ---------
    y = _conv_row(x3_2, s3_ref, q_45_ref, b_45_ref[...])  # (H3, W3)
    out_ref[0] = y.astype(out_ref.dtype)


# ----------------------------------------------------------------------------
# Wrapper: NCHW in / NCHW out, builds the banded weight operands once per call.
# ----------------------------------------------------------------------------
def aggregation_forward(params, x1, x2, x3, x4):
    del x4  # x4 is unused in the reference forward
    f32 = jnp.float32
    N, C, H1, W1 = x1.shape
    H2, W2 = x2.shape[2], x2.shape[3]
    H3, W3 = x3.shape[2], x3.shape[3]
    assert (H2, W2) == (2 * H1, 2 * W1) and (H3, W3) == (2 * H2, 2 * W2)

    # NCHW -> lane-dense row layout (N, H, W*C) (channels fastest per pixel).
    def to_row(t):
        n, c, h, w = t.shape
        return jnp.transpose(t, (0, 2, 3, 1)).reshape(n, h, w * c)

    x1r, x2r, x3r = map(to_row, (x1, x2, x3))

    # Static (shape-only) matrices.
    U1 = jnp.asarray(_axis_interp_matrix(H1))              # (H2, H1)
    U2 = jnp.asarray(_axis_interp_matrix(H2))              # (H3, H2)
    KW1 = jnp.asarray(_width_interp_matrix(W1, C))         # (W1*C,  W2*C)
    KW2c = jnp.asarray(_width_interp_matrix(W2, C))        # (W2*C,  W3*C)
    KW2cc = jnp.asarray(_width_interp_matrix(W2, 2 * C))   # (W2*2C, W3*2C)
    S2 = jnp.asarray(_row_shift_matrices(H2))              # (3, H2, H2)
    S3 = jnp.asarray(_row_shift_matrices(H3))              # (3, H3, H3)
    sel2 = _width_tap_selector(W2)
    sel3 = _width_tap_selector(W3)

    hi = lax.Precision.HIGHEST

    def banded(w, sel):
        kh, _, cin, cout = w.shape
        width = sel.shape[-1]
        q = jnp.einsum('kio,hkcd->hicod', jnp.asarray(sel), w, precision=hi)
        return q.reshape(kh, width * cin, width * cout)

    def brow(b, width):
        return jnp.tile(b, width).reshape(1, width * b.shape[0])

    w_u1, b_u1 = params['conv_upsample1']
    w_u2, b_u2 = params['conv_upsample2']
    w_u3, b_u3 = params['conv_upsample3']
    w_u4, b_u4 = params['conv_upsample4']
    w_u5, b_u5 = params['conv_upsample5']
    w_c2, b_c2 = params['conv_concat2']
    w_c3, b_c3 = params['conv_concat3']
    w_4, b_4 = params['conv4']
    w_5, b_5 = params['conv5']

    Q_u1 = banded(w_u1, sel2)
    Q_u4 = banded(w_u4, sel2)
    Q_u2 = banded(w_u2, sel3)
    Q_u3 = banded(w_u3, sel3)
    Q_c2a = banded(w_c2[:, :, :C, :], sel2)     # split-weight concat fusion
    Q_c2b = banded(w_c2[:, :, C:, :], sel2)
    Q_u5 = banded(w_u5, sel3)
    Q_c3a = banded(w_c3[:, :, :C, :], sel3)
    Q_c3b = banded(w_c3[:, :, C:, :], sel3)

    # Fold the 1x1 conv5 (3C -> 1) into conv4 (both linear): one 3x3 conv
    # straight to a single output channel.  Done once in the wrapper at
    # HIGHEST precision (weight-space contraction of length 3C).
    w5v = w_5.reshape(3 * C)
    w_45 = jnp.einsum('hwio,o->hwi', w_4, w5v, precision=hi)[..., None]
    b_45 = (jnp.dot(b_4, w5v, precision=hi) + b_5.reshape(())).reshape(1)
    Q_45 = banded(w_45, sel3)                               # (3, W3*3C, W3)

    B_u1 = brow(b_u1, W2)
    B_u4 = brow(b_u4, W2)
    B_u2 = brow(b_u2, W3)
    B_u3 = brow(b_u3, W3)
    B_c2 = brow(b_c2, W2)
    B_u5 = brow(b_u5, W3)
    B_c3 = brow(b_c3, W3)
    B_45 = brow(b_45, W3)                                   # (1, W3)

    operands = (x1r, x2r, x3r, U1, U2, KW1, KW2c, KW2cc, S2, S3,
                Q_u1, B_u1, Q_u4, B_u4, Q_u2, B_u2, Q_u3, B_u3,
                Q_c2a, Q_c2b, B_c2, Q_u5, B_u5, Q_c3a, Q_c3b, B_c3,
                Q_45, B_45)

    def batch_spec(h, wc):
        return pl.BlockSpec((1, h, wc), lambda n: (n, 0, 0))

    def const_spec(a):
        nd = a.ndim
        return pl.BlockSpec(a.shape, lambda n, _nd=nd: (0,) * _nd)

    in_specs = ([batch_spec(H1, W1 * C), batch_spec(H2, W2 * C),
                 batch_spec(H3, W3 * C)]
                + [const_spec(a) for a in operands[3:]])

    out = pl.pallas_call(
        _aggregation_kernel,
        out_shape=jax.ShapeDtypeStruct((N, H3, W3), f32),
        grid=(N,),
        in_specs=in_specs,
        out_specs=pl.BlockSpec((1, H3, W3), lambda n: (n, 0, 0)),
        compiler_params=pltpu.CompilerParams(
            dimension_semantics=("parallel",)),
    )(*operands)
    return out[:, None, :, :]   # (N, 1, H3, W3) NCHW


# ----------------------------------------------------------------------------
# Parameters (HWIO). PyTorch init uses std=0.01 / zero bias; a larger std and
# random biases are used in the test so the numerical check is meaningful
# (forward-pass math is identical for any parameter values).
# ----------------------------------------------------------------------------
def init_params(key, channel, std=0.01):
    C = channel
    shapes = {
        'conv_upsample1': (3, 3, C, C),
        'conv_upsample2': (3, 3, C, C),
        'conv_upsample3': (3, 3, C, C),
        'conv_upsample4': (3, 3, C, C),
        'conv_upsample5': (3, 3, 2 * C, 2 * C),
        'conv_concat2': (3, 3, 2 * C, 2 * C),
        'conv_concat3': (3, 3, 3 * C, 3 * C),
        'conv4': (3, 3, 3 * C, 3 * C),
        'conv5': (1, 1, 3 * C, 1),
    }
    params = {}
    keys = jax.random.split(key, 2 * len(shapes))
    for i, (name, shp) in enumerate(sorted(shapes.items())):
        w = std * jax.random.normal(keys[2 * i], shp, jnp.float32)
        b = std * jax.random.normal(keys[2 * i + 1], (shp[-1],), jnp.float32)
        params[name] = (w, b)
    return params


# ----------------------------------------------------------------------------
# Pure-JAX reference (gather-based upsample + lax.conv) for verification.
# ----------------------------------------------------------------------------
def _ref_upsample(x):
    N, H, W, C = x.shape

    def idx(out_size, in_size):
        pos = (jnp.arange(out_size, dtype=jnp.float32)
               * (in_size - 1) / (out_size - 1))
        lo = jnp.clip(jnp.floor(pos).astype(jnp.int32), 0, in_size - 2)
        frac = pos - lo.astype(jnp.float32)
        return lo, lo + 1, frac

    hl, hh, hf = idx(2 * H, H)
    wl, wh, wf = idx(2 * W, W)
    top = (x[:, hl] * (1 - hf)[None, :, None, None]
           + x[:, hh] * hf[None, :, None, None])
    return (top[:, :, wl] * (1 - wf)[None, None, :, None]
            + top[:, :, wh] * wf[None, None, :, None])


def _ref_conv(x, w, b):
    return lax.conv_general_dilated(
        x, w, (1, 1), 'SAME',
        dimension_numbers=('NHWC', 'HWIO', 'NHWC'),
        precision=lax.Precision.HIGHEST) + b


def ref_forward(params, x1, x2, x3, x4):
    del x4
    to_nhwc = lambda t: jnp.transpose(t, (0, 2, 3, 1))
    x1, x2, x3 = map(to_nhwc, (x1, x2, x3))
    up = _ref_upsample
    x2_1 = _ref_conv(up(x1), *params['conv_upsample1']) * x2
    x3_1 = (_ref_conv(up(up(x1)), *params['conv_upsample2'])
            * _ref_conv(up(x2), *params['conv_upsample3']) * x3)
    x2_2 = _ref_conv(
        jnp.concatenate(
            [x2_1, _ref_conv(up(x1), *params['conv_upsample4'])], axis=-1),
        *params['conv_concat2'])
    x3_2 = _ref_conv(
        jnp.concatenate(
            [x3_1, _ref_conv(up(x2_2), *params['conv_upsample5'])], axis=-1),
        *params['conv_concat3'])
    x = _ref_conv(x3_2, *params['conv4'])
    x = _ref_conv(x, *params['conv5'])
    return jnp.transpose(x, (0, 3, 1, 2))


if __name__ == "__main__":
    key = jax.random.PRNGKey(0)
    C = 4
    k1, k2, k3, k4, kp = jax.random.split(key, 5)
    # NCHW inputs, mirroring the PyTorch module's expectations.
    x1 = jax.random.normal(k1, (2, C, 4, 4), jnp.float32)     # coarsest
    x2 = jax.random.normal(k2, (2, C, 8, 8), jnp.float32)
    x3 = jax.random.normal(k3, (2, C, 16, 16), jnp.float32)   # finest
    x4 = jax.random.normal(k4, (2, C, 16, 16), jnp.float32)   # unused

    params = init_params(kp, C, std=0.2)

    fwd = jax.jit(functools.partial(aggregation_forward, params))
    out = jax.block_until_ready(fwd(x1, x2, x3, x4))
    assert out.shape == (2, 1, 16, 16), out.shape

    ref = jax.block_until_ready(ref_forward(params, x1, x2, x3, x4))
    np.testing.assert_allclose(np.asarray(out), np.asarray(ref),
                               rtol=2e-3, atol=2e-3)
    print("KERNEL_OK")
</pallas_src>

<mosaic_0001>
module attributes {stable_mosaic.version = 11 : i64} {
  func.func @_aggregation_kernel(%arg0: i32, %arg1: memref<1x4x16xf32, #tpu.memory_space<vmem>>, %arg2: memref<1x8x32xf32, #tpu.memory_space<vmem>>, %arg3: memref<1x16x64xf32, #tpu.memory_space<vmem>>, %arg4: memref<8x4xf32, #tpu.memory_space<vmem>>, %arg5: memref<16x8xf32, #tpu.memory_space<vmem>>, %arg6: memref<16x32xf32, #tpu.memory_space<vmem>>, %arg7: memref<32x64xf32, #tpu.memory_space<vmem>>, %arg8: memref<64x128xf32, #tpu.memory_space<vmem>>, %arg9: memref<3x8x8xf32, #tpu.memory_space<vmem>>, %arg10: memref<3x16x16xf32, #tpu.memory_space<vmem>>, %arg11: memref<3x32x32xf32, #tpu.memory_space<vmem>>, %arg12: memref<1x32xf32, #tpu.memory_space<vmem>>, %arg13: memref<3x32x32xf32, #tpu.memory_space<vmem>>, %arg14: memref<1x32xf32, #tpu.memory_space<vmem>>, %arg15: memref<3x64x64xf32, #tpu.memory_space<vmem>>, %arg16: memref<1x64xf32, #tpu.memory_space<vmem>>, %arg17: memref<3x64x64xf32, #tpu.memory_space<vmem>>, %arg18: memref<1x64xf32, #tpu.memory_space<vmem>>, %arg19: memref<3x32x64xf32, #tpu.memory_space<vmem>>, %arg20: memref<3x32x64xf32, #tpu.memory_space<vmem>>, %arg21: memref<1x64xf32, #tpu.memory_space<vmem>>, %arg22: memref<3x128x128xf32, #tpu.memory_space<vmem>>, %arg23: memref<1x128xf32, #tpu.memory_space<vmem>>, %arg24: memref<3x64x192xf32, #tpu.memory_space<vmem>>, %arg25: memref<3x128x192xf32, #tpu.memory_space<vmem>>, %arg26: memref<1x192xf32, #tpu.memory_space<vmem>>, %arg27: memref<3x192x16xf32, #tpu.memory_space<vmem>>, %arg28: memref<1x16xf32, #tpu.memory_space<vmem>>, %arg29: memref<1x16x16xf32, #tpu.memory_space<vmem>>) attributes {dimension_semantics = [#tpu.dimension_semantics<parallel>], iteration_bounds = array<i64: 2>, scalar_prefetch = 0 : i64, scratch_operands = 0 : i64, tpu.core_type = #tpu.core_type<tc>, window_params = [{transform_indices = @transform_0, window_bounds = array<i64: 1, 4, 16>}, {transform_indices = @transform_1, window_bounds = array<i64: 1, 8, 32>}, {transform_indices = @transform_2, window_bounds = array<i64: 1, 16, 64>}, {pipeline_mode = #tpu.pipeline_mode<synchronous>, transform_indices = @transform_3, window_bounds = array<i64: 8, 4>}, {pipeline_mode = #tpu.pipeline_mode<synchronous>, transform_indices = @transform_4, window_bounds = array<i64: 16, 8>}, {pipeline_mode = #tpu.pipeline_mode<synchronous>, transform_indices = @transform_5, window_bounds = array<i64: 16, 32>}, {pipeline_mode = #tpu.pipeline_mode<synchronous>, transform_indices = @transform_6, window_bounds = array<i64: 32, 64>}, {pipeline_mode = #tpu.pipeline_mode<synchronous>, transform_indices = @transform_7, window_bounds = array<i64: 64, 128>}, {pipeline_mode = #tpu.pipeline_mode<synchronous>, transform_indices = @transform_8, window_bounds = array<i64: 3, 8, 8>}, {pipeline_mode = #tpu.pipeline_mode<synchronous>, transform_indices = @transform_9, window_bounds = array<i64: 3, 16, 16>}, {pipeline_mode = #tpu.pipeline_mode<synchronous>, transform_indices = @transform_10, window_bounds = array<i64: 3, 32, 32>}, {pipeline_mode = #tpu.pipeline_mode<synchronous>, transform_indices = @transform_11, window_bounds = array<i64: 1, 32>}, {pipeline_mode = #tpu.pipeline_mode<synchronous>, transform_indices = @transform_12, window_bounds = array<i64: 3, 32, 32>}, {pipeline_mode = #tpu.pipeline_mode<synchronous>, transform_indices = @transform_13, window_bounds = array<i64: 1, 32>}, {pipeline_mode = #tpu.pipeline_mode<synchronous>, transform_indices = @transform_14, window_bounds = array<i64: 3, 64, 64>}, {pipeline_mode = #tpu.pipeline_mode<synchronous>, transform_indices = @transform_15, window_bounds = array<i64: 1, 64>}, {pipeline_mode = #tpu.pipeline_mode<synchronous>, transform_indices = @transform_16, window_bounds = array<i64: 3, 64, 64>}, {pipeline_mode = #tpu.pipeline_mode<synchronous>, transform_indices = @transform_17, window_bounds = array<i64: 1, 64>}, {pipeline_mode = #tpu.pipeline_mode<synchronous>, transform_indices = @transform_18, window_bounds = array<i64: 3, 32, 64>}, {pipeline_mode = #tpu.pipeline_mode<synchronous>, transform_indices = @transform_19, window_bounds = array<i64: 3, 32, 64>}, {pipeline_mode = #tpu.pipeline_mode<synchronous>, transform_indices = @transform_20, window_bounds = array<i64: 1, 64>}, {pipeline_mode = #tpu.pipeline_mode<synchronous>, transform_indices = @transform_21, window_bounds = array<i64: 3, 128, 128>}, {pipeline_mode = #tpu.pipeline_mode<synchronous>, transform_indices = @transform_22, window_bounds = array<i64: 1, 128>}, {pipeline_mode = #tpu.pipeline_mode<synchronous>, transform_indices = @transform_23, window_bounds = array<i64: 3, 64, 192>}, {pipeline_mode = #tpu.pipeline_mode<synchronous>, transform_indices = @transform_24, window_bounds = array<i64: 3, 128, 192>}, {pipeline_mode = #tpu.pipeline_mode<synchronous>, transform_indices = @transform_25, window_bounds = array<i64: 1, 192>}, {pipeline_mode = #tpu.pipeline_mode<synchronous>, transform_indices = @transform_26, window_bounds = array<i64: 3, 192, 16>}, {pipeline_mode = #tpu.pipeline_mode<synchronous>, transform_indices = @transform_27, window_bounds = array<i64: 1, 16>}, {transform_indices = @transform_28, window_bounds = array<i64: 1, 16, 16>}]} {
    %c0 = arith.constant 0 : index
    %c0_0 = arith.constant 0 : index
    %c0_1 = arith.constant 0 : index
    %0 = vector.load %arg1[%c0, %c0_0, %c0_1] : memref<1x4x16xf32, #tpu.memory_space<vmem>>, vector<1x4x16xf32>
    %1 = vector.shape_cast %0 : vector<1x4x16xf32> to vector<4x16xf32>
    %c0_2 = arith.constant 0 : index
    %c0_3 = arith.constant 0 : index
    %c0_4 = arith.constant 0 : index
    %2 = vector.load %arg2[%c0_2, %c0_3, %c0_4] : memref<1x8x32xf32, #tpu.memory_space<vmem>>, vector<1x8x32xf32>
    %3 = vector.shape_cast %2 : vector<1x8x32xf32> to vector<8x32xf32>
    %c0_5 = arith.constant 0 : index
    %c0_6 = arith.constant 0 : index
    %c0_7 = arith.constant 0 : index
    %4 = vector.load %arg3[%c0_5, %c0_6, %c0_7] : memref<1x16x64xf32, #tpu.memory_space<vmem>>, vector<1x16x64xf32>
    %5 = vector.shape_cast %4 : vector<1x16x64xf32> to vector<16x64xf32>
    %c0_8 = arith.constant 0 : index
    %c0_9 = arith.constant 0 : index
    %6 = vector.load %arg4[%c0_8, %c0_9] : memref<8x4xf32, #tpu.memory_space<vmem>>, vector<8x4xf32>
    %c0_10 = arith.constant 0 : index
    %c0_11 = arith.constant 0 : index
    %7 = vector.load %arg5[%c0_10, %c0_11] : memref<16x8xf32, #tpu.memory_space<vmem>>, vector<16x8xf32>
    %c0_12 = arith.constant 0 : index
    %c0_13 = arith.constant 0 : index
    %8 = vector.load %arg6[%c0_12, %c0_13] : memref<16x32xf32, #tpu.memory_space<vmem>>, vector<16x32xf32>
    %c0_14 = arith.constant 0 : index
    %c0_15 = arith.constant 0 : index
    %9 = vector.load %arg7[%c0_14, %c0_15] : memref<32x64xf32, #tpu.memory_space<vmem>>, vector<32x64xf32>
    %c0_16 = arith.constant 0 : index
    %c0_17 = arith.constant 0 : index
    %10 = vector.load %arg8[%c0_16, %c0_17] : memref<64x128xf32, #tpu.memory_space<vmem>>, vector<64x128xf32>
    %cst = arith.constant dense<0.000000e+00> : vector<8x16xf32>
    %11 = tpu.matmul %6, %1, %cst {dimension_numbers = #tpu.dot_dimension_numbers<[1], [0], [0], [1], [0, 0, 1, 1], [], []>} : vector<8x4xf32>, vector<4x16xf32>, vector<8x16xf32> -> vector<8x16xf32>
    %cst_18 = arith.constant dense<0.000000e+00> : vector<8x32xf32>
    %12 = tpu.matmul %11, %8, %cst_18 {dimension_numbers = #tpu.dot_dimension_numbers<[1], [0], [0], [1], [0, 0, 1, 1], [], []>} : vector<8x16xf32>, vector<16x32xf32>, vector<8x32xf32> -> vector<8x32xf32>
    %cst_19 = arith.constant dense<0.000000e+00> : vector<16x32xf32>
    %13 = tpu.matmul %7, %12, %cst_19 {dimension_numbers = #tpu.dot_dimension_numbers<[1], [0], [0], [1], [0, 0, 1, 1], [], []>} : vector<16x8xf32>, vector<8x32xf32>, vector<16x32xf32> -> vector<16x32xf32>
    %cst_20 = arith.constant dense<0.000000e+00> : vector<16x64xf32>
    %14 = tpu.matmul %13, %9, %cst_20 {dimension_numbers = #tpu.dot_dimension_numbers<[1], [0], [0], [1], [0, 0, 1, 1], [], []>} : vector<16x32xf32>, vector<32x64xf32>, vector<16x64xf32> -> vector<16x64xf32>
    %cst_21 = arith.constant dense<0.000000e+00> : vector<16x32xf32>
    %15 = tpu.matmul %7, %3, %cst_21 {dimension_numbers = #tpu.dot_dimension_numbers<[1], [0], [0], [1], [0, 0, 1, 1], [], []>} : vector<16x8xf32>, vector<8x32xf32>, vector<16x32xf32> -> vector<16x32xf32>
    %cst_22 = arith.constant dense<0.000000e+00> : vector<16x64xf32>
    %16 = tpu.matmul %15, %9, %cst_22 {dimension_numbers = #tpu.dot_dimension_numbers<[1], [0], [0], [1], [0, 0, 1, 1], [], []>} : vector<16x32xf32>, vector<32x64xf32>, vector<16x64xf32> -> vector<16x64xf32>
    %c0_23 = arith.constant 0 : index
    %c0_24 = arith.constant 0 : index
    %17 = vector.load %arg12[%c0_23, %c0_24] : memref<1x32xf32, #tpu.memory_space<vmem>>, vector<1x32xf32>
    %c1 = arith.constant 1 : index
    %c0_25 = arith.constant 0 : index
    %c0_26 = arith.constant 0 : index
    %18 = vector.load %arg11[%c1, %c0_25, %c0_26] : memref<3x32x32xf32, #tpu.memory_space<vmem>>, vector<1x32x32xf32>
    %19 = vector.shape_cast %18 : vector<1x32x32xf32> to vector<32x32xf32>
    %cst_27 = arith.constant dense<0.000000e+00> : vector<8x32xf32>
    %20 = tpu.matmul %12, %19, %cst_27 {dimension_numbers = #tpu.dot_dimension_numbers<[1], [0], [0], [1], [0, 0, 1, 1], [], []>} : vector<8x32xf32>, vector<32x32xf32>, vector<8x32xf32> -> vector<8x32xf32>
    %c0_28 = arith.constant 0 : index
    %c0_29 = arith.constant 0 : index
    %c0_30 = arith.constant 0 : index
    %21 = vector.load %arg9[%c0_28, %c0_29, %c0_30] : memref<3x8x8xf32, #tpu.memory_space<vmem>>, vector<1x8x8xf32>
    %22 = vector.shape_cast %21 : vector<1x8x8xf32> to vector<8x8xf32>
    %c0_31 = arith.constant 0 : index
    %c0_32 = arith.constant 0 : index
    %c0_33 = arith.constant 0 : index
    %23 = vector.load %arg11[%c0_31, %c0_32, %c0_33] : memref<3x32x32xf32, #tpu.memory_space<vmem>>, vector<1x32x32xf32>
    %24 = vector.shape_cast %23 : vector<1x32x32xf32> to vector<32x32xf32>
    %cst_34 = arith.constant dense<0.000000e+00> : vector<8x32xf32>
    %25 = tpu.matmul %12, %24, %cst_34 {dimension_numbers = #tpu.dot_dimension_numbers<[1], [0], [0], [1], [0, 0, 1, 1], [], []>} : vector<8x32xf32>, vector<32x32xf32>, vector<8x32xf32> -> vector<8x32xf32>
    %cst_35 = arith.constant dense<0.000000e+00> : vector<8x32xf32>
    %26 = tpu.matmul %22, %25, %cst_35 {dimension_numbers = #tpu.dot_dimension_numbers<[1], [0], [0], [1], [0, 0, 1, 1], [], []>} : vector<8x8xf32>, vector<8x32xf32>, vector<8x32xf32> -> vector<8x32xf32>
    %27 = arith.addf %20, %26 : vector<8x32xf32>
    %c2 = arith.constant 2 : index
    %c0_36 = arith.constant 0 : index
    %c0_37 = arith.constant 0 : index
    %28 = vector.load %arg9[%c2, %c0_36, %c0_37] : memref<3x8x8xf32, #tpu.memory_space<vmem>>, vector<1x8x8xf32>
    %29 = vector.shape_cast %28 : vector<1x8x8xf32> to vector<8x8xf32>
    %c2_38 = arith.constant 2 : index
    %c0_39 = arith.constant 0 : index
    %c0_40 = arith.constant 0 : index
    %30 = vector.load %arg11[%c2_38, %c0_39, %c0_40] : memref<3x32x32xf32, #tpu.memory_space<vmem>>, vector<1x32x32xf32>
    %31 = vector.shape_cast %30 : vector<1x32x32xf32> to vector<32x32xf32>
    %cst_41 = arith.constant dense<0.000000e+00> : vector<8x32xf32>
    %32 = tpu.matmul %12, %31, %cst_41 {dimension_numbers = #tpu.dot_dimension_numbers<[1], [0], [0], [1], [0, 0, 1, 1], [], []>} : vector<8x32xf32>, vector<32x32xf32>, vector<8x32xf32> -> vector<8x32xf32>
    %cst_42 = arith.constant dense<0.000000e+00> : vector<8x32xf32>
    %33 = tpu.matmul %29, %32, %cst_42 {dimension_numbers = #tpu.dot_dimension_numbers<[1], [0], [0], [1], [0, 0, 1, 1], [], []>} : vector<8x8xf32>, vector<8x32xf32>, vector<8x32xf32> -> vector<8x32xf32>
    %34 = arith.addf %27, %33 : vector<8x32xf32>
    %35 = vector.broadcast %17 : vector<1x32xf32> to vector<8x32xf32>
    %36 = arith.addf %34, %35 : vector<8x32xf32>
    %37 = arith.mulf %36, %3 : vector<8x32xf32>
    %c0_43 = arith.constant 0 : index
    %c0_44 = arith.constant 0 : index
    %38 = vector.load %arg14[%c0_43, %c0_44] : memref<1x32xf32, #tpu.memory_space<vmem>>, vector<1x32xf32>
    %c1_45 = arith.constant 1 : index
    %c0_46 = arith.constant 0 : index
    %c0_47 = arith.constant 0 : index
    %39 = vector.load %arg13[%c1_45, %c0_46, %c0_47] : memref<3x32x32xf32, #tpu.memory_space<vmem>>, vector<1x32x32xf32>
    %40 = vector.shape_cast %39 : vector<1x32x32xf32> to vector<32x32xf32>
    %cst_48 = arith.constant dense<0.000000e+00> : vector<8x32xf32>
    %41 = tpu.matmul %12, %40, %cst_48 {dimension_numbers = #tpu.dot_dimension_numbers<[1], [0], [0], [1], [0, 0, 1, 1], [], []>} : vector<8x32xf32>, vector<32x32xf32>, vector<8x32xf32> -> vector<8x32xf32>
    %c0_49 = arith.constant 0 : index
    %c0_50 = arith.constant 0 : index
    %c0_51 = arith.constant 0 : index
    %42 = vector.load %arg9[%c0_49, %c0_50, %c0_51] : memref<3x8x8xf32, #tpu.memory_space<vmem>>, vector<1x8x8xf32>
    %43 = vector.shape_cast %42 : vector<1x8x8xf32> to vector<8x8xf32>
    %c0_52 = arith.constant 0 : index
    %c0_53 = arith.constant 0 : index
    %c0_54 = arith.constant 0 : index
    %44 = vector.load %arg13[%c0_52, %c0_53, %c0_54] : memref<3x32x32xf32, #tpu.memory_space<vmem>>, vector<1x32x32xf32>
    %45 = vector.shape_cast %44 : vector<1x32x32xf32> to vector<32x32xf32>
    %cst_55 = arith.constant dense<0.000000e+00> : vector<8x32xf32>
    %46 = tpu.matmul %12, %45, %cst_55 {dimension_numbers = #tpu.dot_dimension_numbers<[1], [0], [0], [1], [0, 0, 1, 1], [], []>} : vector<8x32xf32>, vector<32x32xf32>, vector<8x32xf32> -> vector<8x32xf32>
    %cst_56 = arith.constant dense<0.000000e+00> : vector<8x32xf32>
    %47 = tpu.matmul %43, %46, %cst_56 {dimension_numbers = #tpu.dot_dimension_numbers<[1], [0], [0], [1], [0, 0, 1, 1], [], []>} : vector<8x8xf32>, vector<8x32xf32>, vector<8x32xf32> -> vector<8x32xf32>
    %48 = arith.addf %41, %47 : vector<8x32xf32>
    %c2_57 = arith.constant 2 : index
    %c0_58 = arith.constant 0 : index
    %c0_59 = arith.constant 0 : index
    %49 = vector.load %arg9[%c2_57, %c0_58, %c0_59] : memref<3x8x8xf32, #tpu.memory_space<vmem>>, vector<1x8x8xf32>
    %50 = vector.shape_cast %49 : vector<1x8x8xf32> to vector<8x8xf32>
    %c2_60 = arith.constant 2 : index
    %c0_61 = arith.constant 0 : index
    %c0_62 = arith.constant 0 : index
    %51 = vector.load %arg13[%c2_60, %c0_61, %c0_62] : memref<3x32x32xf32, #tpu.memory_space<vmem>>, vector<1x32x32xf32>
    %52 = vector.shape_cast %51 : vector<1x32x32xf32> to vector<32x32xf32>
    %cst_63 = arith.constant dense<0.000000e+00> : vector<8x32xf32>
    %53 = tpu.matmul %12, %52, %cst_63 {dimension_numbers = #tpu.dot_dimension_numbers<[1], [0], [0], [1], [0, 0, 1, 1], [], []>} : vector<8x32xf32>, vector<32x32xf32>, vector<8x32xf32> -> vector<8x32xf32>
    %cst_64 = arith.constant dense<0.000000e+00> : vector<8x32xf32>
    %54 = tpu.matmul %50, %53, %cst_64 {dimension_numbers = #tpu.dot_dimension_numbers<[1], [0], [0], [1], [0, 0, 1, 1], [], []>} : vector<8x8xf32>, vector<8x32xf32>, vector<8x32xf32> -> vector<8x32xf32>
    %55 = arith.addf %48, %54 : vector<8x32xf32>
    %56 = vector.broadcast %38 : vector<1x32xf32> to vector<8x32xf32>
    %57 = arith.addf %55, %56 : vector<8x32xf32>
    %c0_65 = arith.constant 0 : index
    %c0_66 = arith.constant 0 : index
    %58 = vector.load %arg16[%c0_65, %c0_66] : memref<1x64xf32, #tpu.memory_space<vmem>>, vector<1x64xf32>
    %c1_67 = arith.constant 1 : index
    %c0_68 = arith.constant 0 : index
    %c0_69 = arith.constant 0 : index
    %59 = vector.load %arg15[%c1_67, %c0_68, %c0_69] : memref<3x64x64xf32, #tpu.memory_space<vmem>>, vector<1x64x64xf32>
    %60 = vector.shape_cast %59 : vector<1x64x64xf32> to vector<64x64xf32>
    %cst_70 = arith.constant dense<0.000000e+00> : vector<16x64xf32>
    %61 = tpu.matmul %14, %60, %cst_70 {dimension_numbers = #tpu.dot_dimension_numbers<[1], [0], [0], [1], [0, 0, 1, 1], [], []>} : vector<16x64xf32>, vector<64x64xf32>, vector<16x64xf32> -> vector<16x64xf32>
    %c0_71 = arith.constant 0 : index
    %c0_72 = arith.constant 0 : index
    %c0_73 = arith.constant 0 : index
    %62 = vector.load %arg10[%c0_71, %c0_72, %c0_73] : memref<3x16x16xf32, #tpu.memory_space<vmem>>, vector<1x16x16xf32>
    %63 = vector.shape_cast %62 : vector<1x16x16xf32> to vector<16x16xf32>
    %c0_74 = arith.constant 0 : index
    %c0_75 = arith.constant 0 : index
    %c0_76 = arith.constant 0 : index
    %64 = vector.load %arg15[%c0_74, %c0_75, %c0_76] : memref<3x64x64xf32, #tpu.memory_space<vmem>>, vector<1x64x64xf32>
    %65 = vector.shape_cast %64 : vector<1x64x64xf32> to vector<64x64xf32>
    %cst_77 = arith.constant dense<0.000000e+00> : vector<16x64xf32>
    %66 = tpu.matmul %14, %65, %cst_77 {dimension_numbers = #tpu.dot_dimension_numbers<[1], [0], [0], [1], [0, 0, 1, 1], [], []>} : vector<16x64xf32>, vector<64x64xf32>, vector<16x64xf32> -> vector<16x64xf32>
    %cst_78 = arith.constant dense<0.000000e+00> : vector<16x64xf32>
    %67 = tpu.matmul %63, %66, %cst_78 {dimension_numbers = #tpu.dot_dimension_numbers<[1], [0], [0], [1], [0, 0, 1, 1], [], []>} : vector<16x16xf32>, vector<16x64xf32>, vector<16x64xf32> -> vector<16x64xf32>
    %68 = arith.addf %61, %67 : vector<16x64xf32>
    %c2_79 = arith.constant 2 : index
    %c0_80 = arith.constant 0 : index
    %c0_81 = arith.constant 0 : index
    %69 = vector.load %arg10[%c2_79, %c0_80, %c0_81] : memref<3x16x16xf32, #tpu.memory_space<vmem>>, vector<1x16x16xf32>
    %70 = vector.shape_cast %69 : vector<1x16x16xf32> to vector<16x16xf32>
    %c2_82 = arith.constant 2 : index
    %c0_83 = arith.constant 0 : index
    %c0_84 = arith.constant 0 : index
    %71 = vector.load %arg15[%c2_82, %c0_83, %c0_84] : memref<3x64x64xf32, #tpu.memory_space<vmem>>, vector<1x64x64xf32>
    %72 = vector.shape_cast %71 : vector<1x64x64xf32> to vector<64x64xf32>
    %cst_85 = arith.constant dense<0.000000e+00> : vector<16x64xf32>
    %73 = tpu.matmul %14, %72, %cst_85 {dimension_numbers = #tpu.dot_dimension_numbers<[1], [0], [0], [1], [0, 0, 1, 1], [], []>} : vector<16x64xf32>, vector<64x64xf32>, vector<16x64xf32> -> vector<16x64xf32>
    %cst_86 = arith.constant dense<0.000000e+00> : vector<16x64xf32>
    %74 = tpu.matmul %70, %73, %cst_86 {dimension_numbers = #tpu.dot_dimension_numbers<[1], [0], [0], [1], [0, 0, 1, 1], [], []>} : vector<16x16xf32>, vector<16x64xf32>, vector<16x64xf32> -> vector<16x64xf32>
    %75 = arith.addf %68, %74 : vector<16x64xf32>
    %76 = vector.broadcast %58 : vector<1x64xf32> to vector<16x64xf32>
    %77 = arith.addf %75, %76 : vector<16x64xf32>
    %c0_87 = arith.constant 0 : index
    %c0_88 = arith.constant 0 : index
    %78 = vector.load %arg18[%c0_87, %c0_88] : memref<1x64xf32, #tpu.memory_space<vmem>>, vector<1x64xf32>
    %c1_89 = arith.constant 1 : index
    %c0_90 = arith.constant 0 : index
    %c0_91 = arith.constant 0 : index
    %79 = vector.load %arg17[%c1_89, %c0_90, %c0_91] : memref<3x64x64xf32, #tpu.memory_space<vmem>>, vector<1x64x64xf32>
    %80 = vector.shape_cast %79 : vector<1x64x64xf32> to vector<64x64xf32>
    %cst_92 = arith.constant dense<0.000000e+00> : vector<16x64xf32>
    %81 = tpu.matmul %16, %80, %cst_92 {dimension_numbers = #tpu.dot_dimension_numbers<[1], [0], [0], [1], [0, 0, 1, 1], [], []>} : vector<16x64xf32>, vector<64x64xf32>, vector<16x64xf32> -> vector<16x64xf32>
    %c0_93 = arith.constant 0 : index
    %c0_94 = arith.constant 0 : index
    %c0_95 = arith.constant 0 : index
    %82 = vector.load %arg10[%c0_93, %c0_94, %c0_95] : memref<3x16x16xf32, #tpu.memory_space<vmem>>, vector<1x16x16xf32>
    %83 = vector.shape_cast %82 : vector<1x16x16xf32> to vector<16x16xf32>
    %c0_96 = arith.constant 0 : index
    %c0_97 = arith.constant 0 : index
    %c0_98 = arith.constant 0 : index
    %84 = vector.load %arg17[%c0_96, %c0_97, %c0_98] : memref<3x64x64xf32, #tpu.memory_space<vmem>>, vector<1x64x64xf32>
    %85 = vector.shape_cast %84 : vector<1x64x64xf32> to vector<64x64xf32>
    %cst_99 = arith.constant dense<0.000000e+00> : vector<16x64xf32>
    %86 = tpu.matmul %16, %85, %cst_99 {dimension_numbers = #tpu.dot_dimension_numbers<[1], [0], [0], [1], [0, 0, 1, 1], [], []>} : vector<16x64xf32>, vector<64x64xf32>, vector<16x64xf32> -> vector<16x64xf32>
    %cst_100 = arith.constant dense<0.000000e+00> : vector<16x64xf32>
    %87 = tpu.matmul %83, %86, %cst_100 {dimension_numbers = #tpu.dot_dimension_numbers<[1], [0], [0], [1], [0, 0, 1, 1], [], []>} : vector<16x16xf32>, vector<16x64xf32>, vector<16x64xf32> -> vector<16x64xf32>
    %88 = arith.addf %81, %87 : vector<16x64xf32>
    %c2_101 = arith.constant 2 : index
    %c0_102 = arith.constant 0 : index
    %c0_103 = arith.constant 0 : index
    %89 = vector.load %arg10[%c2_101, %c0_102, %c0_103] : memref<3x16x16xf32, #tpu.memory_space<vmem>>, vector<1x16x16xf32>
    %90 = vector.shape_cast %89 : vector<1x16x16xf32> to vector<16x16xf32>
    %c2_104 = arith.constant 2 : index
    %c0_105 = arith.constant 0 : index
    %c0_106 = arith.constant 0 : index
    %91 = vector.load %arg17[%c2_104, %c0_105, %c0_106] : memref<3x64x64xf32, #tpu.memory_space<vmem>>, vector<1x64x64xf32>
    %92 = vector.shape_cast %91 : vector<1x64x64xf32> to vector<64x64xf32>
    %cst_107 = arith.constant dense<0.000000e+00> : vector<16x64xf32>
    %93 = tpu.matmul %16, %92, %cst_107 {dimension_numbers = #tpu.dot_dimension_numbers<[1], [0], [0], [1], [0, 0, 1, 1], [], []>} : vector<16x64xf32>, vector<64x64xf32>, vector<16x64xf32> -> vector<16x64xf32>
    %cst_108 = arith.constant dense<0.000000e+00> : vector<16x64xf32>
    %94 = tpu.matmul %90, %93, %cst_108 {dimension_numbers = #tpu.dot_dimension_numbers<[1], [0], [0], [1], [0, 0, 1, 1], [], []>} : vector<16x16xf32>, vector<16x64xf32>, vector<16x64xf32> -> vector<16x64xf32>
    %95 = arith.addf %88, %94 : vector<16x64xf32>
    %96 = vector.broadcast %78 : vector<1x64xf32> to vector<16x64xf32>
    %97 = arith.addf %95, %96 : vector<16x64xf32>
    %98 = arith.mulf %77, %97 : vector<16x64xf32>
    %99 = arith.mulf %98, %5 : vector<16x64xf32>
    %c0_109 = arith.constant 0 : index
    %c0_110 = arith.constant 0 : index
    %100 = vector.load %arg21[%c0_109, %c0_110] : memref<1x64xf32, #tpu.memory_space<vmem>>, vector<1x64xf32>
    %c1_111 = arith.constant 1 : index
    %c0_112 = arith.constant 0 : index
    %c0_113 = arith.constant 0 : index
    %101 = vector.load %arg19[%c1_111, %c0_112, %c0_113] : memref<3x32x64xf32, #tpu.memory_space<vmem>>, vector<1x32x64xf32>
    %102 = vector.shape_cast %101 : vector<1x32x64xf32> to vector<32x64xf32>
    %cst_114 = arith.constant dense<0.000000e+00> : vector<8x64xf32>
    %103 = tpu.matmul %37, %102, %cst_114 {dimension_numbers = #tpu.dot_dimension_numbers<[1], [0], [0], [1], [0, 0, 1, 1], [], []>} : vector<8x32xf32>, vector<32x64xf32>, vector<8x64xf32> -> vector<8x64xf32>
    %c1_115 = arith.constant 1 : index
    %c0_116 = arith.constant 0 : index
    %c0_117 = arith.constant 0 : index
    %104 = vector.load %arg20[%c1_115, %c0_116, %c0_117] : memref<3x32x64xf32, #tpu.memory_space<vmem>>, vector<1x32x64xf32>
    %105 = vector.shape_cast %104 : vector<1x32x64xf32> to vector<32x64xf32>
    %cst_118 = arith.constant dense<0.000000e+00> : vector<8x64xf32>
    %106 = tpu.matmul %57, %105, %cst_118 {dimension_numbers = #tpu.dot_dimension_numbers<[1], [0], [0], [1], [0, 0, 1, 1], [], []>} : vector<8x32xf32>, vector<32x64xf32>, vector<8x64xf32> -> vector<8x64xf32>
    %107 = arith.addf %103, %106 : vector<8x64xf32>
    %c0_119 = arith.constant 0 : index
    %c0_120 = arith.constant 0 : index
    %c0_121 = arith.constant 0 : index
    %108 = vector.load %arg9[%c0_119, %c0_120, %c0_121] : memref<3x8x8xf32, #tpu.memory_space<vmem>>, vector<1x8x8xf32>
    %109 = vector.shape_cast %108 : vector<1x8x8xf32> to vector<8x8xf32>
    %c0_122 = arith.constant 0 : index
    %c0_123 = arith.constant 0 : index
    %c0_124 = arith.constant 0 : index
    %110 = vector.load %arg19[%c0_122, %c0_123, %c0_124] : memref<3x32x64xf32, #tpu.memory_space<vmem>>, vector<1x32x64xf32>
    %111 = vector.shape_cast %110 : vector<1x32x64xf32> to vector<32x64xf32>
    %cst_125 = arith.constant dense<0.000000e+00> : vector<8x64xf32>
    %112 = tpu.matmul %37, %111, %cst_125 {dimension_numbers = #tpu.dot_dimension_numbers<[1], [0], [0], [1], [0, 0, 1, 1], [], []>} : vector<8x32xf32>, vector<32x64xf32>, vector<8x64xf32> -> vector<8x64xf32>
    %c0_126 = arith.constant 0 : index
    %c0_127 = arith.constant 0 : index
    %c0_128 = arith.constant 0 : index
    %113 = vector.load %arg20[%c0_126, %c0_127, %c0_128] : memref<3x32x64xf32, #tpu.memory_space<vmem>>, vector<1x32x64xf32>
    %114 = vector.shape_cast %113 : vector<1x32x64xf32> to vector<32x64xf32>
    %cst_129 = arith.constant dense<0.000000e+00> : vector<8x64xf32>
    %115 = tpu.matmul %57, %114, %cst_129 {dimension_numbers = #tpu.dot_dimension_numbers<[1], [0], [0], [1], [0, 0, 1, 1], [], []>} : vector<8x32xf32>, vector<32x64xf32>, vector<8x64xf32> -> vector<8x64xf32>
    %116 = arith.addf %112, %115 : vector<8x64xf32>
    %cst_130 = arith.constant dense<0.000000e+00> : vector<8x64xf32>
    %117 = tpu.matmul %109, %116, %cst_130 {dimension_numbers = #tpu.dot_dimension_numbers<[1], [0], [0], [1], [0, 0, 1, 1], [], []>} : vector<8x8xf32>, vector<8x64xf32>, vector<8x64xf32> -> vector<8x64xf32>
    %118 = arith.addf %107, %117 : vector<8x64xf32>
    %c2_131 = arith.constant 2 : index
    %c0_132 = arith.constant 0 : index
    %c0_133 = arith.constant 0 : index
    %119 = vector.load %arg9[%c2_131, %c0_132, %c0_133] : memref<3x8x8xf32, #tpu.memory_space<vmem>>, vector<1x8x8xf32>
    %120 = vector.shape_cast %119 : vector<1x8x8xf32> to vector<8x8xf32>
    %c2_134 = arith.constant 2 : index
    %c0_135 = arith.constant 0 : index
    %c0_136 = arith.constant 0 : index
    %121 = vector.load %arg19[%c2_134, %c0_135, %c0_136] : memref<3x32x64xf32, #tpu.memory_space<vmem>>, vector<1x32x64xf32>
    %122 = vector.shape_cast %121 : vector<1x32x64xf32> to vector<32x64xf32>
    %cst_137 = arith.constant dense<0.000000e+00> : vector<8x64xf32>
    %123 = tpu.matmul %37, %122, %cst_137 {dimension_numbers = #tpu.dot_dimension_numbers<[1], [0], [0], [1], [0, 0, 1, 1], [], []>} : vector<8x32xf32>, vector<32x64xf32>, vector<8x64xf32> -> vector<8x64xf32>
    %c2_138 = arith.constant 2 : index
    %c0_139 = arith.constant 0 : index
    %c0_140 = arith.constant 0 : index
    %124 = vector.load %arg20[%c2_138, %c0_139, %c0_140] : memref<3x32x64xf32, #tpu.memory_space<vmem>>, vector<1x32x64xf32>
    %125 = vector.shape_cast %124 : vector<1x32x64xf32> to vector<32x64xf32>
    %cst_141 = arith.constant dense<0.000000e+00> : vector<8x64xf32>
    %126 = tpu.matmul %57, %125, %cst_141 {dimension_numbers = #tpu.dot_dimension_numbers<[1], [0], [0], [1], [0, 0, 1, 1], [], []>} : vector<8x32xf32>, vector<32x64xf32>, vector<8x64xf32> -> vector<8x64xf32>
    %127 = arith.addf %123, %126 : vector<8x64xf32>
    %cst_142 = arith.constant dense<0.000000e+00> : vector<8x64xf32>
    %128 = tpu.matmul %120, %127, %cst_142 {dimension_numbers = #tpu.dot_dimension_numbers<[1], [0], [0], [1], [0, 0, 1, 1], [], []>} : vector<8x8xf32>, vector<8x64xf32>, vector<8x64xf32> -> vector<8x64xf32>
    %129 = arith.addf %118, %128 : vector<8x64xf32>
    %130 = vector.broadcast %100 : vector<1x64xf32> to vector<8x64xf32>
    %131 = arith.addf %129, %130 : vector<8x64xf32>
    %cst_143 = arith.constant dense<0.000000e+00> : vector<16x64xf32>
    %132 = tpu.matmul %7, %131, %cst_143 {dimension_numbers = #tpu.dot_dimension_numbers<[1], [0], [0], [1], [0, 0, 1, 1], [], []>} : vector<16x8xf32>, vector<8x64xf32>, vector<16x64xf32> -> vector<16x64xf32>
    %cst_144 = arith.constant dense<0.000000e+00> : vector<16x128xf32>
    %133 = tpu.matmul %132, %10, %cst_144 {dimension_numbers = #tpu.dot_dimension_numbers<[1], [0], [0], [1], [0, 0, 1, 1], [], []>} : vector<16x64xf32>, vector<64x128xf32>, vector<16x128xf32> -> vector<16x128xf32>
    %c0_145 = arith.constant 0 : index
    %c0_146 = arith.constant 0 : index
    %134 = vector.load %arg23[%c0_145, %c0_146] : memref<1x128xf32, #tpu.memory_space<vmem>>, vector<1x128xf32>
    %c1_147 = arith.constant 1 : index
    %c0_148 = arith.constant 0 : index
    %c0_149 = arith.constant 0 : index
    %135 = vector.load %arg22[%c1_147, %c0_148, %c0_149] : memref<3x128x128xf32, #tpu.memory_space<vmem>>, vector<1x128x128xf32>
    %136 = vector.shape_cast %135 : vector<1x128x128xf32> to vector<128x128xf32>
    %cst_150 = arith.constant dense<0.000000e+00> : vector<16x128xf32>
    %137 = tpu.matmul %133, %136, %cst_150 {dimension_numbers = #tpu.dot_dimension_numbers<[1], [0], [0], [1], [0, 0, 1, 1], [], []>} : vector<16x128xf32>, vector<128x128xf32>, vector<16x128xf32> -> vector<16x128xf32>
    %c0_151 = arith.constant 0 : index
    %c0_152 = arith.constant 0 : index
    %c0_153 = arith.constant 0 : index
    %138 = vector.load %arg10[%c0_151, %c0_152, %c0_153] : memref<3x16x16xf32, #tpu.memory_space<vmem>>, vector<1x16x16xf32>
    %139 = vector.shape_cast %138 : vector<1x16x16xf32> to vector<16x16xf32>
    %c0_154 = arith.constant 0 : index
    %c0_155 = arith.constant 0 : index
    %c0_156 = arith.constant 0 : index
    %140 = vector.load %arg22[%c0_154, %c0_155, %c0_156] : memref<3x128x128xf32, #tpu.memory_space<vmem>>, vector<1x128x128xf32>
    %141 = vector.shape_cast %140 : vector<1x128x128xf32> to vector<128x128xf32>
    %cst_157 = arith.constant dense<0.000000e+00> : vector<16x128xf32>
    %142 = tpu.matmul %133, %141, %cst_157 {dimension_numbers = #tpu.dot_dimension_numbers<[1], [0], [0], [1], [0, 0, 1, 1], [], []>} : vector<16x128xf32>, vector<128x128xf32>, vector<16x128xf32> -> vector<16x128xf32>
    %cst_158 = arith.constant dense<0.000000e+00> : vector<16x128xf32>
    %143 = tpu.matmul %139, %142, %cst_158 {dimension_numbers = #tpu.dot_dimension_numbers<[1], [0], [0], [1], [0, 0, 1, 1], [], []>} : vector<16x16xf32>, vector<16x128xf32>, vector<16x128xf32> -> vector<16x128xf32>
    %144 = arith.addf %137, %143 : vector<16x128xf32>
    %c2_159 = arith.constant 2 : index
    %c0_160 = arith.constant 0 : index
    %c0_161 = arith.constant 0 : index
    %145 = vector.load %arg10[%c2_159, %c0_160, %c0_161] : memref<3x16x16xf32, #tpu.memory_space<vmem>>, vector<1x16x16xf32>
    %146 = vector.shape_cast %145 : vector<1x16x16xf32> to vector<16x16xf32>
    %c2_162 = arith.constant 2 : index
    %c0_163 = arith.constant 0 : index
    %c0_164 = arith.constant 0 : index
    %147 = vector.load %arg22[%c2_162, %c0_163, %c0_164] : memref<3x128x128xf32, #tpu.memory_space<vmem>>, vector<1x128x128xf32>
    %148 = vector.shape_cast %147 : vector<1x128x128xf32> to vector<128x128xf32>
    %cst_165 = arith.constant dense<0.000000e+00> : vector<16x128xf32>
    %149 = tpu.matmul %133, %148, %cst_165 {dimension_numbers = #tpu.dot_dimension_numbers<[1], [0], [0], [1], [0, 0, 1, 1], [], []>} : vector<16x128xf32>, vector<128x128xf32>, vector<16x128xf32> -> vector<16x128xf32>
    %cst_166 = arith.constant dense<0.000000e+00> : vector<16x128xf32>
    %150 = tpu.matmul %146, %149, %cst_166 {dimension_numbers = #tpu.dot_dimension_numbers<[1], [0], [0], [1], [0, 0, 1, 1], [], []>} : vector<16x16xf32>, vector<16x128xf32>, vector<16x128xf32> -> vector<16x128xf32>
    %151 = arith.addf %144, %150 : vector<16x128xf32>
    %152 = vector.broadcast %134 : vector<1x128xf32> to vector<16x128xf32>
    %153 = arith.addf %151, %152 : vector<16x128xf32>
    %c0_167 = arith.constant 0 : index
    %c0_168 = arith.constant 0 : index
    %154 = vector.load %arg26[%c0_167, %c0_168] : memref<1x192xf32, #tpu.memory_space<vmem>>, vector<1x192xf32>
    %c1_169 = arith.constant 1 : index
    %c0_170 = arith.constant 0 : index
    %c0_171 = arith.constant 0 : index
    %155 = vector.load %arg24[%c1_169, %c0_170, %c0_171] : memref<3x64x192xf32, #tpu.memory_space<vmem>>, vector<1x64x192xf32>
    %156 = vector.shape_cast %155 : vector<1x64x192xf32> to vector<64x192xf32>
    %cst_172 = arith.constant dense<0.000000e+00> : vector<16x192xf32>
    %157 = tpu.matmul %99, %156, %cst_172 {dimension_numbers = #tpu.dot_dimension_numbers<[1], [0], [0], [1], [0, 0, 1, 1], [], []>} : vector<16x64xf32>, vector<64x192xf32>, vector<16x192xf32> -> vector<16x192xf32>
    %c1_173 = arith.constant 1 : index
    %c0_174 = arith.constant 0 : index
    %c0_175 = arith.constant 0 : index
    %158 = vector.load %arg25[%c1_173, %c0_174, %c0_175] : memref<3x128x192xf32, #tpu.memory_space<vmem>>, vector<1x128x192xf32>
    %159 = vector.shape_cast %158 : vector<1x128x192xf32> to vector<128x192xf32>
    %cst_176 = arith.constant dense<0.000000e+00> : vector<16x192xf32>
    %160 = tpu.matmul %153, %159, %cst_176 {dimension_numbers = #tpu.dot_dimension_numbers<[1], [0], [0], [1], [0, 0, 1, 1], [], []>} : vector<16x128xf32>, vector<128x192xf32>, vector<16x192xf32> -> vector<16x192xf32>
    %161 = arith.addf %157, %160 : vector<16x192xf32>
    %c0_177 = arith.constant 0 : index
    %c0_178 = arith.constant 0 : index
    %c0_179 = arith.constant 0 : index
    %162 = vector.load %arg10[%c0_177, %c0_178, %c0_179] : memref<3x16x16xf32, #tpu.memory_space<vmem>>, vector<1x16x16xf32>
    %163 = vector.shape_cast %162 : vector<1x16x16xf32> to vector<16x16xf32>
    %c0_180 = arith.constant 0 : index
    %c0_181 = arith.constant 0 : index
    %c0_182 = arith.constant 0 : index
    %164 = vector.load %arg24[%c0_180, %c0_181, %c0_182] : memref<3x64x192xf32, #tpu.memory_space<vmem>>, vector<1x64x192xf32>
    %165 = vector.shape_cast %164 : vector<1x64x192xf32> to vector<64x192xf32>
    %cst_183 = arith.constant dense<0.000000e+00> : vector<16x192xf32>
    %166 = tpu.matmul %99, %165, %cst_183 {dimension_numbers = #tpu.dot_dimension_numbers<[1], [0], [0], [1], [0, 0, 1, 1], [], []>} : vector<16x64xf32>, vector<64x192xf32>, vector<16x192xf32> -> vector<16x192xf32>
    %c0_184 = arith.constant 0 : index
    %c0_185 = arith.constant 0 : index
    %c0_186 = arith.constant 0 : index
    %167 = vector.load %arg25[%c0_184, %c0_185, %c0_186] : memref<3x128x192xf32, #tpu.memory_space<vmem>>, vector<1x128x192xf32>
    %168 = vector.shape_cast %167 : vector<1x128x192xf32> to vector<128x192xf32>
    %cst_187 = arith.constant dense<0.000000e+00> : vector<16x192xf32>
    %169 = tpu.matmul %153, %168, %cst_187 {dimension_numbers = #tpu.dot_dimension_numbers<[1], [0], [0], [1], [0, 0, 1, 1], [], []>} : vector<16x128xf32>, vector<128x192xf32>, vector<16x192xf32> -> vector<16x192xf32>
    %170 = arith.addf %166, %169 : vector<16x192xf32>
    %cst_188 = arith.constant dense<0.000000e+00> : vector<16x192xf32>
    %171 = tpu.matmul %163, %170, %cst_188 {dimension_numbers = #tpu.dot_dimension_numbers<[1], [0], [0], [1], [0, 0, 1, 1], [], []>} : vector<16x16xf32>, vector<16x192xf32>, vector<16x192xf32> -> vector<16x192xf32>
    %172 = arith.addf %161, %171 : vector<16x192xf32>
    %c2_189 = arith.constant 2 : index
    %c0_190 = arith.constant 0 : index
    %c0_191 = arith.constant 0 : index
    %173 = vector.load %arg10[%c2_189, %c0_190, %c0_191] : memref<3x16x16xf32, #tpu.memory_space<vmem>>, vector<1x16x16xf32>
    %174 = vector.shape_cast %173 : vector<1x16x16xf32> to vector<16x16xf32>
    %c2_192 = arith.constant 2 : index
    %c0_193 = arith.constant 0 : index
    %c0_194 = arith.constant 0 : index
    %175 = vector.load %arg24[%c2_192, %c0_193, %c0_194] : memref<3x64x192xf32, #tpu.memory_space<vmem>>, vector<1x64x192xf32>
    %176 = vector.shape_cast %175 : vector<1x64x192xf32> to vector<64x192xf32>
    %cst_195 = arith.constant dense<0.000000e+00> : vector<16x192xf32>
    %177 = tpu.matmul %99, %176, %cst_195 {dimension_numbers = #tpu.dot_dimension_numbers<[1], [0], [0], [1], [0, 0, 1, 1], [], []>} : vector<16x64xf32>, vector<64x192xf32>, vector<16x192xf32> -> vector<16x192xf32>
    %c2_196 = arith.constant 2 : index
    %c0_197 = arith.constant 0 : index
    %c0_198 = arith.constant 0 : index
    %178 = vector.load %arg25[%c2_196, %c0_197, %c0_198] : memref<3x128x192xf32, #tpu.memory_space<vmem>>, vector<1x128x192xf32>
    %179 = vector.shape_cast %178 : vector<1x128x192xf32> to vector<128x192xf32>
    %cst_199 = arith.constant dense<0.000000e+00> : vector<16x192xf32>
    %180 = tpu.matmul %153, %179, %cst_199 {dimension_numbers = #tpu.dot_dimension_numbers<[1], [0], [0], [1], [0, 0, 1, 1], [], []>} : vector<16x128xf32>, vector<128x192xf32>, vector<16x192xf32> -> vector<16x192xf32>
    %181 = arith.addf %177, %180 : vector<16x192xf32>
    %cst_200 = arith.constant dense<0.000000e+00> : vector<16x192xf32>
    %182 = tpu.matmul %174, %181, %cst_200 {dimension_numbers = #tpu.dot_dimension_numbers<[1], [0], [0], [1], [0, 0, 1, 1], [], []>} : vector<16x16xf32>, vector<16x192xf32>, vector<16x192xf32> -> vector<16x192xf32>
    %183 = arith.addf %172, %182 : vector<16x192xf32>
    %184 = vector.broadcast %154 : vector<1x192xf32> to vector<16x192xf32>
    %185 = arith.addf %183, %184 : vector<16x192xf32>
    %c0_201 = arith.constant 0 : index
    %c0_202 = arith.constant 0 : index
    %186 = vector.load %arg28[%c0_201, %c0_202] : memref<1x16xf32, #tpu.memory_space<vmem>>, vector<1x16xf32>
    %c1_203 = arith.constant 1 : index
    %c0_204 = arith.constant 0 : index
    %c0_205 = arith.constant 0 : index
    %187 = vector.load %arg27[%c1_203, %c0_204, %c0_205] : memref<3x192x16xf32, #tpu.memory_space<vmem>>, vector<1x192x16xf32>
    %188 = vector.shape_cast %187 : vector<1x192x16xf32> to vector<192x16xf32>
    %cst_206 = arith.constant dense<0.000000e+00> : vector<16x16xf32>
    %189 = tpu.matmul %185, %188, %cst_206 {dimension_numbers = #tpu.dot_dimension_numbers<[1], [0], [0], [1], [0, 0, 1, 1], [], []>} : vector<16x192xf32>, vector<192x16xf32>, vector<16x16xf32> -> vector<16x16xf32>
    %c0_207 = arith.constant 0 : index
    %c0_208 = arith.constant 0 : index
    %c0_209 = arith.constant 0 : index
    %190 = vector.load %arg10[%c0_207, %c0_208, %c0_209] : memref<3x16x16xf32, #tpu.memory_space<vmem>>, vector<1x16x16xf32>
    %191 = vector.shape_cast %190 : vector<1x16x16xf32> to vector<16x16xf32>
    %c0_210 = arith.constant 0 : index
    %c0_211 = arith.constant 0 : index
    %c0_212 = arith.constant 0 : index
    %192 = vector.load %arg27[%c0_210, %c0_211, %c0_212] : memref<3x192x16xf32, #tpu.memory_space<vmem>>, vector<1x192x16xf32>
    %193 = vector.shape_cast %192 : vector<1x192x16xf32> to vector<192x16xf32>
    %cst_213 = arith.constant dense<0.000000e+00> : vector<16x16xf32>
    %194 = tpu.matmul %185, %193, %cst_213 {dimension_numbers = #tpu.dot_dimension_numbers<[1], [0], [0], [1], [0, 0, 1, 1], [], []>} : vector<16x192xf32>, vector<192x16xf32>, vector<16x16xf32> -> vector<16x16xf32>
    %cst_214 = arith.constant dense<0.000000e+00> : vector<16x16xf32>
    %195 = tpu.matmul %191, %194, %cst_214 {dimension_numbers = #tpu.dot_dimension_numbers<[1], [0], [0], [1], [0, 0, 1, 1], [], []>} : vector<16x16xf32>, vector<16x16xf32>, vector<16x16xf32> -> vector<16x16xf32>
    %196 = arith.addf %189, %195 : vector<16x16xf32>
    %c2_215 = arith.constant 2 : index
    %c0_216 = arith.constant 0 : index
    %c0_217 = arith.constant 0 : index
    %197 = vector.load %arg10[%c2_215, %c0_216, %c0_217] : memref<3x16x16xf32, #tpu.memory_space<vmem>>, vector<1x16x16xf32>
    %198 = vector.shape_cast %197 : vector<1x16x16xf32> to vector<16x16xf32>
    %c2_218 = arith.constant 2 : index
    %c0_219 = arith.constant 0 : index
    %c0_220 = arith.constant 0 : index
    %199 = vector.load %arg27[%c2_218, %c0_219, %c0_220] : memref<3x192x16xf32, #tpu.memory_space<vmem>>, vector<1x192x16xf32>
    %200 = vector.shape_cast %199 : vector<1x192x16xf32> to vector<192x16xf32>
    %cst_221 = arith.constant dense<0.000000e+00> : vector<16x16xf32>
    %201 = tpu.matmul %185, %200, %cst_221 {dimension_numbers = #tpu.dot_dimension_numbers<[1], [0], [0], [1], [0, 0, 1, 1], [], []>} : vector<16x192xf32>, vector<192x16xf32>, vector<16x16xf32> -> vector<16x16xf32>
    %cst_222 = arith.constant dense<0.000000e+00> : vector<16x16xf32>
    %202 = tpu.matmul %198, %201, %cst_222 {dimension_numbers = #tpu.dot_dimension_numbers<[1], [0], [0], [1], [0, 0, 1, 1], [], []>} : vector<16x16xf32>, vector<16x16xf32>, vector<16x16xf32> -> vector<16x16xf32>
    %203 = arith.addf %196, %202 : vector<16x16xf32>
    %204 = vector.broadcast %186 : vector<1x16xf32> to vector<16x16xf32>
    %205 = arith.addf %203, %204 : vector<16x16xf32>
    %c0_223 = arith.constant 0 : index
    %c0_224 = arith.constant 0 : index
    %c0_225 = arith.constant 0 : index
    %206 = vector.load %arg29[%c0_223, %c0_224, %c0_225] : memref<1x16x16xf32, #tpu.memory_space<vmem>>, vector<1x16x16xf32>
    %207 = vector.shape_cast %206 : vector<1x16x16xf32> to vector<16x16xf32>
    %208 = vector.shape_cast %205 : vector<16x16xf32> to vector<1x16x16xf32>
    tpu.vector_store %arg29[%c0_223, %c0_224, %c0_225], %208 {strides = array<i32>} : memref<1x16x16xf32, #tpu.memory_space<vmem>>, vector<1x16x16xf32>,
    return
  }
  func.func @transform_0(%arg0: i32) -> (i32, i32, i32) {
    %c0_i32 = arith.constant 0 : i32
    %c0_i32_0 = arith.constant 0 : i32
    %c0_i32_1 = arith.constant 0 : i32
    return %arg0, %c0_i32, %c0_i32_0 : i32, i32, i32
  }
  func.func @transform_1(%arg0: i32) -> (i32, i32, i32) {
    %c0_i32 = arith.constant 0 : i32
    %c0_i32_0 = arith.constant 0 : i32
    %c0_i32_1 = arith.constant 0 : i32
    return %arg0, %c0_i32, %c0_i32_0 : i32, i32, i32
  }
  func.func @transform_2(%arg0: i32) -> (i32, i32, i32) {
    %c0_i32 = arith.constant 0 : i32
    %c0_i32_0 = arith.constant 0 : i32
    %c0_i32_1 = arith.constant 0 : i32
    return %arg0, %c0_i32, %c0_i32_0 : i32, i32, i32
  }
  func.func @transform_3(%arg0: i32) -> (i32, i32) {
    %c0_i32 = arith.constant 0 : i32
    %c0_i32_0 = arith.constant 0 : i32
    %c0_i32_1 = arith.constant 0 : i32
    return %c0_i32, %c0_i32_0 : i32, i32
  }
  func.func @transform_4(%arg0: i32) -> (i32, i32) {
    %c0_i32 = arith.constant 0 : i32
    %c0_i32_0 = arith.constant 0 : i32
    %c0_i32_1 = arith.constant 0 : i32
    return %c0_i32, %c0_i32_0 : i32, i32
  }
  func.func @transform_5(%arg0: i32) -> (i32, i32) {
    %c0_i32 = arith.constant 0 : i32
    %c0_i32_0 = arith.constant 0 : i32
    %c0_i32_1 = arith.constant 0 : i32
    return %c0_i32, %c0_i32_0 : i32, i32
  }
  func.func @transform_6(%arg0: i32) -> (i32, i32) {
    %c0_i32 = arith.constant 0 : i32
    %c0_i32_0 = arith.constant 0 : i32
    %c0_i32_1 = arith.constant 0 : i32
    return %c0_i32, %c0_i32_0 : i32, i32
  }
  func.func @transform_7(%arg0: i32) -> (i32, i32) {
    %c0_i32 = arith.constant 0 : i32
    %c0_i32_0 = arith.constant 0 : i32
    %c0_i32_1 = arith.constant 0 : i32
    return %c0_i32, %c0_i32_0 : i32, i32
  }
  func.func @transform_8(%arg0: i32) -> (i32, i32, i32) {
    %c0_i32 = arith.constant 0 : i32
    %c0_i32_0 = arith.constant 0 : i32
    %c0_i32_1 = arith.constant 0 : i32
    %c0_i32_2 = arith.constant 0 : i32
    return %c0_i32, %c0_i32_0, %c0_i32_1 : i32, i32, i32
  }
  func.func @transform_9(%arg0: i32) -> (i32, i32, i32) {
    %c0_i32 = arith.constant 0 : i32
    %c0_i32_0 = arith.constant 0 : i32
    %c0_i32_1 = arith.constant 0 : i32
    %c0_i32_2 = arith.constant 0 : i32
    return %c0_i32, %c0_i32_0, %c0_i32_1 : i32, i32, i32
  }
  func.func @transform_10(%arg0: i32) -> (i32, i32, i32) {
    %c0_i32 = arith.constant 0 : i32
    %c0_i32_0 = arith.constant 0 : i32
    %c0_i32_1 = arith.constant 0 : i32
    %c0_i32_2 = arith.constant 0 : i32
    return %c0_i32, %c0_i32_0, %c0_i32_1 : i32, i32, i32
  }
  func.func @transform_11(%arg0: i32) -> (i32, i32) {
    %c0_i32 = arith.constant 0 : i32
    %c0_i32_0 = arith.constant 0 : i32
    %c0_i32_1 = arith.constant 0 : i32
    return %c0_i32, %c0_i32_0 : i32, i32
  }
  func.func @transform_12(%arg0: i32) -> (i32, i32, i32) {
    %c0_i32 = arith.constant 0 : i32
    %c0_i32_0 = arith.constant 0 : i32
    %c0_i32_1 = arith.constant 0 : i32
    %c0_i32_2 = arith.constant 0 : i32
    return %c0_i32, %c0_i32_0, %c0_i32_1 : i32, i32, i32
  }
  func.func @transform_13(%arg0: i32) -> (i32, i32) {
    %c0_i32 = arith.constant 0 : i32
    %c0_i32_0 = arith.constant 0 : i32
    %c0_i32_1 = arith.constant 0 : i32
    return %c0_i32, %c0_i32_0 : i32, i32
  }
  func.func @transform_14(%arg0: i32) -> (i32, i32, i32) {
    %c0_i32 = arith.constant 0 : i32
    %c0_i32_0 = arith.constant 0 : i32
    %c0_i32_1 = arith.constant 0 : i32
    %c0_i32_2 = arith.constant 0 : i32
    return %c0_i32, %c0_i32_0, %c0_i32_1 : i32, i32, i32
  }
  func.func @transform_15(%arg0: i32) -> (i32, i32) {
    %c0_i32 = arith.constant 0 : i32
    %c0_i32_0 = arith.constant 0 : i32
    %c0_i32_1 = arith.constant 0 : i32
    return %c0_i32, %c0_i32_0 : i32, i32
  }
  func.func @transform_16(%arg0: i32) -> (i32, i32, i32) {
    %c0_i32 = arith.constant 0 : i32
    %c0_i32_0 = arith.constant 0 : i32
    %c0_i32_1 = arith.constant 0 : i32
    %c0_i32_2 = arith.constant 0 : i32
    return %c0_i32, %c0_i32_0, %c0_i32_1 : i32, i32, i32
  }
  func.func @transform_17(%arg0: i32) -> (i32, i32) {
    %c0_i32 = arith.constant 0 : i32
    %c0_i32_0 = arith.constant 0 : i32
    %c0_i32_1 = arith.constant 0 : i32
    return %c0_i32, %c0_i32_0 : i32, i32
  }
  func.func @transform_18(%arg0: i32) -> (i32, i32, i32) {
    %c0_i32 = arith.constant 0 : i32
    %c0_i32_0 = arith.constant 0 : i32
    %c0_i32_1 = arith.constant 0 : i32
    %c0_i32_2 = arith.constant 0 : i32
    return %c0_i32, %c0_i32_0, %c0_i32_1 : i32, i32, i32
  }
  func.func @transform_19(%arg0: i32) -> (i32, i32, i32) {
    %c0_i32 = arith.constant 0 : i32
    %c0_i32_0 = arith.constant 0 : i32
    %c0_i32_1 = arith.constant 0 : i32
    %c0_i32_2 = arith.constant 0 : i32
    return %c0_i32, %c0_i32_0, %c0_i32_1 : i32, i32, i32
  }
  func.func @transform_20(%arg0: i32) -> (i32, i32) {
    %c0_i32 = arith.constant 0 : i32
    %c0_i32_0 = arith.constant 0 : i32
    %c0_i32_1 = arith.constant 0 : i32
    return %c0_i32, %c0_i32_0 : i32, i32
  }
  func.func @transform_21(%arg0: i32) -> (i32, i32, i32) {
    %c0_i32 = arith.constant 0 : i32
    %c0_i32_0 = arith.constant 0 : i32
    %c0_i32_1 = arith.constant 0 : i32
    %c0_i32_2 = arith.constant 0 : i32
    return %c0_i32, %c0_i32_0, %c0_i32_1 : i32, i32, i32
  }
  func.func @transform_22(%arg0: i32) -> (i32, i32) {
    %c0_i32 = arith.constant 0 : i32
    %c0_i32_0 = arith.constant 0 : i32
    %c0_i32_1 = arith.constant 0 : i32
    return %c0_i32, %c0_i32_0 : i32, i32
  }
  func.func @transform_23(%arg0: i32) -> (i32, i32, i32) {
    %c0_i32 = arith.constant 0 : i32
    %c0_i32_0 = arith.constant 0 : i32
    %c0_i32_1 = arith.constant 0 : i32
    %c0_i32_2 = arith.constant 0 : i32
    return %c0_i32, %c0_i32_0, %c0_i32_1 : i32, i32, i32
  }
  func.func @transform_24(%arg0: i32) -> (i32, i32, i32) {
    %c0_i32 = arith.constant 0 : i32
    %c0_i32_0 = arith.constant 0 : i32
    %c0_i32_1 = arith.constant 0 : i32
    %c0_i32_2 = arith.constant 0 : i32
    return %c0_i32, %c0_i32_0, %c0_i32_1 : i32, i32, i32
  }
  func.func @transform_25(%arg0: i32) -> (i32, i32) {
    %c0_i32 = arith.constant 0 : i32
    %c0_i32_0 = arith.constant 0 : i32
    %c0_i32_1 = arith.constant 0 : i32
    return %c0_i32, %c0_i32_0 : i32, i32
  }
  func.func @transform_26(%arg0: i32) -> (i32, i32, i32) {
    %c0_i32 = arith.constant 0 : i32
    %c0_i32_0 = arith.constant 0 : i32
    %c0_i32_1 = arith.constant 0 : i32
    %c0_i32_2 = arith.constant 0 : i32
    return %c0_i32, %c0_i32_0, %c0_i32_1 : i32, i32, i32
  }
  func.func @transform_27(%arg0: i32) -> (i32, i32) {
    %c0_i32 = arith.constant 0 : i32
    %c0_i32_0 = arith.constant 0 : i32
    %c0_i32_1 = arith.constant 0 : i32
    return %c0_i32, %c0_i32_0 : i32, i32
  }
  func.func @transform_28(%arg0: i32) -> (i32, i32, i32) {
    %c0_i32 = arith.constant 0 : i32
    %c0_i32_0 = arith.constant 0 : i32
    %c0_i32_1 = arith.constant 0 : i32
    return %arg0, %c0_i32, %c0_i32_0 : i32, i32, i32
  }
}

</mosaic_0001>

<llo_original>
// kernel: tile.59
$region0: #{tile.59}
  %s0 = inlined_call_operand.vmem [shape: f32[16,12], index: 0, kind: input, shape index: {}]
  %s1 = inlined_call_operand.vmem [shape: f32[1,192], index: 1, kind: output, shape index: {}]
  $region1: #{tile.59} parent=0
    #allocation0 [shape = 'u8[8192]{0}', space=vmem, size = 0x2000, scoped, tag = 'scoped mem for output reshape']
    %v2 = vld [vmem:[%s0] sm:$0x1]
    %vm3 = vcmask 97280
    %4 = vst.msk [vmem:[#allocation0] sm:$0x1] %vm3, %v2
    %s5 = scalar_lea.vmem %s0, 10
    %v6 = vld [vmem:[%s5] sm:$0x1]
    %s7 = scalar_lea.vmem %s0, 10
    %v8 = vld [vmem:[%s7] sm:$0x1]
    %vm9 = vcmask 64512
    %v10 = vsel %vm9, %v8, %v6
    %11 = vrot.lane.b32.xlu0 %v10, 120
    %v12 = vpop.permute.xlu0 %11
    %vm13 = vcmask 31744
    %s14 = scalar_lea.vmem [#allocation0], 8
    %15 = vst.msk [vmem:[%s14] sm:$0x1] %vm13, %v12
    %vm16 = vcmask 1048512
    %17 = vst.msk [vmem:[#allocation0] sm:$0x1] %vm16, %v12
    %s18 = scalar_lea.vmem %s0, 9
    %v19 = vld [vmem:[%s18] sm:$0x1]
    %20 = vrot.lane.b32.xlu0 %v19, 108
    %v21 = vpop.permute.xlu0 %20
    %vm22 = vcmask 982880
    %23 = vst.msk [vmem:[#allocation0] sm:$0x1] %vm22, %v21
    %s24 = scalar_lea.vmem %s0, 8
    %v25 = vld [vmem:[%s24] sm:$0x1]
    %26 = vrot.lane.b32.xlu0 %v25, 96
    %v27 = vpop.permute.xlu0 %26
    %vm28 = vcmask 884480
    %29 = vst.msk [vmem:[#allocation0] sm:$0x1] %vm28, %v27
    %s30 = scalar_lea.vmem %s0, 7
    %v31 = vld [vmem:[%s30] sm:$0x1]
    %32 = vrot.lane.b32.xlu0 %v31, 84
    %v33 = vpop.permute.xlu0 %32
    %vm34 = vcmask 786080
    %35 = vst.msk [vmem:[#allocation0] sm:$0x1] %vm34, %v33
    %s36 = scalar_lea.vmem %s0, 6
    %v37 = vld [vmem:[%s36] sm:$0x1]
    %38 = vrot.lane.b32.xlu0 %v37, 72
    %v39 = vpop.permute.xlu0 %38
    %vm40 = vcmask 687680
    %41 = vst.msk [vmem:[#allocation0] sm:$0x1] %vm40, %v39
    %s42 = scalar_lea.vmem %s0, 5
    %v43 = vld [vmem:[%s42] sm:$0x1]
    %44 = vrot.lane.b32.xlu0 %v43, 60
    %v45 = vpop.permute.xlu0 %44
    %vm46 = vcmask 589280
    %47 = vst.msk [vmem:[#allocation0] sm:$0x1] %vm46, %v45
    %s48 = scalar_lea.vmem %s0, 15
    %v49 = vld [vmem:[%s48] sm:$0x1]
    %50 = vrot.lane.b32.xlu0 %v49, 52
    %v51 = vpop.permute.xlu0 %50
    %vm52 = vcmask 523680
    %s53 = scalar_lea.vmem [#allocation0], 8
    %54 = vst.msk [vmem:[%s53] sm:$0x1] %vm52, %v51
    %s55 = scalar_lea.vmem %s0, 4
    %v56 = vld [vmem:[%s55] sm:$0x1]
    %57 = vrot.lane.b32.xlu0 %v56, 48
    %v58 = vpop.permute.xlu0 %57
    %vm59 = vcmask 490880
    %60 = vst.msk [vmem:[#allocation0] sm:$0x1] %vm59, %v58
    %s61 = scalar_lea.vmem %s0, 14
    %v62 = vld [vmem:[%s61] sm:$0x1]
    %63 = vrot.lane.b32.xlu0 %v62, 40
    %v64 = vpop.permute.xlu0 %63
    %vm65 = vcmask 425280
    %s66 = scalar_lea.vmem [#allocation0], 8
    %67 = vst.msk [vmem:[%s66] sm:$0x1] %vm65, %v64
    %s68 = scalar_lea.vmem %s0, 3
    %v69 = vld [vmem:[%s68] sm:$0x1]
    %70 = vrot.lane.b32.xlu0 %v69, 36
    %v71 = vpop.permute.xlu0 %70
    %vm72 = vcmask 392480
    %73 = vst.msk [vmem:[#allocation0] sm:$0x1] %vm72, %v71
    %s74 = scalar_lea.vmem %s0, 13
    %v75 = vld [vmem:[%s74] sm:$0x1]
    %76 = vrot.lane.b32.xlu0 %v75, 28
    %v77 = vpop.permute.xlu0 %76
    %vm78 = vcmask 326880
    %s79 = scalar_lea.vmem [#allocation0], 8
    %80 = vst.msk [vmem:[%s79] sm:$0x1] %vm78, %v77
    %s81 = scalar_lea.vmem %s0, 2
    %v82 = vld [vmem:[%s81] sm:$0x1]
    %83 = vrot.lane.b32.xlu0 %v82, 24
    %v84 = vpop.permute.xlu0 %83
    %vm85 = vcmask 294080
    %86 = vst.msk [vmem:[#allocation0] sm:$0x1] %vm85, %v84
    %s87 = scalar_lea.vmem %s0, 12
    %v88 = vld [vmem:[%s87] sm:$0x1]
    %89 = vrot.lane.b32.xlu0 %v88, 16
    %v90 = vpop.permute.xlu0 %89
    %vm91 = vcmask 228480
    %s92 = scalar_lea.vmem [#allocation0], 8
    %93 = vst.msk [vmem:[%s92] sm:$0x1] %vm91, %v90
    %s94 = scalar_lea.vmem %s0, 1
    %v95 = vld [vmem:[%s94] sm:$0x1]
    %96 = vrot.lane.b32.xlu0 %v95, 12
    %v97 = vpop.permute.xlu0 %96
    %vm98 = vcmask 195680
    %99 = vst.msk [vmem:[#allocation0] sm:$0x1] %vm98, %v97
    %s100 = scalar_lea.vmem %s0, 11
    %v101 = vld [vmem:[%s100] sm:$0x1]
    %102 = vrot.lane.b32.xlu0 %v101, 4
    %v103 = vpop.permute.xlu0 %102
    %vm104 = vcmask 130080
    %s105 = scalar_lea.vmem [#allocation0], 8
    %106 = vst.msk [vmem:[%s105] sm:$0x1] %vm104, %v103
    %s108 = ssub.s32 2, 1
    %v109 = vld [vmem:[#allocation0] sm:%s108]
    %s111 = ssub.s32 2, 1
    %112 = vst [vmem:[%s1] sm:%s111] %v109
    %s113 = scalar_lea.vmem [#allocation0], 8
    %v114 = vld [vmem:[%s113] sm:%s108]
    %s116 = ssub.s32 2, 1
    %s117 = scalar_lea.vmem %s1, 1
    %118 = vst [vmem:[%s117] sm:%s116] %v114

// kernel: tile.58
$region0: #{tile.58}
  #allocation0 [shape = 's32[1]{0}', space=sflag, size = 0x4, scoped, tag = 'scoped memory for tile.58']
  %s0 = inlined_call_operand.vmem [shape: f32[12], index: 0, kind: input, shape index: {}]
  %s1 = inlined_call_operand.vmem [shape: f32[16,12], index: 1, kind: output, shape index: {}]
  // Predicated region
  $region2: #{tile.58} parent=0 // pred_check
    _
  $region3: #{tile.58} parent=0 // pred_check_branch
    %3 = sbr.rel (0) target = $region5
  $region4: #{tile.58} parent=0 // pred_region
    _
  $region5: #{tile.58} parent=0 // pred_fallthru
    _
  %v4 = vld [vmem:[%s0] ss:$0 sm:$0xff]
  %5 = vst [vmem:[%s1] sm:$0xff] %v4
  %s6 = scalar_lea.vmem %s1, 8
  %7 = vst [vmem:[%s6] sm:$0xff] %v4

// kernel: tile.43
$region0: #{tile.43}
  %s0 = inlined_call_operand.vmem [shape: f32[16,4], index: 0, kind: input, shape index: {}]
  %s1 = inlined_call_operand.vmem [shape: f32[1,64], index: 1, kind: output, shape index: {}]
  $region1: #{tile.43} parent=0
    #allocation0 [shape = 'u8[4096]{0}', space=vmem, size = 0x1000, scoped, tag = 'scoped mem for output reshape']
    %v2 = vld [vmem:[%s0] sm:$0x1]
    %vm3 = vcmask 31744
    %4 = vst.msk [vmem:[#allocation0] sm:$0x1] %vm3, %v2
    %s5 = scalar_lea.vmem %s0, 15
    %v6 = vld [vmem:[%s5] sm:$0x1]
    %7 = vrot.lane.b32.xlu0 %v6, 60
    %v8 = vpop.permute.xlu0 %7
    %vm9 = vcmask 523744
    %10 = vst.msk [vmem:[#allocation0] sm:$0x1] %vm9, %v8
    %s11 = scalar_lea.vmem %s0, 14
    %v12 = vld [vmem:[%s11] sm:$0x1]
    %13 = vrot.lane.b32.xlu0 %v12, 56
    %v14 = vpop.permute.xlu0 %13
    %vm15 = vcmask 490944
    %16 = vst.msk [vmem:[#allocation0] sm:$0x1] %vm15, %v14
    %s17 = scalar_lea.vmem %s0, 13
    %v18 = vld [vmem:[%s17] sm:$0x1]
    %19 = vrot.lane.b32.xlu0 %v18, 52
    %v20 = vpop.permute.xlu0 %19
    %vm21 = vcmask 458144
    %22 = vst.msk [vmem:[#allocation0] sm:$0x1] %vm21, %v20
    %s23 = scalar_lea.vmem %s0, 12
    %v24 = vld [vmem:[%s23] sm:$0x1]
    %25 = vrot.lane.b32.xlu0 %v24, 48
    %v26 = vpop.permute.xlu0 %25
    %vm27 = vcmask 425344
    %28 = vst.msk [vmem:[#allocation0] sm:$0x1] %vm27, %v26
    %s29 = scalar_lea.vmem %s0, 11
    %v30 = vld [vmem:[%s29] sm:$0x1]
    %31 = vrot.lane.b32.xlu0 %v30, 44
    %v32 = vpop.permute.xlu0 %31
    %vm33 = vcmask 392544
    %34 = vst.msk [vmem:[#allocation0] sm:$0x1] %vm33, %v32
    %s35 = scalar_lea.vmem %s0, 10
    %v36 = vld [vmem:[%s35] sm:$0x1]
    %37 = vrot.lane.b32.xlu0 %v36, 40
    %v38 = vpop.permute.xlu0 %37
    %vm39 = vcmask 359744
    %40 = vst.msk [vmem:[#allocation0] sm:$0x1] %vm39, %v38
    %s41 = scalar_lea.vmem %s0, 9
    %v42 = vld [vmem:[%s41] sm:$0x1]
    %43 = vrot.lane.b32.xlu0 %v42, 36
    %v44 = vpop.permute.xlu0 %43
    %vm45 = vcmask 326944
    %46 = vst.msk [vmem:[#allocation0] sm:$0x1] %vm45, %v44
    %s47 = scalar_lea.vmem %s0, 8
    %v48 = vld [vmem:[%s47] sm:$0x1]
    %49 = vrot.lane.b32.xlu0 %v48, 32
    %v50 = vpop.permute.xlu0 %49
    %vm51 = vcmask 294144
    %52 = vst.msk [vmem:[#allocation0] sm:$0x1] %vm51, %v50
    %s53 = scalar_lea.vmem %s0, 7
    %v54 = vld [vmem:[%s53] sm:$0x1]
    %55 = vrot.lane.b32.xlu0 %v54, 28
    %v56 = vpop.permute.xlu0 %55
    %vm57 = vcmask 261344
    %58 = vst.msk [vmem:[#allocation0] sm:$0x1] %vm57, %v56
    %s59 = scalar_lea.vmem %s0, 6
    %v60 = vld [vmem:[%s59] sm:$0x1]
    %61 = vrot.lane.b32.xlu0 %v60, 24
    %v62 = vpop.permute.xlu0 %61
    %vm63 = vcmask 228544
    %64 = vst.msk [vmem:[#allocation0] sm:$0x1] %vm63, %v62
    %s65 = scalar_lea.vmem %s0, 5
    %v66 = vld [vmem:[%s65] sm:$0x1]
    %67 = vrot.lane.b32.xlu0 %v66, 20
    %v68 = vpop.permute.xlu0 %67
    %vm69 = vcmask 195744
    %70 = vst.msk [vmem:[#allocation0] sm:$0x1] %vm69, %v68
    %s71 = scalar_lea.vmem %s0, 4
    %v72 = vld [vmem:[%s71] sm:$0x1]
    %73 = vrot.lane.b32.xlu0 %v72, 16
    %v74 = vpop.permute.xlu0 %73
    %vm75 = vcmask 162944
    %76 = vst.msk [vmem:[#allocation0] sm:$0x1] %vm75, %v74
    %s77 = scalar_lea.vmem %s0, 3
    %v78 = vld [vmem:[%s77] sm:$0x1]
    %79 = vrot.lane.b32.xlu0 %v78, 12
    %v80 = vpop.permute.xlu0 %79
    %vm81 = vcmask 130144
    %82 = vst.msk [vmem:[#allocation0] sm:$0x1] %vm81, %v80
    %s83 = scalar_lea.vmem %s0, 2
    %v84 = vld [vmem:[%s83] sm:$0x1]
    %85 = vrot.lane.b32.xlu0 %v84, 8
    %v86 = vpop.permute.xlu0 %85
    %vm87 = vcmask 97344
    %88 = vst.msk [vmem:[#allocation0] sm:$0x1] %vm87, %v86
    %s89 = scalar_lea.vmem %s0, 1
    %v90 = vld [vmem:[%s89] sm:$0x1]
    %91 = vrot.lane.b32.xlu0 %v90, 4
    %v92 = vpop.permute.xlu0 %91
    %vm93 = vcmask 64544
    %94 = vst.msk [vmem:[#allocation0] sm:$0x1] %vm93, %v92
    %s96 = ssub.s32 2, 1
    %v97 = vld [vmem:[#allocation0] sm:%s96]
    %s99 = ssub.s32 2, 1
    %100 = vst [vmem:[%s1] sm:%s99] %v97

// kernel: tile.42
$region0: #{tile.42}
  #allocation0 [shape = 's32[1]{0}', space=sflag, size = 0x4, scoped, tag = 'scoped memory for tile.42']
  %s0 = inlined_call_operand.vmem [shape: f32[4], index: 0, kind: input, shape index: {}]
  %s1 = inlined_call_operand.vmem [shape: f32[16,4], index: 1, kind: output, shape index: {}]
  // Predicated region
  $region2: #{tile.42} parent=0 // pred_check
    _
  $region3: #{tile.42} parent=0 // pred_check_branch
    %3 = sbr.rel (0) target = $region5
  $region4: #{tile.42} parent=0 // pred_region
    _
  $region5: #{tile.42} parent=0 // pred_fallthru
    _
  %v4 = vld [vmem:[%s0] ss:$0 sm:$0xff]
  %5 = vst [vmem:[%s1] sm:$0xff] %v4
  %s6 = scalar_lea.vmem %s1, 8
  %7 = vst [vmem:[%s6] sm:$0xff] %v4

// kernel: tile.55
$region0: #{tile.55}
  %s0 = inlined_call_operand.vmem [shape: f32[16,8], index: 0, kind: input, shape index: {}]
  %s1 = inlined_call_operand.vmem [shape: f32[1,128], index: 1, kind: output, shape index: {}]
  $region1: #{tile.55} parent=0
    #allocation0 [shape = 'u8[4096]{0}', space=vmem, size = 0x1000, scoped, tag = 'scoped mem for output reshape']
    %v2 = vld [vmem:[%s0] sm:$0x1]
    %vm3 = vcmask 64512
    %4 = vst.msk [vmem:[#allocation0] sm:$0x1] %vm3, %v2
    %s5 = scalar_lea.vmem %s0, 15
    %v6 = vld [vmem:[%s5] sm:$0x1]
    %7 = vrot.lane.b32.xlu0 %v6, 120
    %v8 = vpop.permute.xlu0 %7
    %vm9 = vcmask 1048512
    %10 = vst.msk [vmem:[#allocation0] sm:$0x1] %vm9, %v8
    %s11 = scalar_lea.vmem %s0, 14
    %v12 = vld [vmem:[%s11] sm:$0x1]
    %13 = vrot.lane.b32.xlu0 %v12, 112
    %v14 = vpop.permute.xlu0 %13
    %vm15 = vcmask 982912
    %16 = vst.msk [vmem:[#allocation0] sm:$0x1] %vm15, %v14
    %s17 = scalar_lea.vmem %s0, 13
    %v18 = vld [vmem:[%s17] sm:$0x1]
    %19 = vrot.lane.b32.xlu0 %v18, 104
    %v20 = vpop.permute.xlu0 %19
    %vm21 = vcmask 917312
    %22 = vst.msk [vmem:[#allocation0] sm:$0x1] %vm21, %v20
    %s23 = scalar_lea.vmem %s0, 12
    %v24 = vld [vmem:[%s23] sm:$0x1]
    %25 = vrot.lane.b32.xlu0 %v24, 96
    %v26 = vpop.permute.xlu0 %25
    %vm27 = vcmask 851712
    %28 = vst.msk [vmem:[#allocation0] sm:$0x1] %vm27, %v26
    %s29 = scalar_lea.vmem %s0, 11
    %v30 = vld [vmem:[%s29] sm:$0x1]
    %31 = vrot.lane.b32.xlu0 %v30, 88
    %v32 = vpop.permute.xlu0 %31
    %vm33 = vcmask 786112
    %34 = vst.msk [vmem:[#allocation0] sm:$0x1] %vm33, %v32
    %s35 = scalar_lea.vmem %s0, 10
    %v36 = vld [vmem:[%s35] sm:$0x1]
    %37 = vrot.lane.b32.xlu0 %v36, 80
    %v38 = vpop.permute.xlu0 %37
    %vm39 = vcmask 720512
    %40 = vst.msk [vmem:[#allocation0] sm:$0x1] %vm39, %v38
    %s41 = scalar_lea.vmem %s0, 9
    %v42 = vld [vmem:[%s41] sm:$0x1]
    %43 = vrot.lane.b32.xlu0 %v42, 72
    %v44 = vpop.permute.xlu0 %43
    %vm45 = vcmask 654912
    %46 = vst.msk [vmem:[#allocation0] sm:$0x1] %vm45, %v44
    %s47 = scalar_lea.vmem %s0, 8
    %v48 = vld [vmem:[%s47] sm:$0x1]
    %49 = vrot.lane.b32.xlu0 %v48, 64
    %v50 = vpop.permute.xlu0 %49
    %vm51 = vcmask 589312
    %52 = vst.msk [vmem:[#allocation0] sm:$0x1] %vm51, %v50
    %s53 = scalar_lea.vmem %s0, 7
    %v54 = vld [vmem:[%s53] sm:$0x1]
    %55 = vrot.lane.b32.xlu0 %v54, 56
    %v56 = vpop.permute.xlu0 %55
    %vm57 = vcmask 523712
    %58 = vst.msk [vmem:[#allocation0] sm:$0x1] %vm57, %v56
    %s59 = scalar_lea.vmem %s0, 6
    %v60 = vld [vmem:[%s59] sm:$0x1]
    %61 = vrot.lane.b32.xlu0 %v60, 48
    %v62 = vpop.permute.xlu0 %61
    %vm63 = vcmask 458112
    %64 = vst.msk [vmem:[#allocation0] sm:$0x1] %vm63, %v62
    %s65 = scalar_lea.vmem %s0, 5
    %v66 = vld [vmem:[%s65] sm:$0x1]
    %67 = vrot.lane.b32.xlu0 %v66, 40
    %v68 = vpop.permute.xlu0 %67
    %vm69 = vcmask 392512
    %70 = vst.msk [vmem:[#allocation0] sm:$0x1] %vm69, %v68
    %s71 = scalar_lea.vmem %s0, 4
    %v72 = vld [vmem:[%s71] sm:$0x1]
    %73 = vrot.lane.b32.xlu0 %v72, 32
    %v74 = vpop.permute.xlu0 %73
    %vm75 = vcmask 326912
    %76 = vst.msk [vmem:[#allocation0] sm:$0x1] %vm75, %v74
    %s77 = scalar_lea.vmem %s0, 3
    %v78 = vld [vmem:[%s77] sm:$0x1]
    %79 = vrot.lane.b32.xlu0 %v78, 24
    %v80 = vpop.permute.xlu0 %79
    %vm81 = vcmask 261312
    %82 = vst.msk [vmem:[#allocation0] sm:$0x1] %vm81, %v80
    %s83 = scalar_lea.vmem %s0, 2
    %v84 = vld [vmem:[%s83] sm:$0x1]
    %85 = vrot.lane.b32.xlu0 %v84, 16
    %v86 = vpop.permute.xlu0 %85
    %vm87 = vcmask 195712
    %88 = vst.msk [vmem:[#allocation0] sm:$0x1] %vm87, %v86
    %s89 = scalar_lea.vmem %s0, 1
    %v90 = vld [vmem:[%s89] sm:$0x1]
    %91 = vrot.lane.b32.xlu0 %v90, 8
    %v92 = vpop.permute.xlu0 %91
    %vm93 = vcmask 130112
    %94 = vst.msk [vmem:[#allocation0] sm:$0x1] %vm93, %v92
    %s96 = ssub.s32 2, 1
    %v97 = vld [vmem:[#allocation0] sm:%s96]
    %s99 = ssub.s32 2, 1
    %100 = vst [vmem:[%s1] sm:%s99] %v97

// kernel: tile.54
$region0: #{tile.54}
  #allocation0 [shape = 's32[1]{0}', space=sflag, size = 0x4, scoped, tag = 'scoped memory for tile.54']
  %s0 = inlined_call_operand.vmem [shape: f32[8], index: 0, kind: input, shape index: {}]
  %s1 = inlined_call_operand.vmem [shape: f32[16,8], index: 1, kind: output, shape index: {}]
  // Predicated region
  $region2: #{tile.54} parent=0 // pred_check
    _
  $region3: #{tile.54} parent=0 // pred_check_branch
    %3 = sbr.rel (0) target = $region5
  $region4: #{tile.54} parent=0 // pred_region
    _
  $region5: #{tile.54} parent=0 // pred_fallthru
    _
  %v4 = vld [vmem:[%s0] ss:$0 sm:$0xff]
  %5 = vst [vmem:[%s1] sm:$0xff] %v4
  %s6 = scalar_lea.vmem %s1, 8
  %7 = vst [vmem:[%s6] sm:$0xff] %v4

// kernel: tile.34
$region0: #{tile.34}
  #allocation0 [shape = 's32[1]{0}', space=sflag, size = 0x4, scoped, tag = 'scoped memory for tile.34']
  %s0 = inlined_call_operand.vmem [shape: f32[4], index: 0, kind: input, shape index: {}]
  %s1 = inlined_call_operand.vmem [shape: f32[8,4], index: 1, kind: output, shape index: {}]
  // Predicated region
  $region2: #{tile.34} parent=0 // pred_check
    _
  $region3: #{tile.34} parent=0 // pred_check_branch
    %3 = sbr.rel (0) target = $region5
  $region4: #{tile.34} parent=0 // pred_region
    _
  $region5: #{tile.34} parent=0 // pred_fallthru
    _
  %v4 = vld [vmem:[%s0] ss:$0 sm:$0xff]
  %5 = vst [vmem:[%s1] sm:$0xff] %v4

// kernel: tile.35
$region0: #{tile.35}
  %s0 = inlined_call_operand.vmem [shape: f32[8,4], index: 0, kind: input, shape index: {}]
  %s1 = inlined_call_operand.vmem [shape: f32[1,32], index: 1, kind: output, shape index: {}]
  $region1: #{tile.35} parent=0
    #allocation0 [shape = 'u8[4096]{0}', space=vmem, size = 0x1000, scoped, tag = 'scoped mem for output reshape']
    %v2 = vld [vmem:[%s0] sm:$0x1]
    %vm3 = vcmask 31744
    %4 = vst.msk [vmem:[#allocation0] sm:$0x1] %vm3, %v2
    %s5 = scalar_lea.vmem %s0, 7
    %v6 = vld [vmem:[%s5] sm:$0x1]
    %7 = vrot.lane.b32.xlu0 %v6, 28
    %v8 = vpop.permute.xlu0 %7
    %vm9 = vcmask 261344
    %10 = vst.msk [vmem:[#allocation0] sm:$0x1] %vm9, %v8
    %s11 = scalar_lea.vmem %s0, 6
    %v12 = vld [vmem:[%s11] sm:$0x1]
    %13 = vrot.lane.b32.xlu0 %v12, 24
    %v14 = vpop.permute.xlu0 %13
    %vm15 = vcmask 228544
    %16 = vst.msk [vmem:[#allocation0] sm:$0x1] %vm15, %v14
    %s17 = scalar_lea.vmem %s0, 5
    %v18 = vld [vmem:[%s17] sm:$0x1]
    %19 = vrot.lane.b32.xlu0 %v18, 20
    %v20 = vpop.permute.xlu0 %19
    %vm21 = vcmask 195744
    %22 = vst.msk [vmem:[#allocation0] sm:$0x1] %vm21, %v20
    %s23 = scalar_lea.vmem %s0, 4
    %v24 = vld [vmem:[%s23] sm:$0x1]
    %25 = vrot.lane.b32.xlu0 %v24, 16
    %v26 = vpop.permute.xlu0 %25
    %vm27 = vcmask 162944
    %28 = vst.msk [vmem:[#allocation0] sm:$0x1] %vm27, %v26
    %s29 = scalar_lea.vmem %s0, 3
    %v30 = vld [vmem:[%s29] sm:$0x1]
    %31 = vrot.lane.b32.xlu0 %v30, 12
    %v32 = vpop.permute.xlu0 %31
    %vm33 = vcmask 130144
    %34 = vst.msk [vmem:[#allocation0] sm:$0x1] %vm33, %v32
    %s35 = scalar_lea.vmem %s0, 2
    %v36 = vld [vmem:[%s35] sm:$0x1]
    %37 = vrot.lane.b32.xlu0 %v36, 8
    %v38 = vpop.permute.xlu0 %37
    %vm39 = vcmask 97344
    %40 = vst.msk [vmem:[#allocation0] sm:$0x1] %vm39, %v38
    %s41 = scalar_lea.vmem %s0, 1
    %v42 = vld [vmem:[%s41] sm:$0x1]
    %43 = vrot.lane.b32.xlu0 %v42, 4
    %v44 = vpop.permute.xlu0 %43
    %vm45 = vcmask 64544
    %46 = vst.msk [vmem:[#allocation0] sm:$0x1] %vm45, %v44
    %s48 = ssub.s32 2, 1
    %v49 = vld [vmem:[#allocation0] sm:%s48]
    %s51 = ssub.s32 2, 1
    %52 = vst [vmem:[%s1] sm:%s51] %v49

// kernel: tile.50
$region0: #{tile.50}
  #allocation0 [shape = 's32[1]{0}', space=sflag, size = 0x4, scoped, tag = 'scoped memory for tile.50']
  %s0 = inlined_call_operand.vmem [shape: f32[8], index: 0, kind: input, shape index: {}]
  %s1 = inlined_call_operand.vmem [shape: f32[8,8], index: 1, kind: output, shape index: {}]
  // Predicated region
  $region2: #{tile.50} parent=0 // pred_check
    _
  $region3: #{tile.50} parent=0 // pred_check_branch
    %3 = sbr.rel (0) target = $region5
  $region4: #{tile.50} parent=0 // pred_region
    _
  $region5: #{tile.50} parent=0 // pred_fallthru
    _
  %v4 = vld [vmem:[%s0] ss:$0 sm:$0xff]
  %5 = vst [vmem:[%s1] sm:$0xff] %v4

// kernel: tile.51
$region0: #{tile.51}
  %s0 = inlined_call_operand.vmem [shape: f32[8,8], index: 0, kind: input, shape index: {}]
  %s1 = inlined_call_operand.vmem [shape: f32[1,64], index: 1, kind: output, shape index: {}]
  $region1: #{tile.51} parent=0
    #allocation0 [shape = 'u8[4096]{0}', space=vmem, size = 0x1000, scoped, tag = 'scoped mem for output reshape']
    %v2 = vld [vmem:[%s0] sm:$0x1]
    %vm3 = vcmask 64512
    %4 = vst.msk [vmem:[#allocation0] sm:$0x1] %vm3, %v2
    %s5 = scalar_lea.vmem %s0, 7
    %v6 = vld [vmem:[%s5] sm:$0x1]
    %7 = vrot.lane.b32.xlu0 %v6, 56
    %v8 = vpop.permute.xlu0 %7
    %vm9 = vcmask 523712
    %10 = vst.msk [vmem:[#allocation0] sm:$0x1] %vm9, %v8
    %s11 = scalar_lea.vmem %s0, 6
    %v12 = vld [vmem:[%s11] sm:$0x1]
    %13 = vrot.lane.b32.xlu0 %v12, 48
    %v14 = vpop.permute.xlu0 %13
    %vm15 = vcmask 458112
    %16 = vst.msk [vmem:[#allocation0] sm:$0x1] %vm15, %v14
    %s17 = scalar_lea.vmem %s0, 5
    %v18 = vld [vmem:[%s17] sm:$0x1]
    %19 = vrot.lane.b32.xlu0 %v18, 40
    %v20 = vpop.permute.xlu0 %19
    %vm21 = vcmask 392512
    %22 = vst.msk [vmem:[#allocation0] sm:$0x1] %vm21, %v20
    %s23 = scalar_lea.vmem %s0, 4
    %v24 = vld [vmem:[%s23] sm:$0x1]
    %25 = vrot.lane.b32.xlu0 %v24, 32
    %v26 = vpop.permute.xlu0 %25
    %vm27 = vcmask 326912
    %28 = vst.msk [vmem:[#allocation0] sm:$0x1] %vm27, %v26
    %s29 = scalar_lea.vmem %s0, 3
    %v30 = vld [vmem:[%s29] sm:$0x1]
    %31 = vrot.lane.b32.xlu0 %v30, 24
    %v32 = vpop.permute.xlu0 %31
    %vm33 = vcmask 261312
    %34 = vst.msk [vmem:[#allocation0] sm:$0x1] %vm33, %v32
    %s35 = scalar_lea.vmem %s0, 2
    %v36 = vld [vmem:[%s35] sm:$0x1]
    %37 = vrot.lane.b32.xlu0 %v36, 16
    %v38 = vpop.permute.xlu0 %37
    %vm39 = vcmask 195712
    %40 = vst.msk [vmem:[#allocation0] sm:$0x1] %vm39, %v38
    %s41 = scalar_lea.vmem %s0, 1
    %v42 = vld [vmem:[%s41] sm:$0x1]
    %43 = vrot.lane.b32.xlu0 %v42, 8
    %v44 = vpop.permute.xlu0 %43
    %vm45 = vcmask 130112
    %46 = vst.msk [vmem:[#allocation0] sm:$0x1] %vm45, %v44
    %s48 = ssub.s32 2, 1
    %v49 = vld [vmem:[#allocation0] sm:%s48]
    %s51 = ssub.s32 2, 1
    %52 = vst [vmem:[%s1] sm:%s51] %v49

// kernel: aggregation_forward.1
$region0: #{aggregation_forward.1}
  #allocation0 [shape = 'u32[]', space=smem, size = 0x4, offset = 0x4, fixed_abs, tag = 'smem constant byte address 0x4 - core index']
  #allocation1 [shape = 'u32[72,128]{1,0:T(1,128)}', space=vmem, size = 0x9000, scoped, tag = 'internal scratch']
  %s0 = inlined_call_operand.vmem [shape: f32[2,4,16], index: 0, kind: input, shape index: {}]
  %s1 = inlined_call_operand.vmem [shape: f32[2,8,32], index: 1, kind: input, shape index: {}]
  %s2 = inlined_call_operand.vmem [shape: f32[2,16,64], index: 2, kind: input, shape index: {}]
  %s3 = inlined_call_operand.vmem [shape: f32[8,4], index: 3, kind: input, shape index: {}]
  %s4 = inlined_call_operand.vmem [shape: f32[16,8], index: 4, kind: input, shape index: {}]
  %s5 = inlined_call_operand.vmem [shape: f32[16,32], index: 5, kind: input, shape index: {}]
  %s6 = inlined_call_operand.vmem [shape: f32[32,64], index: 6, kind: input, shape index: {}]
  %s7 = inlined_call_operand.hbm [shape: f32[64,128], index: 7, kind: input, shape index: {}]
  %s8 = inlined_call_operand.vmem [shape: f32[3,8,8], index: 8, kind: input, shape index: {}]
  %s9 = inlined_call_operand.vmem [shape: f32[3,16,16], index: 9, kind: input, shape index: {}]
  %s10 = inlined_call_operand.hbm [shape: f32[3,32,32], index: 10, kind: input, shape index: {}]
  %s11 = inlined_call_operand.vmem [shape: f32[1,32], index: 11, kind: input, shape index: {}]
  %s12 = inlined_call_operand.hbm [shape: f32[3,32,32], index: 12, kind: input, shape index: {}]
  %s13 = inlined_call_operand.vmem [shape: f32[1,32], index: 13, kind: input, shape index: {}]
  %s14 = inlined_call_operand.vmem [shape: f32[3,64,64], index: 14, kind: input, shape index: {}]
  %s15 = inlined_call_operand.vmem [shape: f32[1,64], index: 15, kind: input, shape index: {}]
  %s16 = inlined_call_operand.vmem [shape: f32[3,64,64], index: 16, kind: input, shape index: {}]
  %s17 = inlined_call_operand.vmem [shape: f32[1,64], index: 17, kind: input, shape index: {}]
  %s18 = inlined_call_operand.vmem [shape: f32[3,32,64], index: 18, kind: input, shape index: {}]
  %s19 = inlined_call_operand.vmem [shape: f32[3,32,64], index: 19, kind: input, shape index: {}]
  %s20 = inlined_call_operand.vmem [shape: f32[1,64], index: 20, kind: input, shape index: {}]
  %s21 = inlined_call_operand.hbm [shape: f32[3,128,128], index: 21, kind: input, shape index: {}]
  %s22 = inlined_call_operand.vmem [shape: f32[1,128], index: 22, kind: input, shape index: {}]
  %s23 = inlined_call_operand.hbm [shape: f32[3,64,192], index: 23, kind: input, shape index: {}]
  %s24 = inlined_call_operand.hbm [shape: f32[3,128,192], index: 24, kind: input, shape index: {}]
  %s25 = inlined_call_operand.vmem [shape: f32[1,192], index: 25, kind: input, shape index: {}]
  %s26 = inlined_call_operand.hbm [shape: f32[3,192,16], index: 26, kind: input, shape index: {}]
  %s27 = inlined_call_operand.vmem [shape: f32[1,16], index: 27, kind: input, shape index: {}]
  %s28 = inlined_call_operand.hbm [shape: f32[2,16,16], index: 28, kind: output, shape index: {}]
  %s29 = sld [smem:[#allocation0]]
  $region173: #{aggregation_forward.1} parent=0
    _
  %s31 = ssub.s32 1, %s29
  %s32 = scalar_select 0, %s31, %s29
  $region1: #{aggregation_forward.1} parent=0
    #allocation2 [shape = 'u8[32768]{0}', space=vmem, size = 0x8000, scoped, tag = 'input window, operand 7, single buffered']
    #allocation3 [shape = 's32[2]{0}', space=sflag, size = 0x8, scoped, tag = 'scoped memory for aggregation_forward.1']
    #allocation4 [shape = 's32[2]{0}', space=sflag, size = 0x8, scoped, tag = 'scoped memory for aggregation_forward.1']
    #allocation5 [shape = 'u8[49152]{0}', space=vmem, size = 0xc000, scoped, tag = 'input window, operand 10, single buffered']
    #allocation6 [shape = 's32[1]{0}', space=sflag, size = 0x4, scoped, tag = 'scoped memory for aggregation_forward.1']
    #allocation7 [shape = 'u8[49152]{0}', space=vmem, size = 0xc000, scoped, tag = 'input window, operand 12, single buffered']
    #allocation8 [shape = 'u8[196608]{0}', space=vmem, size = 0x30000, scoped, tag = 'input window, operand 21, single buffered']
    #allocation9 [shape = 's32[1]{0}', space=sflag, size = 0x4, scoped, tag = 'scoped memory for aggregation_forward.1']
    #allocation10 [shape = 'u8[196608]{0}', space=vmem, size = 0x30000, scoped, tag = 'input window, operand 23, single buffered']
    #allocation11 [shape = 'u8[393216]{0}', space=vmem, size = 0x60000, scoped, tag = 'input window, operand 24, single buffered']
    #allocation12 [shape = 's32[1]{0}', space=sflag, size = 0x4, scoped, tag = 'scoped memory for aggregation_forward.1']
    #allocation13 [shape = 'u8[294912]{0}', space=vmem, size = 0x48000, scoped, tag = 'input window, operand 26, single buffered']
    #allocation14 [shape = 'u8[16384]{0}', space=vmem, size = 0x4000, scoped, tag = 'output window, operand 0']
    %33 = vsyncpa [#allocation3], 0
    %34 = vsyncpa [#allocation6], 0
    %35 = vsyncpa [#allocation9], 0
    %36 = vsyncpa [#allocation12], 0
    %37 = vsyncpa [#allocation4], 0
    %s38 = scalar_lea.sflag [#allocation4], 1
    %39 = vsyncpa %s38, 0
    loop: start=0, step=1, limit=4
    $region2: #{aggregation_forward.1} parent=1 // loop_pre_header
      _
    $region3: #{aggregation_forward.1} parent=1 // loop_header
      %s41 = sphi 0, %s45
      %p42 = scmp.ge.s32.totalorder %s41, 4
      %s51 = sphi 0, %s53
      %s54 = sphi 0, %s51
      %s55 = sphi 0, %s54
      %s71 = sphi 0, %s55
      %s77 = sphi 0, %s79
      %s80 = sphi 0, %s77
      %s81 = sphi 0, %s80
      %s97 = sphi 0, %s81
      %s103 = sphi 0, %s105
      %s106 = sphi 0, %s103
      %s107 = sphi 0, %s106
      %s123 = sphi 0, %s107
      %s127 = sphi 0, %s127
      %s129 = sphi 0, %s127
      %s130 = sphi 0, %s129
      %s144 = sphi 0, %s130
      %s148 = sphi 0, %s148
      %s150 = sphi 0, %s148
      %s151 = sphi 0, %s150
      %s165 = sphi 0, %s151
      %s169 = sphi 0, %s169
      %s171 = sphi 0, %s169
      %s172 = sphi 0, %s171
      %s186 = sphi 0, %s172
      %s190 = sphi 0, %s190
      %s192 = sphi 0, %s190
      %s193 = sphi 0, %s192
      %s207 = sphi 0, %s193
      %s211 = sphi 0, %s211
      %s213 = sphi 0, %s211
      %s214 = sphi 0, %s213
      %s228 = sphi 0, %s214
      %s232 = sphi 0, %s232
      %s234 = sphi 0, %s232
      %s235 = sphi 0, %s234
      %s249 = sphi 0, %s235
      %s253 = sphi 0, %s253
      %s255 = sphi 0, %s253
      %s256 = sphi 0, %s255
      %s270 = sphi 0, %s256
      %s274 = sphi 0, %s274
      %s276 = sphi 0, %s274
      %s277 = sphi 0, %s276
      %s291 = sphi 0, %s277
      %s295 = sphi 0, %s295
      %s297 = sphi 0, %s295
      %s298 = sphi 0, %s297
      %s312 = sphi 0, %s298
      %s316 = sphi 0, %s316
      %s318 = sphi 0, %s316
      %s319 = sphi 0, %s318
      %s333 = sphi 0, %s319
      %s337 = sphi 0, %s337
      %s339 = sphi 0, %s337
      %s340 = sphi 0, %s339
      %s354 = sphi 0, %s340
      %s358 = sphi 0, %s358
      %s360 = sphi 0, %s358
      %s361 = sphi 0, %s360
      %s375 = sphi 0, %s361
      %s379 = sphi 0, %s379
      %s381 = sphi 0, %s379
      %s382 = sphi 0, %s381
      %s396 = sphi 0, %s382
      %s400 = sphi 0, %s400
      %s402 = sphi 0, %s400
      %s403 = sphi 0, %s402
      %s417 = sphi 0, %s403
      %s421 = sphi 0, %s421
      %s423 = sphi 0, %s421
      %s424 = sphi 0, %s423
      %s438 = sphi 0, %s424
      %s442 = sphi 0, %s442
      %s444 = sphi 0, %s442
      %s445 = sphi 0, %s444
      %s459 = sphi 0, %s445
      %s463 = sphi 0, %s463
      %s465 = sphi 0, %s463
      %s466 = sphi 0, %s465
      %s480 = sphi 0, %s466
      %s484 = sphi 0, %s484
      %s486 = sphi 0, %s484
      %s487 = sphi 0, %s486
      %s501 = sphi 0, %s487
      %s505 = sphi 0, %s505
      %s507 = sphi 0, %s505
      %s508 = sphi 0, %s507
      %s522 = sphi 0, %s508
      %s526 = sphi 0, %s526
      %s528 = sphi 0, %s526
      %s529 = sphi 0, %s528
      %s543 = sphi 0, %s529
      %s547 = sphi 0, %s547
      %s549 = sphi 0, %s547
      %s550 = sphi 0, %s549
      %s564 = sphi 0, %s550
      %s568 = sphi 0, %s568
      %s570 = sphi 0, %s568
      %s571 = sphi 0, %s570
      %s585 = sphi 0, %s571
      %s589 = sphi 0, %s589
      %s591 = sphi 0, %s589
      %s592 = sphi 0, %s591
      %s606 = sphi 0, %s592
      %s610 = sphi 0, %s610
      %s612 = sphi 0, %s610
      %s613 = sphi 0, %s612
      %s627 = sphi 0, %s613
      %s631 = sphi 0, %s631
      %s633 = sphi 0, %s631
      %s634 = sphi 0, %s633
      %s648 = sphi 0, %s634
      %s654 = sphi 0, %s656
      %s657 = sphi 0, %s654
      %s658 = sphi 0, %s657
      %s674 = sphi 0, %s658
    $region4: #{aggregation_forward.1} parent=1 // loop_header_branch
      %44 = sbr.rel (%p42) target = $region8
    $region5: #{aggregation_forward.1} parent=1 // loop_body
      %s46 = ssub.s32 %s41, 1
      %s47 = ssub.s32 %s41, 2
      %s48 = sadd.s32 %s41, 1
      %s49 = ssub.s32 %s41, %s48
      %p50 = scmp.eq.s32.totalorder %s49, 0
      %s52 = sadd.s32 %s51, 1
      %s53 = scalar_select %p50, %s51, %s52
      %p56 = pneg %p50
      %p57 = scmp.eq.s32.totalorder %s41, 1
      %p58 = por %p56, %p57
      %p59 = scmp.ne.s32.totalorder %s51, %s54
      %p60 = scmp.eq.s32.totalorder %s41, 0
      %p61 = por %p59, %p60
      %p62 = scmp.ne.s32.totalorder %s51, %s54
      %p63 = scmp.eq.s32.totalorder %s46, 1
      %p64 = por %p62, %p63
      %p65 = scmp.ne.s32.totalorder %s54, %s55
      %p66 = scmp.eq.s32.totalorder %s46, 0
      %p67 = por %p65, %p66
      %p68 = scmp.ne.s32.totalorder %s54, %s55
      %p69 = scmp.eq.s32.totalorder %s47, 1
      %p70 = por %p68, %p69
      %p72 = scmp.ne.s32.totalorder %s55, %s71
      %p73 = scmp.eq.s32.totalorder %s47, 0
      %p74 = por %p72, %p73
      %s75 = ssub.s32 %s41, %s48
      %p76 = scmp.eq.s32.totalorder %s75, 0
      %s78 = sadd.s32 %s77, 1
      %s79 = scalar_select %p76, %s77, %s78
      %p82 = pneg %p76
      %p83 = scmp.eq.s32.totalorder %s41, 1
      %p84 = por %p82, %p83
      %p85 = scmp.ne.s32.totalorder %s77, %s80
      %p86 = scmp.eq.s32.totalorder %s41, 0
      %p87 = por %p85, %p86
      %p88 = scmp.ne.s32.totalorder %s77, %s80
      %p89 = scmp.eq.s32.totalorder %s46, 1
      %p90 = por %p88, %p89
      %p91 = scmp.ne.s32.totalorder %s80, %s81
      %p92 = scmp.eq.s32.totalorder %s46, 0
      %p93 = por %p91, %p92
      %p94 = scmp.ne.s32.totalorder %s80, %s81
      %p95 = scmp.eq.s32.totalorder %s47, 1
      %p96 = por %p94, %p95
      %p98 = scmp.ne.s32.totalorder %s81, %s97
      %p99 = scmp.eq.s32.totalorder %s47, 0
      %p100 = por %p98, %p99
      %s101 = ssub.s32 %s41, %s48
      %p102 = scmp.eq.s32.totalorder %s101, 0
      %s104 = sadd.s32 %s103, 1
      %s105 = scalar_select %p102, %s103, %s104
      %p108 = pneg %p102
      %p109 = scmp.eq.s32.totalorder %s41, 1
      %p110 = por %p108, %p109
      %p111 = scmp.ne.s32.totalorder %s103, %s106
      %p112 = scmp.eq.s32.totalorder %s41, 0
      %p113 = por %p111, %p112
      %p114 = scmp.ne.s32.totalorder %s103, %s106
      %p115 = scmp.eq.s32.totalorder %s46, 1
      %p116 = por %p114, %p115
      %p117 = scmp.ne.s32.totalorder %s106, %s107
      %p118 = scmp.eq.s32.totalorder %s46, 0
      %p119 = por %p117, %p118
      %p120 = scmp.ne.s32.totalorder %s106, %s107
      %p121 = scmp.eq.s32.totalorder %s47, 1
      %p122 = por %p120, %p121
      %p124 = scmp.ne.s32.totalorder %s107, %s123
      %p125 = scmp.eq.s32.totalorder %s47, 0
      %p126 = por %p124, %p125
      %s128 = sadd.s32 %s127, 1
      %p131 = scmp.eq.s32.totalorder %s41, 1
      %p132 = scmp.ne.s32.totalorder %s127, %s129
      %p133 = scmp.eq.s32.totalorder %s41, 0
      %p134 = por %p132, %p133
      %p135 = scmp.ne.s32.totalorder %s127, %s129
      %p136 = scmp.eq.s32.totalorder %s46, 1
      %p137 = por %p135, %p136
      %p138 = scmp.ne.s32.totalorder %s129, %s130
      %p139 = scmp.eq.s32.totalorder %s46, 0
      %p140 = por %p138, %p139
      %p141 = scmp.ne.s32.totalorder %s129, %s130
      %p142 = scmp.eq.s32.totalorder %s47, 1
      %p143 = por %p141, %p142
      %p145 = scmp.ne.s32.totalorder %s130, %s144
      %p146 = scmp.eq.s32.totalorder %s47, 0
      %p147 = por %p145, %p146
      %s149 = sadd.s32 %s148, 1
      %p152 = scmp.eq.s32.totalorder %s41, 1
      %p153 = scmp.ne.s32.totalorder %s148, %s150
      %p154 = scmp.eq.s32.totalorder %s41, 0
      %p155 = por %p153, %p154
      %p156 = scmp.ne.s32.totalorder %s148, %s150
      %p157 = scmp.eq.s32.totalorder %s46, 1
      %p158 = por %p156, %p157
      %p159 = scmp.ne.s32.totalorder %s150, %s151
      %p160 = scmp.eq.s32.totalorder %s46, 0
      %p161 = por %p159, %p160
      %p162 = scmp.ne.s32.totalorder %s150, %s151
      %p163 = scmp.eq.s32.totalorder %s47, 1
      %p164 = por %p162, %p163
      %p166 = scmp.ne.s32.totalorder %s151, %s165
      %p167 = scmp.eq.s32.totalorder %s47, 0
      %p168 = por %p166, %p167
      %s170 = sadd.s32 %s169, 1
      %p173 = scmp.eq.s32.totalorder %s41, 1
      %p174 = scmp.ne.s32.totalorder %s169, %s171
      %p175 = scmp.eq.s32.totalorder %s41, 0
      %p176 = por %p174, %p175
      %p177 = scmp.ne.s32.totalorder %s169, %s171
      %p178 = scmp.eq.s32.totalorder %s46, 1
      %p179 = por %p177, %p178
      %p180 = scmp.ne.s32.totalorder %s171, %s172
      %p181 = scmp.eq.s32.totalorder %s46, 0
      %p182 = por %p180, %p181
      %p183 = scmp.ne.s32.totalorder %s171, %s172
      %p184 = scmp.eq.s32.totalorder %s47, 1
      %p185 = por %p183, %p184
      %p187 = scmp.ne.s32.totalorder %s172, %s186
      %p188 = scmp.eq.s32.totalorder %s47, 0
      %p189 = por %p187, %p188
      %s191 = sadd.s32 %s190, 1
      %p194 = scmp.eq.s32.totalorder %s41, 1
      %p195 = scmp.ne.s32.totalorder %s190, %s192
      %p196 = scmp.eq.s32.totalorder %s41, 0
      %p197 = por %p195, %p196
      %p198 = scmp.ne.s32.totalorder %s190, %s192
      %p199 = scmp.eq.s32.totalorder %s46, 1
      %p200 = por %p198, %p199
      %p201 = scmp.ne.s32.totalorder %s192, %s193
      %p202 = scmp.eq.s32.totalorder %s46, 0
      %p203 = por %p201, %p202
      %p204 = scmp.ne.s32.totalorder %s192, %s193
      %p205 = scmp.eq.s32.totalorder %s47, 1
      %p206 = por %p204, %p205
      %p208 = scmp.ne.s32.totalorder %s193, %s207
      %p209 = scmp.eq.s32.totalorder %s47, 0
      %p210 = por %p208, %p209
      %s212 = sadd.s32 %s211, 1
      %p215 = scmp.eq.s32.totalorder %s41, 1
      %p216 = scmp.ne.s32.totalorder %s211, %s213
      %p217 = scmp.eq.s32.totalorder %s41, 0
      %p218 = por %p216, %p217
      %p219 = scmp.ne.s32.totalorder %s211, %s213
      %p220 = scmp.eq.s32.totalorder %s46, 1
      %p221 = por %p219, %p220
      %p222 = scmp.ne.s32.totalorder %s213, %s214
      %p223 = scmp.eq.s32.totalorder %s46, 0
      %p224 = por %p222, %p223
      %p225 = scmp.ne.s32.totalorder %s213, %s214
      %p226 = scmp.eq.s32.totalorder %s47, 1
      %p227 = por %p225, %p226
      %p229 = scmp.ne.s32.totalorder %s214, %s228
      %p230 = scmp.eq.s32.totalorder %s47, 0
      %p231 = por %p229, %p230
      %s233 = sadd.s32 %s232, 1
      %p236 = scmp.eq.s32.totalorder %s41, 1
      %p237 = scmp.ne.s32.totalorder %s232, %s234
      %p238 = scmp.eq.s32.totalorder %s41, 0
      %p239 = por %p237, %p238
      %p240 = scmp.ne.s32.totalorder %s232, %s234
      %p241 = scmp.eq.s32.totalorder %s46, 1
      %p242 = por %p240, %p241
      %p243 = scmp.ne.s32.totalorder %s234, %s235
      %p244 = scmp.eq.s32.totalorder %s46, 0
      %p245 = por %p243, %p244
      %p246 = scmp.ne.s32.totalorder %s234, %s235
      %p247 = scmp.eq.s32.totalorder %s47, 1
      %p248 = por %p246, %p247
      %p250 = scmp.ne.s32.totalorder %s235, %s249
      %p251 = scmp.eq.s32.totalorder %s47, 0
      %p252 = por %p250, %p251
      %s254 = sadd.s32 %s253, 1
      %p257 = scmp.eq.s32.totalorder %s41, 1
      %p258 = scmp.ne.s32.totalorder %s253, %s255
      %p259 = scmp.eq.s32.totalorder %s41, 0
      %p260 = por %p258, %p259
      %p261 = scmp.ne.s32.totalorder %s253, %s255
      %p262 = scmp.eq.s32.totalorder %s46, 1
      %p263 = por %p261, %p262
      %p264 = scmp.ne.s32.totalorder %s255, %s256
      %p265 = scmp.eq.s32.totalorder %s46, 0
      %p266 = por %p264, %p265
      %p267 = scmp.ne.s32.totalorder %s255, %s256
      %p268 = scmp.eq.s32.totalorder %s47, 1
      %p269 = por %p267, %p268
      %p271 = scmp.ne.s32.totalorder %s256, %s270
      %p272 = scmp.eq.s32.totalorder %s47, 0
      %p273 = por %p271, %p272
      %s275 = sadd.s32 %s274, 1
      %p278 = scmp.eq.s32.totalorder %s41, 1
      %p279 = scmp.ne.s32.totalorder %s274, %s276
      %p280 = scmp.eq.s32.totalorder %s41, 0
      %p281 = por %p279, %p280
      %p282 = scmp.ne.s32.totalorder %s274, %s276
      %p283 = scmp.eq.s32.totalorder %s46, 1
      %p284 = por %p282, %p283
      %p285 = scmp.ne.s32.totalorder %s276, %s277
      %p286 = scmp.eq.s32.totalorder %s46, 0
      %p287 = por %p285, %p286
      %p288 = scmp.ne.s32.totalorder %s276, %s277
      %p289 = scmp.eq.s32.totalorder %s47, 1
      %p290 = por %p288, %p289
      %p292 = scmp.ne.s32.totalorder %s277, %s291
      %p293 = scmp.eq.s32.totalorder %s47, 0
      %p294 = por %p292, %p293
      %s296 = sadd.s32 %s295, 1
      %p299 = scmp.eq.s32.totalorder %s41, 1
      %p300 = scmp.ne.s32.totalorder %s295, %s297
      %p301 = scmp.eq.s32.totalorder %s41, 0
      %p302 = por %p300, %p301
      %p303 = scmp.ne.s32.totalorder %s295, %s297
      %p304 = scmp.eq.s32.totalorder %s46, 1
      %p305 = por %p303, %p304
      %p306 = scmp.ne.s32.totalorder %s297, %s298
      %p307 = scmp.eq.s32.totalorder %s46, 0
      %p308 = por %p306, %p307
      %p309 = scmp.ne.s32.totalorder %s297, %s298
      %p310 = scmp.eq.s32.totalorder %s47, 1
      %p311 = por %p309, %p310
      %p313 = scmp.ne.s32.totalorder %s298, %s312
      %p314 = scmp.eq.s32.totalorder %s47, 0
      %p315 = por %p313, %p314
      %s317 = sadd.s32 %s316, 1
      %p320 = scmp.eq.s32.totalorder %s41, 1
      %p321 = scmp.ne.s32.totalorder %s316, %s318
      %p322 = scmp.eq.s32.totalorder %s41, 0
      %p323 = por %p321, %p322
      %p324 = scmp.ne.s32.totalorder %s316, %s318
      %p325 = scmp.eq.s32.totalorder %s46, 1
      %p326 = por %p324, %p325
      %p327 = scmp.ne.s32.totalorder %s318, %s319
      %p328 = scmp.eq.s32.totalorder %s46, 0
      %p329 = por %p327, %p328
      %p330 = scmp.ne.s32.totalorder %s318, %s319
      %p331 = scmp.eq.s32.totalorder %s47, 1
      %p332 = por %p330, %p331
      %p334 = scmp.ne.s32.totalorder %s319, %s333
      %p335 = scmp.eq.s32.totalorder %s47, 0
      %p336 = por %p334, %p335
      %s338 = sadd.s32 %s337, 1
      %p341 = scmp.eq.s32.totalorder %s41, 1
      %p342 = scmp.ne.s32.totalorder %s337, %s339
      %p343 = scmp.eq.s32.totalorder %s41, 0
      %p344 = por %p342, %p343
      %p345 = scmp.ne.s32.totalorder %s337, %s339
      %p346 = scmp.eq.s32.totalorder %s46, 1
      %p347 = por %p345, %p346
      %p348 = scmp.ne.s32.totalorder %s339, %s340
      %p349 = scmp.eq.s32.totalorder %s46, 0
      %p350 = por %p348, %p349
      %p351 = scmp.ne.s32.totalorder %s339, %s340
      %p352 = scmp.eq.s32.totalorder %s47, 1
      %p353 = por %p351, %p352
      %p355 = scmp.ne.s32.totalorder %s340, %s354
      %p356 = scmp.eq.s32.totalorder %s47, 0
      %p357 = por %p355, %p356
      %s359 = sadd.s32 %s358, 1
      %p362 = scmp.eq.s32.totalorder %s41, 1
      %p363 = scmp.ne.s32.totalorder %s358, %s360
      %p364 = scmp.eq.s32.totalorder %s41, 0
      %p365 = por %p363, %p364
      %p366 = scmp.ne.s32.totalorder %s358, %s360
      %p367 = scmp.eq.s32.totalorder %s46, 1
      %p368 = por %p366, %p367
      %p369 = scmp.ne.s32.totalorder %s360, %s361
      %p370 = scmp.eq.s32.totalorder %s46, 0
      %p371 = por %p369, %p370
      %p372 = scmp.ne.s32.totalorder %s360, %s361
      %p373 = scmp.eq.s32.totalorder %s47, 1
      %p374 = por %p372, %p373
      %p376 = scmp.ne.s32.totalorder %s361, %s375
      %p377 = scmp.eq.s32.totalorder %s47, 0
      %p378 = por %p376, %p377
      %s380 = sadd.s32 %s379, 1
      %p383 = scmp.eq.s32.totalorder %s41, 1
      %p384 = scmp.ne.s32.totalorder %s379, %s381
      %p385 = scmp.eq.s32.totalorder %s41, 0
      %p386 = por %p384, %p385
      %p387 = scmp.ne.s32.totalorder %s379, %s381
      %p388 = scmp.eq.s32.totalorder %s46, 1
      %p389 = por %p387, %p388
      %p390 = scmp.ne.s32.totalorder %s381, %s382
      %p391 = scmp.eq.s32.totalorder %s46, 0
      %p392 = por %p390, %p391
      %p393 = scmp.ne.s32.totalorder %s381, %s382
      %p394 = scmp.eq.s32.totalorder %s47, 1
      %p395 = por %p393, %p394
      %p397 = scmp.ne.s32.totalorder %s382, %s396
      %p398 = scmp.eq.s32.totalorder %s47, 0
      %p399 = por %p397, %p398
      %s401 = sadd.s32 %s400, 1
      %p404 = scmp.eq.s32.totalorder %s41, 1
      %p405 = scmp.ne.s32.totalorder %s400, %s402
      %p406 = scmp.eq.s32.totalorder %s41, 0
      %p407 = por %p405, %p406
      %p408 = scmp.ne.s32.totalorder %s400, %s402
      %p409 = scmp.eq.s32.totalorder %s46, 1
      %p410 = por %p408, %p409
      %p411 = scmp.ne.s32.totalorder %s402, %s403
      %p412 = scmp.eq.s32.totalorder %s46, 0
      %p413 = por %p411, %p412
      %p414 = scmp.ne.s32.totalorder %s402, %s403
      %p415 = scmp.eq.s32.totalorder %s47, 1
      %p416 = por %p414, %p415
      %p418 = scmp.ne.s32.totalorder %s403, %s417
      %p419 = scmp.eq.s32.totalorder %s47, 0
      %p420 = por %p418, %p419
      %s422 = sadd.s32 %s421, 1
      %p425 = scmp.eq.s32.totalorder %s41, 1
      %p426 = scmp.ne.s32.totalorder %s421, %s423
      %p427 = scmp.eq.s32.totalorder %s41, 0
      %p428 = por %p426, %p427
      %p429 = scmp.ne.s32.totalorder %s421, %s423
      %p430 = scmp.eq.s32.totalorder %s46, 1
      %p431 = por %p429, %p430
      %p432 = scmp.ne.s32.totalorder %s423, %s424
      %p433 = scmp.eq.s32.totalorder %s46, 0
      %p434 = por %p432, %p433
      %p435 = scmp.ne.s32.totalorder %s423, %s424
      %p436 = scmp.eq.s32.totalorder %s47, 1
      %p437 = por %p435, %p436
      %p439 = scmp.ne.s32.totalorder %s424, %s438
      %p440 = scmp.eq.s32.totalorder %s47, 0
      %p441 = por %p439, %p440
      %s443 = sadd.s32 %s442, 1
      %p446 = scmp.eq.s32.totalorder %s41, 1
      %p447 = scmp.ne.s32.totalorder %s442, %s444
      %p448 = scmp.eq.s32.totalorder %s41, 0
      %p449 = por %p447, %p448
      %p450 = scmp.ne.s32.totalorder %s442, %s444
      %p451 = scmp.eq.s32.totalorder %s46, 1
      %p452 = por %p450, %p451
      %p453 = scmp.ne.s32.totalorder %s444, %s445
      %p454 = scmp.eq.s32.totalorder %s46, 0
      %p455 = por %p453, %p454
      %p456 = scmp.ne.s32.totalorder %s444, %s445
      %p457 = scmp.eq.s32.totalorder %s47, 1
      %p458 = por %p456, %p457
      %p460 = scmp.ne.s32.totalorder %s445, %s459
      %p461 = scmp.eq.s32.totalorder %s47, 0
      %p462 = por %p460, %p461
      %s464 = sadd.s32 %s463, 1
      %p467 = scmp.eq.s32.totalorder %s41, 1
      %p468 = scmp.ne.s32.totalorder %s463, %s465
      %p469 = scmp.eq.s32.totalorder %s41, 0
      %p470 = por %p468, %p469
      %p471 = scmp.ne.s32.totalorder %s463, %s465
      %p472 = scmp.eq.s32.totalorder %s46, 1
      %p473 = por %p471, %p472
      %p474 = scmp.ne.s32.totalorder %s465, %s466
      %p475 = scmp.eq.s32.totalorder %s46, 0
      %p476 = por %p474, %p475
      %p477 = scmp.ne.s32.totalorder %s465, %s466
      %p478 = scmp.eq.s32.totalorder %s47, 1
      %p479 = por %p477, %p478
      %p481 = scmp.ne.s32.totalorder %s466, %s480
      %p482 = scmp.eq.s32.totalorder %s47, 0
      %p483 = por %p481, %p482
      %s485 = sadd.s32 %s484, 1
      %p488 = scmp.eq.s32.totalorder %s41, 1
      %p489 = scmp.ne.s32.totalorder %s484, %s486
      %p490 = scmp.eq.s32.totalorder %s41, 0
      %p491 = por %p489, %p490
      %p492 = scmp.ne.s32.totalorder %s484, %s486
      %p493 = scmp.eq.s32.totalorder %s46, 1
      %p494 = por %p492, %p493
      %p495 = scmp.ne.s32.totalorder %s486, %s487
      %p496 = scmp.eq.s32.totalorder %s46, 0
      %p497 = por %p495, %p496
      %p498 = scmp.ne.s32.totalorder %s486, %s487
      %p499 = scmp.eq.s32.totalorder %s47, 1
      %p500 = por %p498, %p499
      %p502 = scmp.ne.s32.totalorder %s487, %s501
      %p503 = scmp.eq.s32.totalorder %s47, 0
      %p504 = por %p502, %p503
      %s506 = sadd.s32 %s505, 1
      %p509 = scmp.eq.s32.totalorder %s41, 1
      %p510 = scmp.ne.s32.totalorder %s505, %s507
      %p511 = scmp.eq.s32.totalorder %s41, 0
      %p512 = por %p510, %p511
      %p513 = scmp.ne.s32.totalorder %s505, %s507
      %p514 = scmp.eq.s32.totalorder %s46, 1
      %p515 = por %p513, %p514
      %p516 = scmp.ne.s32.totalorder %s507, %s508
      %p517 = scmp.eq.s32.totalorder %s46, 0
      %p518 = por %p516, %p517
      %p519 = scmp.ne.s32.totalorder %s507, %s508
      %p520 = scmp.eq.s32.totalorder %s47, 1
      %p521 = por %p519, %p520
      %p523 = scmp.ne.s32.totalorder %s508, %s522
      %p524 = scmp.eq.s32.totalorder %s47, 0
      %p525 = por %p523, %p524
      %s527 = sadd.s32 %s526, 1
      %p530 = scmp.eq.s32.totalorder %s41, 1
      %p531 = scmp.ne.s32.totalorder %s526, %s528
      %p532 = scmp.eq.s32.totalorder %s41, 0
      %p533 = por %p531, %p532
      %p534 = scmp.ne.s32.totalorder %s526, %s528
      %p535 = scmp.eq.s32.totalorder %s46, 1
      %p536 = por %p534, %p535
      %p537 = scmp.ne.s32.totalorder %s528, %s529
      %p538 = scmp.eq.s32.totalorder %s46, 0
      %p539 = por %p537, %p538
      %p540 = scmp.ne.s32.totalorder %s528, %s529
      %p541 = scmp.eq.s32.totalorder %s47, 1
      %p542 = por %p540, %p541
      %p544 = scmp.ne.s32.totalorder %s529, %s543
      %p545 = scmp.eq.s32.totalorder %s47, 0
      %p546 = por %p544, %p545
      %s548 = sadd.s32 %s547, 1
      %p551 = scmp.eq.s32.totalorder %s41, 1
      %p552 = scmp.ne.s32.totalorder %s547, %s549
      %p553 = scmp.eq.s32.totalorder %s41, 0
      %p554 = por %p552, %p553
      %p555 = scmp.ne.s32.totalorder %s547, %s549
      %p556 = scmp.eq.s32.totalorder %s46, 1
      %p557 = por %p555, %p556
      %p558 = scmp.ne.s32.totalorder %s549, %s550
      %p559 = scmp.eq.s32.totalorder %s46, 0
      %p560 = por %p558, %p559
      %p561 = scmp.ne.s32.totalorder %s549, %s550
      %p562 = scmp.eq.s32.totalorder %s47, 1
      %p563 = por %p561, %p562
      %p565 = scmp.ne.s32.totalorder %s550, %s564
      %p566 = scmp.eq.s32.totalorder %s47, 0
      %p567 = por %p565, %p566
      %s569 = sadd.s32 %s568, 1
      %p572 = scmp.eq.s32.totalorder %s41, 1
      %p573 = scmp.ne.s32.totalorder %s568, %s570
      %p574 = scmp.eq.s32.totalorder %s41, 0
      %p575 = por %p573, %p574
      %p576 = scmp.ne.s32.totalorder %s568, %s570
      %p577 = scmp.eq.s32.totalorder %s46, 1
      %p578 = por %p576, %p577
      %p579 = scmp.ne.s32.totalorder %s570, %s571
      %p580 = scmp.eq.s32.totalorder %s46, 0
      %p581 = por %p579, %p580
      %p582 = scmp.ne.s32.totalorder %s570, %s571
      %p583 = scmp.eq.s32.totalorder %s47, 1
      %p584 = por %p582, %p583
      %p586 = scmp.ne.s32.totalorder %s571, %s585
      %p587 = scmp.eq.s32.totalorder %s47, 0
      %p588 = por %p586, %p587
      %s590 = sadd.s32 %s589, 1
      %p593 = scmp.eq.s32.totalorder %s41, 1
      %p594 = scmp.ne.s32.totalorder %s589, %s591
      %p595 = scmp.eq.s32.totalorder %s41, 0
      %p596 = por %p594, %p595
      %p597 = scmp.ne.s32.totalorder %s589, %s591
      %p598 = scmp.eq.s32.totalorder %s46, 1
      %p599 = por %p597, %p598
      %p600 = scmp.ne.s32.totalorder %s591, %s592
      %p601 = scmp.eq.s32.totalorder %s46, 0
      %p602 = por %p600, %p601
      %p603 = scmp.ne.s32.totalorder %s591, %s592
      %p604 = scmp.eq.s32.totalorder %s47, 1
      %p605 = por %p603, %p604
      %p607 = scmp.ne.s32.totalorder %s592, %s606
      %p608 = scmp.eq.s32.totalorder %s47, 0
      %p609 = por %p607, %p608
      %s611 = sadd.s32 %s610, 1
      %p614 = scmp.eq.s32.totalorder %s41, 1
      %p615 = scmp.ne.s32.totalorder %s610, %s612
      %p616 = scmp.eq.s32.totalorder %s41, 0
      %p617 = por %p615, %p616
      %p618 = scmp.ne.s32.totalorder %s610, %s612
      %p619 = scmp.eq.s32.totalorder %s46, 1
      %p620 = por %p618, %p619
      %p621 = scmp.ne.s32.totalorder %s612, %s613
      %p622 = scmp.eq.s32.totalorder %s46, 0
      %p623 = por %p621, %p622
      %p624 = scmp.ne.s32.totalorder %s612, %s613
      %p625 = scmp.eq.s32.totalorder %s47, 1
      %p626 = por %p624, %p625
      %p628 = scmp.ne.s32.totalorder %s613, %s627
      %p629 = scmp.eq.s32.totalorder %s47, 0
      %p630 = por %p628, %p629
      %s632 = sadd.s32 %s631, 1
      %p635 = scmp.eq.s32.totalorder %s41, 1
      %p636 = scmp.ne.s32.totalorder %s631, %s633
      %p637 = scmp.eq.s32.totalorder %s41, 0
      %p638 = por %p636, %p637
      %p639 = scmp.ne.s32.totalorder %s631, %s633
      %p640 = scmp.eq.s32.totalorder %s46, 1
      %p641 = por %p639, %p640
      %p642 = scmp.ne.s32.totalorder %s633, %s634
      %p643 = scmp.eq.s32.totalorder %s46, 0
      %p644 = por %p642, %p643
      %p645 = scmp.ne.s32.totalorder %s633, %s634
      %p646 = scmp.eq.s32.totalorder %s47, 1
      %p647 = por %p645, %p646
      %p649 = scmp.ne.s32.totalorder %s634, %s648
      %p650 = scmp.eq.s32.totalorder %s47, 0
      %p651 = por %p649, %p650
      %s652 = ssub.s32 %s41, %s48
      %p653 = scmp.eq.s32.totalorder %s652, 0
      %s655 = sadd.s32 %s654, 1
      %s656 = scalar_select %p653, %s654, %s655
      %p659 = pneg %p653
      %p660 = scmp.eq.s32.totalorder %s41, 1
      %p661 = por %p659, %p660
      %p662 = scmp.ne.s32.totalorder %s654, %s657
      %p663 = scmp.eq.s32.totalorder %s41, 0
      %p664 = por %p662, %p663
      %p665 = scmp.ne.s32.totalorder %s654, %s657
      %p666 = scmp.eq.s32.totalorder %s46, 1
      %p667 = por %p665, %p666
      %p668 = scmp.ne.s32.totalorder %s657, %s658
      %p669 = scmp.eq.s32.totalorder %s46, 0
      %p670 = por %p668, %p669
      %p671 = scmp.ne.s32.totalorder %s657, %s658
      %p672 = scmp.eq.s32.totalorder %s47, 1
      %p673 = por %p671, %p672
      %p675 = scmp.ne.s32.totalorder %s658, %s674
      %p676 = scmp.eq.s32.totalorder %s47, 0
      %p677 = por %p675, %p676
      %p678 = scmp.le.s32.totalorder 1, %s41
      %p679 = scmp.lt.s32.totalorder %s41, 3
      %p680 = pnand %p678, %p679
      %p681 = pneg %p680
      // Predicated region
      $region9: #{aggregation_forward.1} parent=5 // pred_check
        _
      $region10: #{aggregation_forward.1} parent=5 // pred_check_branch
        %683 = sbr.rel (%p680) target = $region12
      $region11: #{aggregation_forward.1} parent=5 // pred_region
        %s684 = ssub.s32 %s41, 1
        // Predicated region
        $region13: #{aggregation_forward.1} parent=11 // pred_check
          %p685 = pneg %p140
        $region14: #{aggregation_forward.1} parent=11 // pred_check_branch
          %687 = sbr.rel (%p685) target = $region16
        $region15: #{aggregation_forward.1} parent=11 // pred_region
          _
        $region16: #{aggregation_forward.1} parent=11 // pred_fallthru
          _
        // Predicated region
        $region17: #{aggregation_forward.1} parent=11 // pred_check
          %p688 = pneg %p161
        $region18: #{aggregation_forward.1} parent=11 // pred_check_branch
          %690 = sbr.rel (%p688) target = $region20
        $region19: #{aggregation_forward.1} parent=11 // pred_region
          _
        $region20: #{aggregation_forward.1} parent=11 // pred_fallthru
          _
        // Predicated region
        $region21: #{aggregation_forward.1} parent=11 // pred_check
          %p691 = pneg %p182
        $region22: #{aggregation_forward.1} parent=11 // pred_check_branch
          %693 = sbr.rel (%p691) target = $region24
        $region23: #{aggregation_forward.1} parent=11 // pred_region
          _
        $region24: #{aggregation_forward.1} parent=11 // pred_fallthru
          _
        // Predicated region
        $region25: #{aggregation_forward.1} parent=11 // pred_check
          %p694 = pneg %p203
        $region26: #{aggregation_forward.1} parent=11 // pred_check_branch
          %696 = sbr.rel (%p694) target = $region28
        $region27: #{aggregation_forward.1} parent=11 // pred_region
          _
        $region28: #{aggregation_forward.1} parent=11 // pred_fallthru
          _
        // Predicated region
        $region29: #{aggregation_forward.1} parent=11 // pred_check
          %p697 = pneg %p224
        $region30: #{aggregation_forward.1} parent=11 // pred_check_branch
          %699 = sbr.rel (%p697) target = $region32
        $region31: #{aggregation_forward.1} parent=11 // pred_region
          %701 = vsyncadd [#allocation3], 0
          %s702 = sshll.u32 %s7, 4
          %s703 = int_to_ptr.hbm [resolvable:$true] %s702
          %s704 = sshll.u32 [#allocation2], 4
          %s705 = int_to_ptr.vmem [resolvable:$true] %s704
          %710 = dma.hbm_to_vmem [thread:$0]  %s703, 1024, %s705, [#allocation3], 128, 128, 8
        $region32: #{aggregation_forward.1} parent=11 // pred_fallthru
          _
        // Predicated region
        $region33: #{aggregation_forward.1} parent=11 // pred_check
          %p711 = pneg %p245
        $region34: #{aggregation_forward.1} parent=11 // pred_check_branch
          %713 = sbr.rel (%p711) target = $region36
        $region35: #{aggregation_forward.1} parent=11 // pred_region
          _
        $region36: #{aggregation_forward.1} parent=11 // pred_fallthru
          _
        // Predicated region
        $region37: #{aggregation_forward.1} parent=11 // pred_check
          %p714 = pneg %p266
        $region38: #{aggregation_forward.1} parent=11 // pred_check_branch
          %716 = sbr.rel (%p714) target = $region40
        $region39: #{aggregation_forward.1} parent=11 // pred_region
          _
        $region40: #{aggregation_forward.1} parent=11 // pred_fallthru
          _
        // Predicated region
        $region41: #{aggregation_forward.1} parent=11 // pred_check
          %p717 = pneg %p287
        $region42: #{aggregation_forward.1} parent=11 // pred_check_branch
          %719 = sbr.rel (%p717) target = $region44
        $region43: #{aggregation_forward.1} parent=11 // pred_region
          %721 = vsyncadd [#allocation6], 0
          %s722 = sshll.u32 %s10, 4
          %s723 = int_to_ptr.hbm [resolvable:$true] %s722
          %s724 = sshll.u32 [#allocation5], 4
          %s725 = int_to_ptr.vmem [resolvable:$true] %s724
          %730 = dma.hbm_to_vmem [thread:$0]  %s723, 1536, %s725, [#allocation6], 128, 128, 8
        $region44: #{aggregation_forward.1} parent=11 // pred_fallthru
          _
        // Predicated region
        $region45: #{aggregation_forward.1} parent=11 // pred_check
          %p731 = pneg %p308
        $region46: #{aggregation_forward.1} parent=11 // pred_check_branch
          %733 = sbr.rel (%p731) target = $region48
        $region47: #{aggregation_forward.1} parent=11 // pred_region
          _
        $region48: #{aggregation_forward.1} parent=11 // pred_fallthru
          _
        // Predicated region
        $region49: #{aggregation_forward.1} parent=11 // pred_check
          %p734 = pneg %p329
        $region50: #{aggregation_forward.1} parent=11 // pred_check_branch
          %736 = sbr.rel (%p734) target = $region52
        $region51: #{aggregation_forward.1} parent=11 // pred_region
          %738 = vsyncadd [#allocation6], 0
          %s739 = sshll.u32 %s12, 4
          %s740 = int_to_ptr.hbm [resolvable:$true] %s739
          %s741 = sshll.u32 [#allocation7], 4
          %s742 = int_to_ptr.vmem [resolvable:$true] %s741
          %747 = dma.hbm_to_vmem [thread:$0]  %s740, 1536, %s742, [#allocation6], 128, 128, 8
        $region52: #{aggregation_forward.1} parent=11 // pred_fallthru
          _
        // Predicated region
        $region53: #{aggregation_forward.1} parent=11 // pred_check
          %p748 = pneg %p350
        $region54: #{aggregation_forward.1} parent=11 // pred_check_branch
          %750 = sbr.rel (%p748) target = $region56
        $region55: #{aggregation_forward.1} parent=11 // pred_region
          _
        $region56: #{aggregation_forward.1} parent=11 // pred_fallthru
          _
        // Predicated region
        $region57: #{aggregation_forward.1} parent=11 // pred_check
          %p751 = pneg %p371
        $region58: #{aggregation_forward.1} parent=11 // pred_check_branch
          %753 = sbr.rel (%p751) target = $region60
        $region59: #{aggregation_forward.1} parent=11 // pred_region
          _
        $region60: #{aggregation_forward.1} parent=11 // pred_fallthru
          _
        // Predicated region
        $region61: #{aggregation_forward.1} parent=11 // pred_check
          %p754 = pneg %p392
        $region62: #{aggregation_forward.1} parent=11 // pred_check_branch
          %756 = sbr.rel (%p754) target = $region64
        $region63: #{aggregation_forward.1} parent=11 // pred_region
          _
        $region64: #{aggregation_forward.1} parent=11 // pred_fallthru
          _
        // Predicated region
        $region65: #{aggregation_forward.1} parent=11 // pred_check
          %p757 = pneg %p413
        $region66: #{aggregation_forward.1} parent=11 // pred_check_branch
          %759 = sbr.rel (%p757) target = $region68
        $region67: #{aggregation_forward.1} parent=11 // pred_region
          _
        $region68: #{aggregation_forward.1} parent=11 // pred_fallthru
          _
        // Predicated region
        $region69: #{aggregation_forward.1} parent=11 // pred_check
          %p760 = pneg %p434
        $region70: #{aggregation_forward.1} parent=11 // pred_check_branch
          %762 = sbr.rel (%p760) target = $region72
        $region71: #{aggregation_forward.1} parent=11 // pred_region
          _
        $region72: #{aggregation_forward.1} parent=11 // pred_fallthru
          _
        // Predicated region
        $region73: #{aggregation_forward.1} parent=11 // pred_check
          %p763 = pneg %p455
        $region74: #{aggregation_forward.1} parent=11 // pred_check_branch
          %765 = sbr.rel (%p763) target = $region76
        $region75: #{aggregation_forward.1} parent=11 // pred_region
          _
        $region76: #{aggregation_forward.1} parent=11 // pred_fallthru
          _
        // Predicated region
        $region77: #{aggregation_forward.1} parent=11 // pred_check
          %p766 = pneg %p476
        $region78: #{aggregation_forward.1} parent=11 // pred_check_branch
          %768 = sbr.rel (%p766) target = $region80
        $region79: #{aggregation_forward.1} parent=11 // pred_region
          _
        $region80: #{aggregation_forward.1} parent=11 // pred_fallthru
          _
        // Predicated region
        $region81: #{aggregation_forward.1} parent=11 // pred_check
          %p769 = pneg %p497
        $region82: #{aggregation_forward.1} parent=11 // pred_check_branch
          %771 = sbr.rel (%p769) target = $region84
        $region83: #{aggregation_forward.1} parent=11 // pred_region
          _
        $region84: #{aggregation_forward.1} parent=11 // pred_fallthru
          _
        // Predicated region
        $region85: #{aggregation_forward.1} parent=11 // pred_check
          %p772 = pneg %p518
        $region86: #{aggregation_forward.1} parent=11 // pred_check_branch
          %774 = sbr.rel (%p772) target = $region88
        $region87: #{aggregation_forward.1} parent=11 // pred_region
          %776 = vsyncadd [#allocation9], 0
          %s777 = sshll.u32 %s21, 4
          %s778 = int_to_ptr.hbm [resolvable:$true] %s777
          %s779 = sshll.u32 [#allocation8], 4
          %s780 = int_to_ptr.vmem [resolvable:$true] %s779
          %785 = dma.hbm_to_vmem [thread:$0]  %s778, 6144, %s780, [#allocation9], 128, 128, 8
        $region88: #{aggregation_forward.1} parent=11 // pred_fallthru
          _
        // Predicated region
        $region89: #{aggregation_forward.1} parent=11 // pred_check
          %p786 = pneg %p539
        $region90: #{aggregation_forward.1} parent=11 // pred_check_branch
          %788 = sbr.rel (%p786) target = $region92
        $region91: #{aggregation_forward.1} parent=11 // pred_region
          _
        $region92: #{aggregation_forward.1} parent=11 // pred_fallthru
          _
        // Predicated region
        $region93: #{aggregation_forward.1} parent=11 // pred_check
          %p789 = pneg %p560
        $region94: #{aggregation_forward.1} parent=11 // pred_check_branch
          %791 = sbr.rel (%p789) target = $region96
        $region95: #{aggregation_forward.1} parent=11 // pred_region
          %793 = vsyncadd [#allocation9], 0
          %s794 = sshll.u32 %s23, 4
          %s795 = int_to_ptr.hbm [resolvable:$true] %s794
          %s796 = sshll.u32 [#allocation10], 4
          %s797 = int_to_ptr.vmem [resolvable:$true] %s796
          %802 = dma.hbm_to_vmem [thread:$0]  %s795, 6144, %s797, [#allocation9], 256, 256, 16
        $region96: #{aggregation_forward.1} parent=11 // pred_fallthru
          _
        // Predicated region
        $region97: #{aggregation_forward.1} parent=11 // pred_check
          %p803 = pneg %p581
        $region98: #{aggregation_forward.1} parent=11 // pred_check_branch
          %805 = sbr.rel (%p803) target = $region100
        $region99: #{aggregation_forward.1} parent=11 // pred_region
          %807 = vsyncadd [#allocation12], 0
          %s808 = sshll.u32 %s24, 4
          %s809 = int_to_ptr.hbm [resolvable:$true] %s808
          %s810 = sshll.u32 [#allocation11], 4
          %s811 = int_to_ptr.vmem [resolvable:$true] %s810
          %816 = dma.hbm_to_vmem [thread:$0]  %s809, 12288, %s811, [#allocation12], 256, 256, 16
        $region100: #{aggregation_forward.1} parent=11 // pred_fallthru
          _
        // Predicated region
        $region101: #{aggregation_forward.1} parent=11 // pred_check
          %p817 = pneg %p602
        $region102: #{aggregation_forward.1} parent=11 // pred_check_branch
          %819 = sbr.rel (%p817) target = $region104
        $region103: #{aggregation_forward.1} parent=11 // pred_region
          _
        $region104: #{aggregation_forward.1} parent=11 // pred_fallthru
          _
        // Predicated region
        $region105: #{aggregation_forward.1} parent=11 // pred_check
          %p820 = pneg %p623
        $region106: #{aggregation_forward.1} parent=11 // pred_check_branch
          %822 = sbr.rel (%p820) target = $region108
        $region107: #{aggregation_forward.1} parent=11 // pred_region
          %824 = vsyncadd [#allocation12], 0
          %s825 = sshll.u32 %s26, 4
          %s826 = int_to_ptr.hbm [resolvable:$true] %s825
          %s827 = sshll.u32 [#allocation13], 4
          %s828 = int_to_ptr.vmem [resolvable:$true] %s827
          %833 = dma.hbm_to_vmem [thread:$0]  %s826, 9216, %s828, [#allocation12], 128, 128, 8
        $region108: #{aggregation_forward.1} parent=11 // pred_fallthru
          _
        // Predicated region
        $region109: #{aggregation_forward.1} parent=11 // pred_check
          %p834 = pneg %p644
        $region110: #{aggregation_forward.1} parent=11 // pred_check_branch
          %836 = sbr.rel (%p834) target = $region112
        $region111: #{aggregation_forward.1} parent=11 // pred_region
          _
        $region112: #{aggregation_forward.1} parent=11 // pred_fallthru
          _
      $region12: #{aggregation_forward.1} parent=5 // pred_fallthru
        _
      %p837 = scmp.lt.s32.totalorder %s41, 2
      // Predicated region
      $region113: #{aggregation_forward.1} parent=5 // pred_check
        %p838 = pneg %p837
      $region114: #{aggregation_forward.1} parent=5 // pred_check_branch
        %840 = sbr.rel (%p838) target = $region116
      $region115: #{aggregation_forward.1} parent=5 // pred_region
        // Predicated region
        $region117: #{aggregation_forward.1} parent=115 // pred_check
          %p841 = pneg %p61
        $region118: #{aggregation_forward.1} parent=115 // pred_check_branch
          %843 = sbr.rel (%p841) target = $region120
        $region119: #{aggregation_forward.1} parent=115 // pred_region
          %p844 = scmp.lt.s32.totalorder %s41, 1
          %s845 = scalar_select %p844, %s41, 1
          %s846 = smul.addr %s845, 4
          %s847 = scalar_lea.vmem %s0, %s846
        $region120: #{aggregation_forward.1} parent=115 // pred_fallthru
          _
        // Predicated region
        $region121: #{aggregation_forward.1} parent=115 // pred_check
          %p848 = pneg %p87
        $region122: #{aggregation_forward.1} parent=115 // pred_check_branch
          %850 = sbr.rel (%p848) target = $region124
        $region123: #{aggregation_forward.1} parent=115 // pred_region
          %p851 = scmp.lt.s32.totalorder %s41, 1
          %s852 = scalar_select %p851, %s41, 1
          %s853 = smul.addr %s852, 8
          %s854 = scalar_lea.vmem %s1, %s853
        $region124: #{aggregation_forward.1} parent=115 // pred_fallthru
          _
        // Predicated region
        $region125: #{aggregation_forward.1} parent=115 // pred_check
          %p855 = pneg %p113
        $region126: #{aggregation_forward.1} parent=115 // pred_check_branch
          %857 = sbr.rel (%p855) target = $region128
        $region127: #{aggregation_forward.1} parent=115 // pred_region
          %p858 = scmp.lt.s32.totalorder %s41, 1
          %s859 = scalar_select %p858, %s41, 1
          %s860 = smul.addr %s859, 2
          %s861 = smul.addr %s860, 8
          %s862 = scalar_lea.vmem %s2, %s861
        $region128: #{aggregation_forward.1} parent=115 // pred_fallthru
          _
      $region116: #{aggregation_forward.1} parent=5 // pred_fallthru
        _
      %p863 = scmp.le.s32.totalorder 1, %s41
      %p864 = scmp.lt.s32.totalorder %s41, 3
      %p865 = pnand %p863, %p864
      %p866 = pneg %p865
      // Predicated region
      $region129: #{aggregation_forward.1} parent=5 // pred_check
        _
      $region130: #{aggregation_forward.1} parent=5 // pred_check_branch
        %868 = sbr.rel (%p865) target = $region132
      $region131: #{aggregation_forward.1} parent=5 // pred_region
        %s869 = ssub.s32 %s41, 1
        // Predicated region
        $region133: #{aggregation_forward.1} parent=131 // pred_check
          %p870 = pneg %p224
        $region134: #{aggregation_forward.1} parent=131 // pred_check_branch
          %872 = sbr.rel (%p870) target = $region136
        $region135: #{aggregation_forward.1} parent=131 // pred_region
          %874 = dma.done [#allocation3], 1024
        $region136: #{aggregation_forward.1} parent=131 // pred_fallthru
          _
        // Predicated region
        $region137: #{aggregation_forward.1} parent=131 // pred_check
          %p875 = pneg %p287
        $region138: #{aggregation_forward.1} parent=131 // pred_check_branch
          %877 = sbr.rel (%p875) target = $region140
        $region139: #{aggregation_forward.1} parent=131 // pred_region
          %879 = dma.done [#allocation6], 1536
        $region140: #{aggregation_forward.1} parent=131 // pred_fallthru
          _
        // Predicated region
        $region141: #{aggregation_forward.1} parent=131 // pred_check
          %p880 = pneg %p329
        $region142: #{aggregation_forward.1} parent=131 // pred_check_branch
          %882 = sbr.rel (%p880) target = $region144
        $region143: #{aggregation_forward.1} parent=131 // pred_region
          %884 = dma.done [#allocation6], 1536
        $region144: #{aggregation_forward.1} parent=131 // pred_fallthru
          _
        // Predicated region
        $region145: #{aggregation_forward.1} parent=131 // pred_check
          %p885 = pneg %p518
        $region146: #{aggregation_forward.1} parent=131 // pred_check_branch
          %887 = sbr.rel (%p885) target = $region148
        $region147: #{aggregation_forward.1} parent=131 // pred_region
          %889 = dma.done [#allocation9], 6144
        $region148: #{aggregation_forward.1} parent=131 // pred_fallthru
          _
        // Predicated region
        $region149: #{aggregation_forward.1} parent=131 // pred_check
          %p890 = pneg %p560
        $region150: #{aggregation_forward.1} parent=131 // pred_check_branch
          %892 = sbr.rel (%p890) target = $region152
        $region151: #{aggregation_forward.1} parent=131 // pred_region
          %894 = dma.done [#allocation9], 6144
        $region152: #{aggregation_forward.1} parent=131 // pred_fallthru
          _
        // Predicated region
        $region153: #{aggregation_forward.1} parent=131 // pred_check
          %p895 = pneg %p581
        $region154: #{aggregation_forward.1} parent=131 // pred_check_branch
          %897 = sbr.rel (%p895) target = $region156
        $region155: #{aggregation_forward.1} parent=131 // pred_region
          %899 = dma.done [#allocation12], 12288
        $region156: #{aggregation_forward.1} parent=131 // pred_fallthru
          _
        // Predicated region
        $region157: #{aggregation_forward.1} parent=131 // pred_check
          %p900 = pneg %p623
        $region158: #{aggregation_forward.1} parent=131 // pred_check_branch
          %902 = sbr.rel (%p900) target = $region160
        $region159: #{aggregation_forward.1} parent=131 // pred_region
          %904 = dma.done [#allocation12], 9216
        $region160: #{aggregation_forward.1} parent=131 // pred_fallthru
          _
        %p905 = scmp.lt.s32.totalorder %s46, 1
        %s906 = scalar_select %p905, %s46, 1
        %s907 = smul.addr %s906, 4
        %s908 = scalar_lea.vmem %s0, %s907
        %p909 = pneg %p67
        %p910 = pneg %p64
        %p911 = scmp.lt.s32.totalorder %s46, 1
        %s912 = scalar_select %p911, %s46, 1
        %s913 = smul.addr %s912, 8
        %s914 = scalar_lea.vmem %s1, %s913
        %p915 = pneg %p93
        %p916 = pneg %p90
        %p917 = scmp.lt.s32.totalorder %s46, 1
        %s918 = scalar_select %p917, %s46, 1
        %s919 = smul.addr %s918, 2
        %s920 = smul.addr %s919, 8
        %s921 = scalar_lea.vmem %s2, %s920
        %p922 = pneg %p119
        %p923 = pneg %p116
        %p924 = pneg %p140
        %p925 = pneg %p137
        %p926 = pneg %p161
        %p927 = pneg %p158
        %p928 = pneg %p182
        %p929 = pneg %p179
        %p930 = pneg %p203
        %p931 = pneg %p200
        %p932 = pneg %p224
        %p933 = pneg %p221
        %p934 = pneg %p245
        %p935 = pneg %p242
        %p936 = pneg %p266
        %p937 = pneg %p263
        %p938 = pneg %p287
        %p939 = pneg %p284
        %p940 = pneg %p308
        %p941 = pneg %p305
        %p942 = pneg %p329
        %p943 = pneg %p326
        %p944 = pneg %p350
        %p945 = pneg %p347
        %p946 = pneg %p371
        %p947 = pneg %p368
        %p948 = pneg %p392
        %p949 = pneg %p389
        %p950 = pneg %p413
        %p951 = pneg %p410
        %p952 = pneg %p434
        %p953 = pneg %p431
        %p954 = pneg %p455
        %p955 = pneg %p452
        %p956 = pneg %p476
        %p957 = pneg %p473
        %p958 = pneg %p497
        %p959 = pneg %p494
        %p960 = pneg %p518
        %p961 = pneg %p515
        %p962 = pneg %p539
        %p963 = pneg %p536
        %p964 = pneg %p560
        %p965 = pneg %p557
        %p966 = pneg %p581
        %p967 = pneg %p578
        %p968 = pneg %p602
        %p969 = pneg %p599
        %p970 = pneg %p623
        %p971 = pneg %p620
        %p972 = pneg %p644
        %p973 = pneg %p641
        %p974 = pneg %p670
        %p975 = pneg %p667
        %s976 = sand.u32 %s657, 1
        %s977 = scalar_lea.sflag [#allocation4], %s976
        %s978 = sand.u32 %s657, 1
        %s979 = smul.addr %s978, 16
        %s980 = scalar_lea.vmem [#allocation14], %s979
        %p981 = scmp.lt.s32.totalorder %s46, 1
        %s982 = scalar_select %p981, %s46, 1
        %s983 = smul.addr %s982, 4
        %s984 = scalar_lea.vmem %s0, %s983
        %p985 = scmp.lt.s32.totalorder %s46, 1
        %s986 = scalar_select %p985, %s46, 1
        %s987 = smul.addr %s986, 8
        %s988 = scalar_lea.vmem %s1, %s987
        %p989 = scmp.lt.s32.totalorder %s46, 1
        %s990 = scalar_select %p989, %s46, 1
        %s991 = smul.addr %s990, 2
        %s992 = smul.addr %s991, 8
        %s993 = scalar_lea.vmem %s2, %s992
        %v994 = vld [vmem:[%s984] sm:$0xf]
        %v995 = vld [vmem:[%s988] sm:$0xff]
        %v996 = vld [vmem:[%s993] sm:$0xff]
        %v997 = vld [vmem:[%s993 + $0x8] sm:$0xff]
        %v998 = vld [vmem:[%s3] sm:$0xff]
        %v999 = vld [vmem:[%s4] sm:$0xff]
        %v1000 = vld [vmem:[%s4 + $0x8] sm:$0xff]
        %v1001 = vld [vmem:[%s5] sm:$0xff]
        %v1002 = vld [vmem:[%s5 + $0x8] sm:$0xff]
        %v1003 = vld [vmem:[%s6] sm:$0xff]
        %v1004 = vld [vmem:[%s6 + $0x8] sm:$0xff]
        %v1005 = vld [vmem:[%s6 + $0x10] sm:$0xff]
        %v1006 = vld [vmem:[%s6 + $0x18] sm:$0xff]
        %v1007 = vld [vmem:[#allocation2] sm:$0xff]
        %v1008 = vld [vmem:[#allocation2 + $0x8] sm:$0xff]
        %v1009 = vld [vmem:[#allocation2 + $0x10] sm:$0xff]
        %v1010 = vld [vmem:[#allocation2 + $0x18] sm:$0xff]
        %v1011 = vld [vmem:[#allocation2 + $0x20] sm:$0xff]
        %v1012 = vld [vmem:[#allocation2 + $0x28] sm:$0xff]
        %v1013 = vld [vmem:[#allocation2 + $0x30] sm:$0xff]
        %v1014 = vld [vmem:[#allocation2 + $0x38] sm:$0xff]
        %vm1015 = vcmask 31744
        %v1017 = vsel %vm1015, %v998, 0
        %vm1019 = vcmask 1043456
        %v1021 = vsel %vm1019, %v994, 0
        %1023 = vmatpush.msra.mxu0 0.0
        %1024 = vmatpush.msra.mxu0 0.0
        %1025 = vmatpush.msra.mxu0 0.0
        %1026 = vmatpush.msra.mxu0 0.0
        %1027 = vmatpush.msra.mxu0 0.0
        %1028 = vmatpush.msra.mxu0 0.0
        %1029 = vmatpush.msra.mxu0 0.0
        %1030 = vmatpush.msra.mxu0 0.0
        %1031 = vmatpush.msra.mxu0 0.0
        %1032 = vmatpush.msra.mxu0 0.0
        %1033 = vmatpush.msra.mxu0 0.0
        %1034 = vmatpush.msra.mxu0 0.0
        %1035 = vmatpush.msra.mxu0 0.0
        %1036 = vmatpush.msra.mxu0 0.0
        %1037 = vmatpush.msra.mxu0 0.0
        %1038 = vmatpush.msra.mxu0 %v1021
        %1039 = vmatmul.f32.gmra.mxu0 %v1017
        %v1040 = vpop.f32.mrf.mxu0
        %v1041 = vadd.f32 0.0, %v1040
        %1042 = vdwg.mxu0
        %vm1043 = vcmask 130048
        %v1045 = vsel %vm1043, %v1041, 0
        %1047 = vmatpush.msra.mxu0 0.0
        %1048 = vmatpush.msra.mxu0 0.0
        %1049 = vmatpush.msra.mxu0 0.0
        %1050 = vmatpush.msra.mxu0 0.0
        %1051 = vmatpush.msra.mxu0 0.0
        %1052 = vmatpush.msra.mxu0 0.0
        %1053 = vmatpush.msra.mxu0 0.0
        %1054 = vmatpush.msra.mxu0 0.0
        %1055 = vmatpush.msra.mxu0 0.0
        %1056 = vmatpush.msra.mxu0 0.0
        %1057 = vmatpush.msra.mxu0 0.0
        %1058 = vmatpush.msra.mxu0 0.0
        %1059 = vmatpush.msra.mxu0 0.0
        %1060 = vmatpush.msra.mxu0 0.0
        %1061 = vmatpush.msra.mxu0 %v1002
        %1062 = vmatpush.msra.mxu0 %v1001
        %1063 = vmatmul.f32.gmra.mxu0 %v1045
        %v1064 = vpop.f32.mrf.mxu0
        %v1065 = vadd.f32 0.0, %v1064
        %1066 = vdwg.mxu0
        %vm1067 = vcmask 64512
        %v1069 = vsel %vm1067, %v999, 0
        %v1072 = vsel %vm1067, %v1000, 0
        %1074 = vmatpush.msra.mxu0 0.0
        %1075 = vmatpush.msra.mxu0 0.0
        %1076 = vmatpush.msra.mxu0 0.0
        %1077 = vmatpush.msra.mxu0 0.0
        %1078 = vmatpush.msra.mxu0 0.0
        %1079 = vmatpush.msra.mxu0 0.0
        %1080 = vmatpush.msra.mxu0 0.0
        %1081 = vmatpush.msra.mxu0 0.0
        %1082 = vmatpush.msra.mxu0 0.0
        %1083 = vmatpush.msra.mxu0 0.0
        %1084 = vmatpush.msra.mxu0 0.0
        %1085 = vmatpush.msra.mxu0 0.0
        %1086 = vmatpush.msra.mxu0 0.0
        %1087 = vmatpush.msra.mxu0 0.0
        %1088 = vmatpush.msra.mxu0 0.0
        %1089 = vmatpush.msra.mxu0 %v1065
        %1090 = vmatmul.f32.gmra.mxu0 %v1069
        %v1091 = vpop.f32.mrf.mxu0
        %v1092 = vadd.f32 0.0, %v1091
        %1093 = vmatmul.f32.gmra.mxu0 %v1072
        %v1094 = vpop.f32.mrf.mxu0
        %v1095 = vadd.f32 0.0, %v1094
        %1096 = vdwg.mxu0
        %vm1097 = vcmask 261120
        %v1099 = vsel %vm1097, %v1092, 0
        %v1102 = vsel %vm1097, %v1095, 0
        %1104 = vmatpush.msra.mxu0 0.0
        %1105 = vmatpush.msra.mxu0 0.0
        %1106 = vmatpush.msra.mxu0 0.0
        %1107 = vmatpush.msra.mxu0 0.0
        %1108 = vmatpush.msra.mxu0 0.0
        %1109 = vmatpush.msra.mxu0 0.0
        %1110 = vmatpush.msra.mxu0 0.0
        %1111 = vmatpush.msra.mxu0 0.0
        %1112 = vmatpush.msra.mxu0 0.0
        %1113 = vmatpush.msra.mxu0 0.0
        %1114 = vmatpush.msra.mxu0 0.0
        %1115 = vmatpush.msra.mxu0 0.0
        %1116 = vmatpush.msra.mxu0 %v1006
        %1117 = vmatpush.msra.mxu0 %v1005
        %1118 = vmatpush.msra.mxu0 %v1004
        %1119 = vmatpush.msra.mxu0 %v1003
        %1120 = vmatmul.f32.gmra.mxu0 %v1099
        %v1121 = vpop.f32.mrf.mxu0
        %v1122 = vadd.f32 0.0, %v1121
        %1123 = vmatmul.f32.gmra.mxu0 %v1102
        %v1124 = vpop.f32.mrf.mxu0
        %v1125 = vadd.f32 0.0, %v1124
        %1126 = vdwg.mxu0
        %1127 = vmatpush.msra.mxu0 0.0
        %1128 = vmatpush.msra.mxu0 0.0
        %1129 = vmatpush.msra.mxu0 0.0
        %1130 = vmatpush.msra.mxu0 0.0
        %1131 = vmatpush.msra.mxu0 0.0
        %1132 = vmatpush.msra.mxu0 0.0
        %1133 = vmatpush.msra.mxu0 0.0
        %1134 = vmatpush.msra.mxu0 0.0
        %1135 = vmatpush.msra.mxu0 0.0
        %1136 = vmatpush.msra.mxu0 0.0
        %1137 = vmatpush.msra.mxu0 0.0
        %1138 = vmatpush.msra.mxu0 0.0
        %1139 = vmatpush.msra.mxu0 0.0
        %1140 = vmatpush.msra.mxu0 0.0
        %1141 = vmatpush.msra.mxu0 0.0
        %1142 = vmatpush.msra.mxu0 %v995
        %1143 = vmatmul.f32.gmra.mxu0 %v1069
        %v1144 = vpop.f32.mrf.mxu0
        %v1145 = vadd.f32 0.0, %v1144
        %1146 = vmatmul.f32.gmra.mxu0 %v1072
        %v1147 = vpop.f32.mrf.mxu0
        %v1148 = vadd.f32 0.0, %v1147
        %1149 = vdwg.mxu0
        %v1151 = vsel %vm1097, %v1145, 0
        %v1154 = vsel %vm1097, %v1148, 0
        %1156 = vmatpush.msra.mxu0 0.0
        %1157 = vmatpush.msra.mxu0 0.0
        %1158 = vmatpush.msra.mxu0 0.0
        %1159 = vmatpush.msra.mxu0 0.0
        %1160 = vmatpush.msra.mxu0 0.0
        %1161 = vmatpush.msra.mxu0 0.0
        %1162 = vmatpush.msra.mxu0 0.0
        %1163 = vmatpush.msra.mxu0 0.0
        %1164 = vmatpush.msra.mxu0 0.0
        %1165 = vmatpush.msra.mxu0 0.0
        %1166 = vmatpush.msra.mxu0 0.0
        %1167 = vmatpush.msra.mxu0 0.0
        %1168 = vmatpush.msra.mxu0 %v1006
        %1169 = vmatpush.msra.mxu0 %v1005
        %1170 = vmatpush.msra.mxu0 %v1004
        %1171 = vmatpush.msra.mxu0 %v1003
        %1172 = vmatmul.f32.gmra.mxu0 %v1151
        %v1173 = vpop.f32.mrf.mxu0
        %v1174 = vadd.f32 0.0, %v1173
        %1175 = vmatmul.f32.gmra.mxu0 %v1154
        %v1176 = vpop.f32.mrf.mxu0
        %v1177 = vadd.f32 0.0, %v1176
        %1178 = vdwg.mxu0
        %v1179 = vld [vmem:[%s11] sm:$0x1]
        %s1180 = scalar_lea.vmem [#allocation5], 32
        %v1181 = vld [vmem:[%s1180] sm:$0xff]
        %v1182 = vld [vmem:[%s1180 + $0x8] sm:$0xff]
        %v1183 = vld [vmem:[%s1180 + $0x10] sm:$0xff]
        %v1184 = vld [vmem:[%s1180 + $0x18] sm:$0xff]
        %v1185 = vld [vmem:[%s8] sm:$0xff]
        %v1186 = vld [vmem:[#allocation5] sm:$0xff]
        %v1187 = vld [vmem:[#allocation5 + $0x8] sm:$0xff]
        %v1188 = vld [vmem:[#allocation5 + $0x10] sm:$0xff]
        %v1189 = vld [vmem:[#allocation5 + $0x18] sm:$0xff]
        %v1191 = vsel %vm1097, %v1065, 0
        %1193 = vmatpush.msra.mxu0 0.0
        %1194 = vmatpush.msra.mxu0 0.0
        %1195 = vmatpush.msra.mxu0 0.0
        %1196 = vmatpush.msra.mxu0 0.0
        %1197 = vmatpush.msra.mxu0 0.0
        %1198 = vmatpush.msra.mxu0 0.0
        %1199 = vmatpush.msra.mxu0 0.0
        %1200 = vmatpush.msra.mxu0 0.0
        %1201 = vmatpush.msra.mxu0 0.0
        %1202 = vmatpush.msra.mxu0 0.0
        %1203 = vmatpush.msra.mxu0 0.0
        %1204 = vmatpush.msra.mxu0 0.0
        %1205 = vmatpush.msra.mxu0 %v1189
        %1206 = vmatpush.msra.mxu0 %v1188
        %1207 = vmatpush.msra.mxu0 %v1187
        %1208 = vmatpush.msra.mxu0 %v1186
        %1209 = vmatmul.f32.gmra.mxu0 %v1191
        %v1210 = vpop.f32.mrf.mxu0
        %v1211 = vadd.f32 0.0, %v1210
        %1212 = vdwg.mxu0
        %v1214 = vsel %vm1067, %v1185, 0
        %1216 = vmatpush.msra.mxu0 0.0
        %1217 = vmatpush.msra.mxu0 0.0
        %1218 = vmatpush.msra.mxu0 0.0
        %1219 = vmatpush.msra.mxu0 0.0
        %1220 = vmatpush.msra.mxu0 0.0
        %1221 = vmatpush.msra.mxu0 0.0
        %1222 = vmatpush.msra.mxu0 0.0
        %1223 = vmatpush.msra.mxu0 0.0
        %1224 = vmatpush.msra.mxu0 0.0
        %1225 = vmatpush.msra.mxu0 0.0
        %1226 = vmatpush.msra.mxu0 0.0
        %1227 = vmatpush.msra.mxu0 0.0
        %1228 = vmatpush.msra.mxu0 0.0
        %1229 = vmatpush.msra.mxu0 0.0
        %1230 = vmatpush.msra.mxu0 0.0
        %1231 = vmatpush.msra.mxu0 %v1211
        %1232 = vmatmul.f32.gmra.mxu0 %v1214
        %v1233 = vpop.f32.mrf.mxu0
        %v1234 = vadd.f32 0.0, %v1233
        %1235 = vdwg.mxu0
        %1236 = vmatpush.msra.mxu0 0.0
        %1237 = vmatpush.msra.mxu0 0.0
        %1238 = vmatpush.msra.mxu0 0.0
        %1239 = vmatpush.msra.mxu0 0.0
        %1240 = vmatpush.msra.mxu0 0.0
        %1241 = vmatpush.msra.mxu0 0.0
        %1242 = vmatpush.msra.mxu0 0.0
        %1243 = vmatpush.msra.mxu0 0.0
        %1244 = vmatpush.msra.mxu0 0.0
        %1245 = vmatpush.msra.mxu0 0.0
        %1246 = vmatpush.msra.mxu0 0.0
        %1247 = vmatpush.msra.mxu0 0.0
        %1248 = vmatpush.msra.mxu0 %v1184
        %1249 = vmatpush.msra.mxu0 %v1183
        %1250 = vmatpush.msra.mxu0 %v1182
        %1251 = vmatpush.msra.mxu0 %v1181
        %1252 = vmatmul.f32.gmra.mxu0 %v1191
        %v1253 = vpop.f32.mrf.mxu0
        %v1254 = vadd.f32 %v1234, %v1253
        %1255 = vdwg.mxu0
        %s1256 = scalar_lea.vmem %s8, 16
        %v1257 = vld [vmem:[%s1256] sm:$0xff]
        %s1258 = scalar_lea.vmem [#allocation5], 64
        %v1259 = vld [vmem:[%s1258] sm:$0xff]
        %v1260 = vld [vmem:[%s1258 + $0x8] sm:$0xff]
        %v1261 = vld [vmem:[%s1258 + $0x10] sm:$0xff]
        %v1262 = vld [vmem:[%s1258 + $0x18] sm:$0xff]
        %1263 = vmatpush.msra.mxu0 0.0
        %1264 = vmatpush.msra.mxu0 0.0
        %1265 = vmatpush.msra.mxu0 0.0
        %1266 = vmatpush.msra.mxu0 0.0
        %1267 = vmatpush.msra.mxu0 0.0
        %1268 = vmatpush.msra.mxu0 0.0
        %1269 = vmatpush.msra.mxu0 0.0
        %1270 = vmatpush.msra.mxu0 0.0
        %1271 = vmatpush.msra.mxu0 0.0
        %1272 = vmatpush.msra.mxu0 0.0
        %1273 = vmatpush.msra.mxu0 0.0
        %1274 = vmatpush.msra.mxu0 0.0
        %1275 = vmatpush.msra.mxu0 %v1262
        %1276 = vmatpush.msra.mxu0 %v1261
        %1277 = vmatpush.msra.mxu0 %v1260
        %1278 = vmatpush.msra.mxu0 %v1259
        %1279 = vmatmul.f32.gmra.mxu0 %v1191
        %v1280 = vpop.f32.mrf.mxu0
        %v1281 = vadd.f32 0.0, %v1280
        %1282 = vdwg.mxu0
        %v1284 = vsel %vm1067, %v1257, 0
        %1286 = vmatpush.msra.mxu0 0.0
        %1287 = vmatpush.msra.mxu0 0.0
        %1288 = vmatpush.msra.mxu0 0.0
        %1289 = vmatpush.msra.mxu0 0.0
        %1290 = vmatpush.msra.mxu0 0.0
        %1291 = vmatpush.msra.mxu0 0.0
        %1292 = vmatpush.msra.mxu0 0.0
        %1293 = vmatpush.msra.mxu0 0.0
        %1294 = vmatpush.msra.mxu0 0.0
        %1295 = vmatpush.msra.mxu0 0.0
        %1296 = vmatpush.msra.mxu0 0.0
        %1297 = vmatpush.msra.mxu0 0.0
        %1298 = vmatpush.msra.mxu0 0.0
        %1299 = vmatpush.msra.mxu0 0.0
        %1300 = vmatpush.msra.mxu0 0.0
        %1301 = vmatpush.msra.mxu0 %v1281
        %1302 = vmatmul.f32.gmra.mxu0 %v1284
        %v1303 = vpop.f32.mrf.mxu0
        %v1304 = vadd.f32 0.0, %v1303
        %1305 = vdwg.mxu0
        %v1306 = vadd.f32 %v1254, %v1304
        %v1308 = vperm.slane %v1179, 0
        %v1310 = vadd.f32 %v1306, %v1308
        %v1311 = vmul.f32 %v1310, %v995
        %v1312 = vld [vmem:[%s13] sm:$0x1]
        %s1313 = scalar_lea.vmem [#allocation7], 32
        %v1314 = vld [vmem:[%s1313] sm:$0xff]
        %v1315 = vld [vmem:[%s1313 + $0x8] sm:$0xff]
        %v1316 = vld [vmem:[%s1313 + $0x10] sm:$0xff]
        %v1317 = vld [vmem:[%s1313 + $0x18] sm:$0xff]
        %v1318 = vld [vmem:[#allocation7] sm:$0xff]
        %v1319 = vld [vmem:[#allocation7 + $0x8] sm:$0xff]
        %v1320 = vld [vmem:[#allocation7 + $0x10] sm:$0xff]
        %v1321 = vld [vmem:[#allocation7 + $0x18] sm:$0xff]
        %1322 = vmatpush.msra.mxu0 0.0
        %1323 = vmatpush.msra.mxu0 0.0
        %1324 = vmatpush.msra.mxu0 0.0
        %1325 = vmatpush.msra.mxu0 0.0
        %1326 = vmatpush.msra.mxu0 0.0
        %1327 = vmatpush.msra.mxu0 0.0
        %1328 = vmatpush.msra.mxu0 0.0
        %1329 = vmatpush.msra.mxu0 0.0
        %1330 = vmatpush.msra.mxu0 0.0
        %1331 = vmatpush.msra.mxu0 0.0
        %1332 = vmatpush.msra.mxu0 0.0
        %1333 = vmatpush.msra.mxu0 0.0
        %1334 = vmatpush.msra.mxu0 %v1321
        %1335 = vmatpush.msra.mxu0 %v1320
        %1336 = vmatpush.msra.mxu0 %v1319
        %1337 = vmatpush.msra.mxu0 %v1318
        %1338 = vmatmul.f32.gmra.mxu0 %v1191
        %v1339 = vpop.f32.mrf.mxu0
        %v1340 = vadd.f32 0.0, %v1339
        %1341 = vdwg.mxu0
        %1342 = vmatpush.msra.mxu0 0.0
        %1343 = vmatpush.msra.mxu0 0.0
        %1344 = vmatpush.msra.mxu0 0.0
        %1345 = vmatpush.msra.mxu0 0.0
        %1346 = vmatpush.msra.mxu0 0.0
        %1347 = vmatpush.msra.mxu0 0.0
        %1348 = vmatpush.msra.mxu0 0.0
        %1349 = vmatpush.msra.mxu0 0.0
        %1350 = vmatpush.msra.mxu0 0.0
        %1351 = vmatpush.msra.mxu0 0.0
        %1352 = vmatpush.msra.mxu0 0.0
        %1353 = vmatpush.msra.mxu0 0.0
        %1354 = vmatpush.msra.mxu0 0.0
        %1355 = vmatpush.msra.mxu0 0.0
        %1356 = vmatpush.msra.mxu0 0.0
        %1357 = vmatpush.msra.mxu0 %v1340
        %1358 = vmatmul.f32.gmra.mxu0 %v1214
        %v1359 = vpop.f32.mrf.mxu0
        %v1360 = vadd.f32 0.0, %v1359
        %1361 = vdwg.mxu0
        %1362 = vmatpush.msra.mxu0 0.0
        %1363 = vmatpush.msra.mxu0 0.0
        %1364 = vmatpush.msra.mxu0 0.0
        %1365 = vmatpush.msra.mxu0 0.0
        %1366 = vmatpush.msra.mxu0 0.0
        %1367 = vmatpush.msra.mxu0 0.0
        %1368 = vmatpush.msra.mxu0 0.0
        %1369 = vmatpush.msra.mxu0 0.0
        %1370 = vmatpush.msra.mxu0 0.0
        %1371 = vmatpush.msra.mxu0 0.0
        %1372 = vmatpush.msra.mxu0 0.0
        %1373 = vmatpush.msra.mxu0 0.0
        %1374 = vmatpush.msra.mxu0 %v1317
        %1375 = vmatpush.msra.mxu0 %v1316
        %1376 = vmatpush.msra.mxu0 %v1315
        %1377 = vmatpush.msra.mxu0 %v1314
        %1378 = vmatmul.f32.gmra.mxu0 %v1191
        %v1379 = vpop.f32.mrf.mxu0
        %v1380 = vadd.f32 %v1360, %v1379
        %1381 = vdwg.mxu0
        %s1382 = scalar_lea.vmem [#allocation7], 64
        %v1383 = vld [vmem:[%s1382] sm:$0xff]
        %v1384 = vld [vmem:[%s1382 + $0x8] sm:$0xff]
        %v1385 = vld [vmem:[%s1382 + $0x10] sm:$0xff]
        %v1386 = vld [vmem:[%s1382 + $0x18] sm:$0xff]
        %1387 = vmatpush.msra.mxu0 0.0
        %1388 = vmatpush.msra.mxu0 0.0
        %1389 = vmatpush.msra.mxu0 0.0
        %1390 = vmatpush.msra.mxu0 0.0
        %1391 = vmatpush.msra.mxu0 0.0
        %1392 = vmatpush.msra.mxu0 0.0
        %1393 = vmatpush.msra.mxu0 0.0
        %1394 = vmatpush.msra.mxu0 0.0
        %1395 = vmatpush.msra.mxu0 0.0
        %1396 = vmatpush.msra.mxu0 0.0
        %1397 = vmatpush.msra.mxu0 0.0
        %1398 = vmatpush.msra.mxu0 0.0
        %1399 = vmatpush.msra.mxu0 %v1386
        %1400 = vmatpush.msra.mxu0 %v1385
        %1401 = vmatpush.msra.mxu0 %v1384
        %1402 = vmatpush.msra.mxu0 %v1383
        %1403 = vmatmul.f32.gmra.mxu0 %v1191
        %v1404 = vpop.f32.mrf.mxu0
        %v1405 = vadd.f32 0.0, %v1404
        %1406 = vdwg.mxu0
        %1407 = vmatpush.msra.mxu0 0.0
        %1408 = vmatpush.msra.mxu0 0.0
        %1409 = vmatpush.msra.mxu0 0.0
        %1410 = vmatpush.msra.mxu0 0.0
        %1411 = vmatpush.msra.mxu0 0.0
        %1412 = vmatpush.msra.mxu0 0.0
        %1413 = vmatpush.msra.mxu0 0.0
        %1414 = vmatpush.msra.mxu0 0.0
        %1415 = vmatpush.msra.mxu0 0.0
        %1416 = vmatpush.msra.mxu0 0.0
        %1417 = vmatpush.msra.mxu0 0.0
        %1418 = vmatpush.msra.mxu0 0.0
        %1419 = vmatpush.msra.mxu0 0.0
        %1420 = vmatpush.msra.mxu0 0.0
        %1421 = vmatpush.msra.mxu0 0.0
        %1422 = vmatpush.msra.mxu0 %v1405
        %1423 = vmatmul.f32.gmra.mxu0 %v1284
        %v1424 = vpop.f32.mrf.mxu0
        %v1425 = vadd.f32 0.0, %v1424
        %1426 = vdwg.mxu0
        %v1427 = vadd.f32 %v1380, %v1425
        %v1429 = vperm.slane %v1312, 0
        %v1431 = vadd.f32 %v1427, %v1429
        %v1432 = vld [vmem:[%s15] sm:$0x1]
        %s1433 = scalar_lea.vmem %s14, 64
        %v1434 = vld [vmem:[%s1433] sm:$0xff]
        %v1435 = vld [vmem:[%s1433 + $0x8] sm:$0xff]
        %v1436 = vld [vmem:[%s1433 + $0x10] sm:$0xff]
        %v1437 = vld [vmem:[%s1433 + $0x18] sm:$0xff]
        %v1438 = vld [vmem:[%s1433 + $0x20] sm:$0xff]
        %v1439 = vld [vmem:[%s1433 + $0x28] sm:$0xff]
        %v1440 = vld [vmem:[%s1433 + $0x30] sm:$0xff]
        %v1441 = vld [vmem:[%s1433 + $0x38] sm:$0xff]
        %v1442 = vld [vmem:[%s9] sm:$0xff]
        %v1443 = vld [vmem:[%s9 + $0x8] sm:$0xff]
        %v1444 = vld [vmem:[%s14] sm:$0xff]
        %v1445 = vld [vmem:[%s14 + $0x8] sm:$0xff]
        %v1446 = vld [vmem:[%s14 + $0x10] sm:$0xff]
        %v1447 = vld [vmem:[%s14 + $0x18] sm:$0xff]
        %v1448 = vld [vmem:[%s14 + $0x20] sm:$0xff]
        %v1449 = vld [vmem:[%s14 + $0x28] sm:$0xff]
        %v1450 = vld [vmem:[%s14 + $0x30] sm:$0xff]
        %v1451 = vld [vmem:[%s14 + $0x38] sm:$0xff]
        %vm1452 = vcmask 523264
        %v1454 = vsel %vm1452, %v1122, 0
        %v1457 = vsel %vm1452, %v1125, 0
        %1459 = vmatpush.msra.mxu0 0.0
        %1460 = vmatpush.msra.mxu0 0.0
        %1461 = vmatpush.msra.mxu0 0.0
        %1462 = vmatpush.msra.mxu0 0.0
        %1463 = vmatpush.msra.mxu0 0.0
        %1464 = vmatpush.msra.mxu0 0.0
        %1465 = vmatpush.msra.mxu0 0.0
        %1466 = vmatpush.msra.mxu0 0.0
        %1467 = vmatpush.msra.mxu0 %v1451
        %1468 = vmatpush.msra.mxu0 %v1450
        %1469 = vmatpush.msra.mxu0 %v1449
        %1470 = vmatpush.msra.mxu0 %v1448
        %1471 = vmatpush.msra.mxu0 %v1447
        %1472 = vmatpush.msra.mxu0 %v1446
        %1473 = vmatpush.msra.mxu0 %v1445
        %1474 = vmatpush.msra.mxu0 %v1444
        %1475 = vmatmul.f32.gmra.mxu0 %v1454
        %v1476 = vpop.f32.mrf.mxu0
        %v1477 = vadd.f32 0.0, %v1476
        %1478 = vmatmul.f32.gmra.mxu0 %v1457
        %v1479 = vpop.f32.mrf.mxu0
        %v1480 = vadd.f32 0.0, %v1479
        %1481 = vdwg.mxu0
        %v1483 = vsel %vm1043, %v1442, 0
        %v1486 = vsel %vm1043, %v1443, 0
        %1488 = vmatpush.msra.mxu0 0.0
        %1489 = vmatpush.msra.mxu0 0.0
        %1490 = vmatpush.msra.mxu0 0.0
        %1491 = vmatpush.msra.mxu0 0.0
        %1492 = vmatpush.msra.mxu0 0.0
        %1493 = vmatpush.msra.mxu0 0.0
        %1494 = vmatpush.msra.mxu0 0.0
        %1495 = vmatpush.msra.mxu0 0.0
        %1496 = vmatpush.msra.mxu0 0.0
        %1497 = vmatpush.msra.mxu0 0.0
        %1498 = vmatpush.msra.mxu0 0.0
        %1499 = vmatpush.msra.mxu0 0.0
        %1500 = vmatpush.msra.mxu0 0.0
        %1501 = vmatpush.msra.mxu0 0.0
        %1502 = vmatpush.msra.mxu0 %v1480
        %1503 = vmatpush.msra.mxu0 %v1477
        %1504 = vmatmul.f32.gmra.mxu0 %v1483
        %v1505 = vpop.f32.mrf.mxu0
        %v1506 = vadd.f32 0.0, %v1505
        %1507 = vmatmul.f32.gmra.mxu0 %v1486
        %v1508 = vpop.f32.mrf.mxu0
        %v1509 = vadd.f32 0.0, %v1508
        %1510 = vdwg.mxu0
        %1511 = vmatpush.msra.mxu0 0.0
        %1512 = vmatpush.msra.mxu0 0.0
        %1513 = vmatpush.msra.mxu0 0.0
        %1514 = vmatpush.msra.mxu0 0.0
        %1515 = vmatpush.msra.mxu0 0.0
        %1516 = vmatpush.msra.mxu0 0.0
        %1517 = vmatpush.msra.mxu0 0.0
        %1518 = vmatpush.msra.mxu0 0.0
        %1519 = vmatpush.msra.mxu0 %v1441
        %1520 = vmatpush.msra.mxu0 %v1440
        %1521 = vmatpush.msra.mxu0 %v1439
        %1522 = vmatpush.msra.mxu0 %v1438
        %1523 = vmatpush.msra.mxu0 %v1437
        %1524 = vmatpush.msra.mxu0 %v1436
        %1525 = vmatpush.msra.mxu0 %v1435
        %1526 = vmatpush.msra.mxu0 %v1434
        %1527 = vmatmul.f32.gmra.mxu0 %v1454
        %v1528 = vpop.f32.mrf.mxu0
        %v1529 = vadd.f32 %v1506, %v1528
        %1530 = vmatmul.f32.gmra.mxu0 %v1457
        %v1531 = vpop.f32.mrf.mxu0
        %v1532 = vadd.f32 %v1509, %v1531
        %1533 = vdwg.mxu0
        %s1534 = scalar_lea.vmem %s9, 32
        %v1535 = vld [vmem:[%s1534] sm:$0xff]
        %v1536 = vld [vmem:[%s1534 + $0x8] sm:$0xff]
        %s1537 = scalar_lea.vmem %s14, 128
        %v1538 = vld [vmem:[%s1537] sm:$0xff]
        %v1539 = vld [vmem:[%s1537 + $0x8] sm:$0xff]
        %v1540 = vld [vmem:[%s1537 + $0x10] sm:$0xff]
        %v1541 = vld [vmem:[%s1537 + $0x18] sm:$0xff]
        %v1542 = vld [vmem:[%s1537 + $0x20] sm:$0xff]
        %v1543 = vld [vmem:[%s1537 + $0x28] sm:$0xff]
        %v1544 = vld [vmem:[%s1537 + $0x30] sm:$0xff]
        %v1545 = vld [vmem:[%s1537 + $0x38] sm:$0xff]
        %1546 = vmatpush.msra.mxu0 0.0
        %1547 = vmatpush.msra.mxu0 0.0
        %1548 = vmatpush.msra.mxu0 0.0
        %1549 = vmatpush.msra.mxu0 0.0
        %1550 = vmatpush.msra.mxu0 0.0
        %1551 = vmatpush.msra.mxu0 0.0
        %1552 = vmatpush.msra.mxu0 0.0
        %1553 = vmatpush.msra.mxu0 0.0
        %1554 = vmatpush.msra.mxu0 %v1545
        %1555 = vmatpush.msra.mxu0 %v1544
        %1556 = vmatpush.msra.mxu0 %v1543
        %1557 = vmatpush.msra.mxu0 %v1542
        %1558 = vmatpush.msra.mxu0 %v1541
        %1559 = vmatpush.msra.mxu0 %v1540
        %1560 = vmatpush.msra.mxu0 %v1539
        %1561 = vmatpush.msra.mxu0 %v1538
        %1562 = vmatmul.f32.gmra.mxu0 %v1454
        %v1563 = vpop.f32.mrf.mxu0
        %v1564 = vadd.f32 0.0, %v1563
        %1565 = vmatmul.f32.gmra.mxu0 %v1457
        %v1566 = vpop.f32.mrf.mxu0
        %v1567 = vadd.f32 0.0, %v1566
        %1568 = vdwg.mxu0
        %v1570 = vsel %vm1043, %v1535, 0
        %v1573 = vsel %vm1043, %v1536, 0
        %1575 = vmatpush.msra.mxu0 0.0
        %1576 = vmatpush.msra.mxu0 0.0
        %1577 = vmatpush.msra.mxu0 0.0
        %1578 = vmatpush.msra.mxu0 0.0
        %1579 = vmatpush.msra.mxu0 0.0
        %1580 = vmatpush.msra.mxu0 0.0
        %1581 = vmatpush.msra.mxu0 0.0
        %1582 = vmatpush.msra.mxu0 0.0
        %1583 = vmatpush.msra.mxu0 0.0
        %1584 = vmatpush.msra.mxu0 0.0
        %1585 = vmatpush.msra.mxu0 0.0
        %1586 = vmatpush.msra.mxu0 0.0
        %1587 = vmatpush.msra.mxu0 0.0
        %1588 = vmatpush.msra.mxu0 0.0
        %1589 = vmatpush.msra.mxu0 %v1567
        %1590 = vmatpush.msra.mxu0 %v1564
        %1591 = vmatmul.f32.gmra.mxu0 %v1570
        %v1592 = vpop.f32.mrf.mxu0
        %v1593 = vadd.f32 0.0, %v1592
        %1594 = vmatmul.f32.gmra.mxu0 %v1573
        %v1595 = vpop.f32.mrf.mxu0
        %v1596 = vadd.f32 0.0, %v1595
        %1597 = vdwg.mxu0
        %v1598 = vadd.f32 %v1529, %v1593
        %v1599 = vadd.f32 %v1532, %v1596
        %v1601 = vperm.slane %v1432, 0
        %v1603 = vadd.f32 %v1598, %v1601
        %v1604 = vadd.f32 %v1599, %v1601
        %v1605 = vld [vmem:[%s17] sm:$0x1]
        %s1606 = scalar_lea.vmem %s16, 64
        %v1607 = vld [vmem:[%s1606] sm:$0xff]
        %v1608 = vld [vmem:[%s1606 + $0x8] sm:$0xff]
        %v1609 = vld [vmem:[%s1606 + $0x10] sm:$0xff]
        %v1610 = vld [vmem:[%s1606 + $0x18] sm:$0xff]
        %v1611 = vld [vmem:[%s1606 + $0x20] sm:$0xff]
        %v1612 = vld [vmem:[%s1606 + $0x28] sm:$0xff]
        %v1613 = vld [vmem:[%s1606 + $0x30] sm:$0xff]
        %v1614 = vld [vmem:[%s1606 + $0x38] sm:$0xff]
        %v1615 = vld [vmem:[%s16] sm:$0xff]
        %v1616 = vld [vmem:[%s16 + $0x8] sm:$0xff]
        %v1617 = vld [vmem:[%s16 + $0x10] sm:$0xff]
        %v1618 = vld [vmem:[%s16 + $0x18] sm:$0xff]
        %v1619 = vld [vmem:[%s16 + $0x20] sm:$0xff]
        %v1620 = vld [vmem:[%s16 + $0x28] sm:$0xff]
        %v1621 = vld [vmem:[%s16 + $0x30] sm:$0xff]
        %v1622 = vld [vmem:[%s16 + $0x38] sm:$0xff]
        %v1624 = vsel %vm1452, %v1174, 0
        %v1627 = vsel %vm1452, %v1177, 0
        %1629 = vmatpush.msra.mxu0 0.0
        %1630 = vmatpush.msra.mxu0 0.0
        %1631 = vmatpush.msra.mxu0 0.0
        %1632 = vmatpush.msra.mxu0 0.0
        %1633 = vmatpush.msra.mxu0 0.0
        %1634 = vmatpush.msra.mxu0 0.0
        %1635 = vmatpush.msra.mxu0 0.0
        %1636 = vmatpush.msra.mxu0 0.0
        %1637 = vmatpush.msra.mxu0 %v1622
        %1638 = vmatpush.msra.mxu0 %v1621
        %1639 = vmatpush.msra.mxu0 %v1620
        %1640 = vmatpush.msra.mxu0 %v1619
        %1641 = vmatpush.msra.mxu0 %v1618
        %1642 = vmatpush.msra.mxu0 %v1617
        %1643 = vmatpush.msra.mxu0 %v1616
        %1644 = vmatpush.msra.mxu0 %v1615
        %1645 = vmatmul.f32.gmra.mxu0 %v1624
        %v1646 = vpop.f32.mrf.mxu0
        %v1647 = vadd.f32 0.0, %v1646
        %1648 = vmatmul.f32.gmra.mxu0 %v1627
        %v1649 = vpop.f32.mrf.mxu0
        %v1650 = vadd.f32 0.0, %v1649
        %1651 = vdwg.mxu0
        %1652 = vmatpush.msra.mxu0 0.0
        %1653 = vmatpush.msra.mxu0 0.0
        %1654 = vmatpush.msra.mxu0 0.0
        %1655 = vmatpush.msra.mxu0 0.0
        %1656 = vmatpush.msra.mxu0 0.0
        %1657 = vmatpush.msra.mxu0 0.0
        %1658 = vmatpush.msra.mxu0 0.0
        %1659 = vmatpush.msra.mxu0 0.0
        %1660 = vmatpush.msra.mxu0 0.0
        %1661 = vmatpush.msra.mxu0 0.0
        %1662 = vmatpush.msra.mxu0 0.0
        %1663 = vmatpush.msra.mxu0 0.0
        %1664 = vmatpush.msra.mxu0 0.0
        %1665 = vmatpush.msra.mxu0 0.0
        %1666 = vmatpush.msra.mxu0 %v1650
        %1667 = vmatpush.msra.mxu0 %v1647
        %1668 = vmatmul.f32.gmra.mxu0 %v1483
        %v1669 = vpop.f32.mrf.mxu0
        %v1670 = vadd.f32 0.0, %v1669
        %1671 = vmatmul.f32.gmra.mxu0 %v1486
        %v1672 = vpop.f32.mrf.mxu0
        %v1673 = vadd.f32 0.0, %v1672
        %1674 = vdwg.mxu0
        %1675 = vmatpush.msra.mxu0 0.0
        %1676 = vmatpush.msra.mxu0 0.0
        %1677 = vmatpush.msra.mxu0 0.0
        %1678 = vmatpush.msra.mxu0 0.0
        %1679 = vmatpush.msra.mxu0 0.0
        %1680 = vmatpush.msra.mxu0 0.0
        %1681 = vmatpush.msra.mxu0 0.0
        %1682 = vmatpush.msra.mxu0 0.0
        %1683 = vmatpush.msra.mxu0 %v1614
        %1684 = vmatpush.msra.mxu0 %v1613
        %1685 = vmatpush.msra.mxu0 %v1612
        %1686 = vmatpush.msra.mxu0 %v1611
        %1687 = vmatpush.msra.mxu0 %v1610
        %1688 = vmatpush.msra.mxu0 %v1609
        %1689 = vmatpush.msra.mxu0 %v1608
        %1690 = vmatpush.msra.mxu0 %v1607
        %1691 = vmatmul.f32.gmra.mxu0 %v1624
        %v1692 = vpop.f32.mrf.mxu0
        %v1693 = vadd.f32 %v1670, %v1692
        %1694 = vmatmul.f32.gmra.mxu0 %v1627
        %v1695 = vpop.f32.mrf.mxu0
        %v1696 = vadd.f32 %v1673, %v1695
        %1697 = vdwg.mxu0
        %s1698 = scalar_lea.vmem %s16, 128
        %v1699 = vld [vmem:[%s1698] sm:$0xff]
        %v1700 = vld [vmem:[%s1698 + $0x8] sm:$0xff]
        %v1701 = vld [vmem:[%s1698 + $0x10] sm:$0xff]
        %v1702 = vld [vmem:[%s1698 + $0x18] sm:$0xff]
        %v1703 = vld [vmem:[%s1698 + $0x20] sm:$0xff]
        %v1704 = vld [vmem:[%s1698 + $0x28] sm:$0xff]
        %v1705 = vld [vmem:[%s1698 + $0x30] sm:$0xff]
        %v1706 = vld [vmem:[%s1698 + $0x38] sm:$0xff]
        %1707 = vmatpush.msra.mxu0 0.0
        %1708 = vmatpush.msra.mxu0 0.0
        %1709 = vmatpush.msra.mxu0 0.0
        %1710 = vmatpush.msra.mxu0 0.0
        %1711 = vmatpush.msra.mxu0 0.0
        %1712 = vmatpush.msra.mxu0 0.0
        %1713 = vmatpush.msra.mxu0 0.0
        %1714 = vmatpush.msra.mxu0 0.0
        %1715 = vmatpush.msra.mxu0 %v1706
        %1716 = vmatpush.msra.mxu0 %v1705
        %1717 = vmatpush.msra.mxu0 %v1704
        %1718 = vmatpush.msra.mxu0 %v1703
        %1719 = vmatpush.msra.mxu0 %v1702
        %1720 = vmatpush.msra.mxu0 %v1701
        %1721 = vmatpush.msra.mxu0 %v1700
        %1722 = vmatpush.msra.mxu0 %v1699
        %1723 = vmatmul.f32.gmra.mxu0 %v1624
        %v1724 = vpop.f32.mrf.mxu0
        %v1725 = vadd.f32 0.0, %v1724
        %1726 = vmatmul.f32.gmra.mxu0 %v1627
        %v1727 = vpop.f32.mrf.mxu0
        %v1728 = vadd.f32 0.0, %v1727
        %1729 = vdwg.mxu0
        %1730 = vmatpush.msra.mxu0 0.0
        %1731 = vmatpush.msra.mxu0 0.0
        %1732 = vmatpush.msra.mxu0 0.0
        %1733 = vmatpush.msra.mxu0 0.0
        %1734 = vmatpush.msra.mxu0 0.0
        %1735 = vmatpush.msra.mxu0 0.0
        %1736 = vmatpush.msra.mxu0 0.0
        %1737 = vmatpush.msra.mxu0 0.0
        %1738 = vmatpush.msra.mxu0 0.0
        %1739 = vmatpush.msra.mxu0 0.0
        %1740 = vmatpush.msra.mxu0 0.0
        %1741 = vmatpush.msra.mxu0 0.0
        %1742 = vmatpush.msra.mxu0 0.0
        %1743 = vmatpush.msra.mxu0 0.0
        %1744 = vmatpush.msra.mxu0 %v1728
        %1745 = vmatpush.msra.mxu0 %v1725
        %1746 = vmatmul.f32.gmra.mxu0 %v1570
        %v1747 = vpop.f32.mrf.mxu0
        %v1748 = vadd.f32 0.0, %v1747
        %1749 = vmatmul.f32.gmra.mxu0 %v1573
        %v1750 = vpop.f32.mrf.mxu0
        %v1751 = vadd.f32 0.0, %v1750
        %1752 = vdwg.mxu0
        %v1753 = vadd.f32 %v1693, %v1748
        %v1754 = vadd.f32 %v1696, %v1751
        %v1756 = vperm.slane %v1605, 0
        %v1758 = vadd.f32 %v1753, %v1756
        %v1759 = vadd.f32 %v1754, %v1756
        %v1760 = vmul.f32 %v1603, %v1758
        %v1761 = vmul.f32 %v1604, %v1759
        %v1762 = vmul.f32 %v1760, %v996
        %v1763 = vmul.f32 %v1761, %v997
        %v1764 = vld [vmem:[%s20] sm:$0x1]
        %s1765 = scalar_lea.vmem %s18, 32
        %v1766 = vld [vmem:[%s1765] sm:$0xff]
        %v1767 = vld [vmem:[%s1765 + $0x8] sm:$0xff]
        %v1768 = vld [vmem:[%s1765 + $0x10] sm:$0xff]
        %v1769 = vld [vmem:[%s1765 + $0x18] sm:$0xff]
        %s1770 = scalar_lea.vmem %s19, 32
        %v1771 = vld [vmem:[%s1770] sm:$0xff]
        %v1772 = vld [vmem:[%s1770 + $0x8] sm:$0xff]
        %v1773 = vld [vmem:[%s1770 + $0x10] sm:$0xff]
        %v1774 = vld [vmem:[%s1770 + $0x18] sm:$0xff]
        %v1776 = vsel %vm1097, %v1431, 0
        %1778 = vmatpush.msra.mxu0 0.0
        %1779 = vmatpush.msra.mxu0 0.0
        %1780 = vmatpush.msra.mxu0 0.0
        %1781 = vmatpush.msra.mxu0 0.0
        %1782 = vmatpush.msra.mxu0 0.0
        %1783 = vmatpush.msra.mxu0 0.0
        %1784 = vmatpush.msra.mxu0 0.0
        %1785 = vmatpush.msra.mxu0 0.0
        %1786 = vmatpush.msra.mxu0 0.0
        %1787 = vmatpush.msra.mxu0 0.0
        %1788 = vmatpush.msra.mxu0 0.0
        %1789 = vmatpush.msra.mxu0 0.0
        %1790 = vmatpush.msra.mxu0 %v1774
        %1791 = vmatpush.msra.mxu0 %v1773
        %1792 = vmatpush.msra.mxu0 %v1772
        %1793 = vmatpush.msra.mxu0 %v1771
        %1794 = vmatmul.f32.gmra.mxu0 %v1776
        %v1795 = vpop.f32.mrf.mxu0
        %v1796 = vadd.f32 0.0, %v1795
        %1797 = vdwg.mxu0
        %v1799 = vsel %vm1097, %v1311, 0
        %1801 = vmatpush.msra.mxu0 0.0
        %1802 = vmatpush.msra.mxu0 0.0
        %1803 = vmatpush.msra.mxu0 0.0
        %1804 = vmatpush.msra.mxu0 0.0
        %1805 = vmatpush.msra.mxu0 0.0
        %1806 = vmatpush.msra.mxu0 0.0
        %1807 = vmatpush.msra.mxu0 0.0
        %1808 = vmatpush.msra.mxu0 0.0
        %1809 = vmatpush.msra.mxu0 0.0
        %1810 = vmatpush.msra.mxu0 0.0
        %1811 = vmatpush.msra.mxu0 0.0
        %1812 = vmatpush.msra.mxu0 0.0
        %1813 = vmatpush.msra.mxu0 %v1769
        %1814 = vmatpush.msra.mxu0 %v1768
        %1815 = vmatpush.msra.mxu0 %v1767
        %1816 = vmatpush.msra.mxu0 %v1766
        %1817 = vmatmul.f32.gmra.mxu0 %v1799
        %v1818 = vpop.f32.mrf.mxu0
        %v1819 = vadd.f32 %v1796, %v1818
        %1820 = vdwg.mxu0
        %v1821 = vld [vmem:[%s18] sm:$0xff]
        %v1822 = vld [vmem:[%s18 + $0x8] sm:$0xff]
        %v1823 = vld [vmem:[%s18 + $0x10] sm:$0xff]
        %v1824 = vld [vmem:[%s18 + $0x18] sm:$0xff]
        %v1825 = vld [vmem:[%s19] sm:$0xff]
        %v1826 = vld [vmem:[%s19 + $0x8] sm:$0xff]
        %v1827 = vld [vmem:[%s19 + $0x10] sm:$0xff]
        %v1828 = vld [vmem:[%s19 + $0x18] sm:$0xff]
        %1829 = vmatpush.msra.mxu0 0.0
        %1830 = vmatpush.msra.mxu0 0.0
        %1831 = vmatpush.msra.mxu0 0.0
        %1832 = vmatpush.msra.mxu0 0.0
        %1833 = vmatpush.msra.mxu0 0.0
        %1834 = vmatpush.msra.mxu0 0.0
        %1835 = vmatpush.msra.mxu0 0.0
        %1836 = vmatpush.msra.mxu0 0.0
        %1837 = vmatpush.msra.mxu0 0.0
        %1838 = vmatpush.msra.mxu0 0.0
        %1839 = vmatpush.msra.mxu0 0.0
        %1840 = vmatpush.msra.mxu0 0.0
        %1841 = vmatpush.msra.mxu0 %v1828
        %1842 = vmatpush.msra.mxu0 %v1827
        %1843 = vmatpush.msra.mxu0 %v1826
        %1844 = vmatpush.msra.mxu0 %v1825
        %1845 = vmatmul.f32.gmra.mxu0 %v1776
        %v1846 = vpop.f32.mrf.mxu0
        %v1847 = vadd.f32 0.0, %v1846
        %1848 = vdwg.mxu0
        %1849 = vmatpush.msra.mxu0 0.0
        %1850 = vmatpush.msra.mxu0 0.0
        %1851 = vmatpush.msra.mxu0 0.0
        %1852 = vmatpush.msra.mxu0 0.0
        %1853 = vmatpush.msra.mxu0 0.0
        %1854 = vmatpush.msra.mxu0 0.0
        %1855 = vmatpush.msra.mxu0 0.0
        %1856 = vmatpush.msra.mxu0 0.0
        %1857 = vmatpush.msra.mxu0 0.0
        %1858 = vmatpush.msra.mxu0 0.0
        %1859 = vmatpush.msra.mxu0 0.0
        %1860 = vmatpush.msra.mxu0 0.0
        %1861 = vmatpush.msra.mxu0 %v1824
        %1862 = vmatpush.msra.mxu0 %v1823
        %1863 = vmatpush.msra.mxu0 %v1822
        %1864 = vmatpush.msra.mxu0 %v1821
        %1865 = vmatmul.f32.gmra.mxu0 %v1799
        %v1866 = vpop.f32.mrf.mxu0
        %v1867 = vadd.f32 %v1847, %v1866
        %1868 = vdwg.mxu0
        %1869 = vmatpush.msra.mxu0 0.0
        %1870 = vmatpush.msra.mxu0 0.0
        %1871 = vmatpush.msra.mxu0 0.0
        %1872 = vmatpush.msra.mxu0 0.0
        %1873 = vmatpush.msra.mxu0 0.0
        %1874 = vmatpush.msra.mxu0 0.0
        %1875 = vmatpush.msra.mxu0 0.0
        %1876 = vmatpush.msra.mxu0 0.0
        %1877 = vmatpush.msra.mxu0 0.0
        %1878 = vmatpush.msra.mxu0 0.0
        %1879 = vmatpush.msra.mxu0 0.0
        %1880 = vmatpush.msra.mxu0 0.0
        %1881 = vmatpush.msra.mxu0 0.0
        %1882 = vmatpush.msra.mxu0 0.0
        %1883 = vmatpush.msra.mxu0 0.0
        %1884 = vmatpush.msra.mxu0 %v1867
        %1885 = vmatmul.f32.gmra.mxu0 %v1214
        %v1886 = vpop.f32.mrf.mxu0
        %v1887 = vadd.f32 0.0, %v1886
        %1888 = vdwg.mxu0
        %v1889 = vadd.f32 %v1819, %v1887
        %s1890 = scalar_lea.vmem %s18, 64
        %v1891 = vld [vmem:[%s1890] sm:$0xff]
        %v1892 = vld [vmem:[%s1890 + $0x8] sm:$0xff]
        %v1893 = vld [vmem:[%s1890 + $0x10] sm:$0xff]
        %v1894 = vld [vmem:[%s1890 + $0x18] sm:$0xff]
        %s1895 = scalar_lea.vmem %s19, 64
        %v1896 = vld [vmem:[%s1895] sm:$0xff]
        %v1897 = vld [vmem:[%s1895 + $0x8] sm:$0xff]
        %v1898 = vld [vmem:[%s1895 + $0x10] sm:$0xff]
        %v1899 = vld [vmem:[%s1895 + $0x18] sm:$0xff]
        %1900 = vmatpush.msra.mxu0 0.0
        %1901 = vmatpush.msra.mxu0 0.0
        %1902 = vmatpush.msra.mxu0 0.0
        %1903 = vmatpush.msra.mxu0 0.0
        %1904 = vmatpush.msra.mxu0 0.0
        %1905 = vmatpush.msra.mxu0 0.0
        %1906 = vmatpush.msra.mxu0 0.0
        %1907 = vmatpush.msra.mxu0 0.0
        %1908 = vmatpush.msra.mxu0 0.0
        %1909 = vmatpush.msra.mxu0 0.0
        %1910 = vmatpush.msra.mxu0 0.0
        %1911 = vmatpush.msra.mxu0 0.0
        %1912 = vmatpush.msra.mxu0 %v1899
        %1913 = vmatpush.msra.mxu0 %v1898
        %1914 = vmatpush.msra.mxu0 %v1897
        %1915 = vmatpush.msra.mxu0 %v1896
        %1916 = vmatmul.f32.gmra.mxu0 %v1776
        %v1917 = vpop.f32.mrf.mxu0
        %v1918 = vadd.f32 0.0, %v1917
        %1919 = vdwg.mxu0
        %1920 = vmatpush.msra.mxu0 0.0
        %1921 = vmatpush.msra.mxu0 0.0
        %1922 = vmatpush.msra.mxu0 0.0
        %1923 = vmatpush.msra.mxu0 0.0
        %1924 = vmatpush.msra.mxu0 0.0
        %1925 = vmatpush.msra.mxu0 0.0
        %1926 = vmatpush.msra.mxu0 0.0
        %1927 = vmatpush.msra.mxu0 0.0
        %1928 = vmatpush.msra.mxu0 0.0
        %1929 = vmatpush.msra.mxu0 0.0
        %1930 = vmatpush.msra.mxu0 0.0
        %1931 = vmatpush.msra.mxu0 0.0
        %1932 = vmatpush.msra.mxu0 %v1894
        %1933 = vmatpush.msra.mxu0 %v1893
        %1934 = vmatpush.msra.mxu0 %v1892
        %1935 = vmatpush.msra.mxu0 %v1891
        %1936 = vmatmul.f32.gmra.mxu0 %v1799
        %v1937 = vpop.f32.mrf.mxu0
        %v1938 = vadd.f32 %v1918, %v1937
        %1939 = vdwg.mxu0
        %1940 = vmatpush.msra.mxu0 0.0
        %1941 = vmatpush.msra.mxu0 0.0
        %1942 = vmatpush.msra.mxu0 0.0
        %1943 = vmatpush.msra.mxu0 0.0
        %1944 = vmatpush.msra.mxu0 0.0
        %1945 = vmatpush.msra.mxu0 0.0
        %1946 = vmatpush.msra.mxu0 0.0
        %1947 = vmatpush.msra.mxu0 0.0
        %1948 = vmatpush.msra.mxu0 0.0
        %1949 = vmatpush.msra.mxu0 0.0
        %1950 = vmatpush.msra.mxu0 0.0
        %1951 = vmatpush.msra.mxu0 0.0
        %1952 = vmatpush.msra.mxu0 0.0
        %1953 = vmatpush.msra.mxu0 0.0
        %1954 = vmatpush.msra.mxu0 0.0
        %1955 = vmatpush.msra.mxu0 %v1938
        %1956 = vmatmul.f32.gmra.mxu0 %v1284
        %v1957 = vpop.f32.mrf.mxu0
        %v1958 = vadd.f32 0.0, %v1957
        %1959 = vdwg.mxu0
        %v1960 = vadd.f32 %v1889, %v1958
        %v1962 = vperm.slane %v1764, 0
        %v1964 = vadd.f32 %v1960, %v1962
        %1965 = vmatpush.msra.mxu0 0.0
        %1966 = vmatpush.msra.mxu0 0.0
        %1967 = vmatpush.msra.mxu0 0.0
        %1968 = vmatpush.msra.mxu0 0.0
        %1969 = vmatpush.msra.mxu0 0.0
        %1970 = vmatpush.msra.mxu0 0.0
        %1971 = vmatpush.msra.mxu0 0.0
        %1972 = vmatpush.msra.mxu0 0.0
        %1973 = vmatpush.msra.mxu0 0.0
        %1974 = vmatpush.msra.mxu0 0.0
        %1975 = vmatpush.msra.mxu0 0.0
        %1976 = vmatpush.msra.mxu0 0.0
        %1977 = vmatpush.msra.mxu0 0.0
        %1978 = vmatpush.msra.mxu0 0.0
        %1979 = vmatpush.msra.mxu0 0.0
        %1980 = vmatpush.msra.mxu0 %v1964
        %1981 = vmatmul.f32.gmra.mxu0 %v1069
        %v1982 = vpop.f32.mrf.mxu0
        %v1983 = vadd.f32 0.0, %v1982
        %1984 = vmatmul.f32.gmra.mxu0 %v1072
        %v1985 = vpop.f32.mrf.mxu0
        %v1986 = vadd.f32 0.0, %v1985
        %1987 = vdwg.mxu0
        %v1989 = vsel %vm1452, %v1983, 0
        %v1992 = vsel %vm1452, %v1986, 0
        %1994 = vmatpush.msra.mxu0 0.0
        %1995 = vmatpush.msra.mxu0 0.0
        %1996 = vmatpush.msra.mxu0 0.0
        %1997 = vmatpush.msra.mxu0 0.0
        %1998 = vmatpush.msra.mxu0 0.0
        %1999 = vmatpush.msra.mxu0 0.0
        %2000 = vmatpush.msra.mxu0 0.0
        %2001 = vmatpush.msra.mxu0 0.0
        %2002 = vmatpush.msra.mxu0 %v1014
        %2003 = vmatpush.msra.mxu0 %v1013
        %2004 = vmatpush.msra.mxu0 %v1012
        %2005 = vmatpush.msra.mxu0 %v1011
        %2006 = vmatpush.msra.mxu0 %v1010
        %2007 = vmatpush.msra.mxu0 %v1009
        %2008 = vmatpush.msra.mxu0 %v1008
        %2009 = vmatpush.msra.mxu0 %v1007
        %2010 = vmatmul.f32.gmra.mxu0 %v1989
        %v2011 = vpop.f32.mrf.mxu0
        %v2012 = vadd.f32 0.0, %v2011
        %2013 = vmatmul.f32.gmra.mxu0 %v1992
        %v2014 = vpop.f32.mrf.mxu0
        %v2015 = vadd.f32 0.0, %v2014
        %2016 = vdwg.mxu0
        %v2017 = vld [vmem:[%s22] sm:$0x1]
        %s2018 = scalar_lea.vmem [#allocation8], 128
        %v2019 = vld [vmem:[%s2018] sm:$0xff]
        %v2020 = vld [vmem:[%s2018 + $0x8] sm:$0xff]
        %v2021 = vld [vmem:[%s2018 + $0x10] sm:$0xff]
        %v2022 = vld [vmem:[%s2018 + $0x18] sm:$0xff]
        %v2023 = vld [vmem:[%s2018 + $0x20] sm:$0xff]
        %v2024 = vld [vmem:[%s2018 + $0x28] sm:$0xff]
        %v2025 = vld [vmem:[%s2018 + $0x30] sm:$0xff]
        %v2026 = vld [vmem:[%s2018 + $0x38] sm:$0xff]
        %v2027 = vld [vmem:[%s2018 + $0x40] sm:$0xff]
        %v2028 = vld [vmem:[%s2018 + $0x48] sm:$0xff]
        %v2029 = vld [vmem:[%s2018 + $0x50] sm:$0xff]
        %v2030 = vld [vmem:[%s2018 + $0x58] sm:$0xff]
        %v2031 = vld [vmem:[%s2018 + $0x60] sm:$0xff]
        %v2032 = vld [vmem:[%s2018 + $0x68] sm:$0xff]
        %v2033 = vld [vmem:[%s2018 + $0x70] sm:$0xff]
        %v2034 = vld [vmem:[%s2018 + $0x78] sm:$0xff]
        %v2035 = vld [vmem:[#allocation8] sm:$0xff]
        %v2036 = vld [vmem:[#allocation8 + $0x8] sm:$0xff]
        %v2037 = vld [vmem:[#allocation8 + $0x10] sm:$0xff]
        %v2038 = vld [vmem:[#allocation8 + $0x18] sm:$0xff]
        %v2039 = vld [vmem:[#allocation8 + $0x20] sm:$0xff]
        %v2040 = vld [vmem:[#allocation8 + $0x28] sm:$0xff]
        %v2041 = vld [vmem:[#allocation8 + $0x30] sm:$0xff]
        %v2042 = vld [vmem:[#allocation8 + $0x38] sm:$0xff]
        %v2043 = vld [vmem:[#allocation8 + $0x40] sm:$0xff]
        %v2044 = vld [vmem:[#allocation8 + $0x48] sm:$0xff]
        %v2045 = vld [vmem:[#allocation8 + $0x50] sm:$0xff]
        %v2046 = vld [vmem:[#allocation8 + $0x58] sm:$0xff]
        %v2047 = vld [vmem:[#allocation8 + $0x60] sm:$0xff]
        %v2048 = vld [vmem:[#allocation8 + $0x68] sm:$0xff]
        %v2049 = vld [vmem:[#allocation8 + $0x70] sm:$0xff]
        %v2050 = vld [vmem:[#allocation8 + $0x78] sm:$0xff]
        %2051 = vmatpush.msra.mxu0 %v2050
        %2052 = vmatpush.msra.mxu0 %v2049
        %2053 = vmatpush.msra.mxu0 %v2048
        %2054 = vmatpush.msra.mxu0 %v2047
        %2055 = vmatpush.msra.mxu0 %v2046
        %2056 = vmatpush.msra.mxu0 %v2045
        %2057 = vmatpush.msra.mxu0 %v2044
        %2058 = vmatpush.msra.mxu0 %v2043
        %2059 = vmatpush.msra.mxu0 %v2042
        %2060 = vmatpush.msra.mxu0 %v2041
        %2061 = vmatpush.msra.mxu0 %v2040
        %2062 = vmatpush.msra.mxu0 %v2039
        %2063 = vmatpush.msra.mxu0 %v2038
        %2064 = vmatpush.msra.mxu0 %v2037
        %2065 = vmatpush.msra.mxu0 %v2036
        %2066 = vmatpush.msra.mxu0 %v2035
        %2067 = vmatmul.f32.gmra.mxu0 %v2012
        %v2068 = vpop.f32.mrf.mxu0
        %v2069 = vadd.f32 0.0, %v2068
        %2070 = vmatmul.f32.gmra.mxu0 %v2015
        %v2071 = vpop.f32.mrf.mxu0
        %v2072 = vadd.f32 0.0, %v2071
        %2073 = vdwg.mxu0
        %2074 = vmatpush.msra.mxu0 0.0
        %2075 = vmatpush.msra.mxu0 0.0
        %2076 = vmatpush.msra.mxu0 0.0
        %2077 = vmatpush.msra.mxu0 0.0
        %2078 = vmatpush.msra.mxu0 0.0
        %2079 = vmatpush.msra.mxu0 0.0
        %2080 = vmatpush.msra.mxu0 0.0
        %2081 = vmatpush.msra.mxu0 0.0
        %2082 = vmatpush.msra.mxu0 0.0
        %2083 = vmatpush.msra.mxu0 0.0
        %2084 = vmatpush.msra.mxu0 0.0
        %2085 = vmatpush.msra.mxu0 0.0
        %2086 = vmatpush.msra.mxu0 0.0
        %2087 = vmatpush.msra.mxu0 0.0
        %2088 = vmatpush.msra.mxu0 %v2072
        %2089 = vmatpush.msra.mxu0 %v2069
        %2090 = vmatmul.f32.gmra.mxu0 %v1483
        %v2091 = vpop.f32.mrf.mxu0
        %v2092 = vadd.f32 0.0, %v2091
        %2093 = vmatmul.f32.gmra.mxu0 %v1486
        %v2094 = vpop.f32.mrf.mxu0
        %v2095 = vadd.f32 0.0, %v2094
        %2096 = vdwg.mxu0
        %2097 = vmatpush.msra.mxu0 %v2034
        %2098 = vmatpush.msra.mxu0 %v2033
        %2099 = vmatpush.msra.mxu0 %v2032
        %2100 = vmatpush.msra.mxu0 %v2031
        %2101 = vmatpush.msra.mxu0 %v2030
        %2102 = vmatpush.msra.mxu0 %v2029
        %2103 = vmatpush.msra.mxu0 %v2028
        %2104 = vmatpush.msra.mxu0 %v2027
        %2105 = vmatpush.msra.mxu0 %v2026
        %2106 = vmatpush.msra.mxu0 %v2025
        %2107 = vmatpush.msra.mxu0 %v2024
        %2108 = vmatpush.msra.mxu0 %v2023
        %2109 = vmatpush.msra.mxu0 %v2022
        %2110 = vmatpush.msra.mxu0 %v2021
        %2111 = vmatpush.msra.mxu0 %v2020
        %2112 = vmatpush.msra.mxu0 %v2019
        %2113 = vmatmul.f32.gmra.mxu0 %v2012
        %v2114 = vpop.f32.mrf.mxu0
        %v2115 = vadd.f32 %v2092, %v2114
        %2116 = vmatmul.f32.gmra.mxu0 %v2015
        %v2117 = vpop.f32.mrf.mxu0
        %v2118 = vadd.f32 %v2095, %v2117
        %2119 = vdwg.mxu0
        %s2120 = scalar_lea.vmem [#allocation8], 256
        %v2121 = vld [vmem:[%s2120] sm:$0xff]
        %v2122 = vld [vmem:[%s2120 + $0x8] sm:$0xff]
        %v2123 = vld [vmem:[%s2120 + $0x10] sm:$0xff]
        %v2124 = vld [vmem:[%s2120 + $0x18] sm:$0xff]
        %v2125 = vld [vmem:[%s2120 + $0x20] sm:$0xff]
        %v2126 = vld [vmem:[%s2120 + $0x28] sm:$0xff]
        %v2127 = vld [vmem:[%s2120 + $0x30] sm:$0xff]
        %v2128 = vld [vmem:[%s2120 + $0x38] sm:$0xff]
        %v2129 = vld [vmem:[%s2120 + $0x40] sm:$0xff]
        %v2130 = vld [vmem:[%s2120 + $0x48] sm:$0xff]
        %v2131 = vld [vmem:[%s2120 + $0x50] sm:$0xff]
        %v2132 = vld [vmem:[%s2120 + $0x58] sm:$0xff]
        %v2133 = vld [vmem:[%s2120 + $0x60] sm:$0xff]
        %v2134 = vld [vmem:[%s2120 + $0x68] sm:$0xff]
        %v2135 = vld [vmem:[%s2120 + $0x70] sm:$0xff]
        %v2136 = vld [vmem:[%s2120 + $0x78] sm:$0xff]
        %2137 = vmatpush.msra.mxu0 %v2136
        %2138 = vmatpush.msra.mxu0 %v2135
        %2139 = vmatpush.msra.mxu0 %v2134
        %2140 = vmatpush.msra.mxu0 %v2133
        %2141 = vmatpush.msra.mxu0 %v2132
        %2142 = vmatpush.msra.mxu0 %v2131
        %2143 = vmatpush.msra.mxu0 %v2130
        %2144 = vmatpush.msra.mxu0 %v2129
        %2145 = vmatpush.msra.mxu0 %v2128
        %2146 = vmatpush.msra.mxu0 %v2127
        %2147 = vmatpush.msra.mxu0 %v2126
        %2148 = vmatpush.msra.mxu0 %v2125
        %2149 = vmatpush.msra.mxu0 %v2124
        %2150 = vmatpush.msra.mxu0 %v2123
        %2151 = vmatpush.msra.mxu0 %v2122
        %2152 = vmatpush.msra.mxu0 %v2121
        %2153 = vmatmul.f32.gmra.mxu0 %v2012
        %v2154 = vpop.f32.mrf.mxu0
        %v2155 = vadd.f32 0.0, %v2154
        %2156 = vmatmul.f32.gmra.mxu0 %v2015
        %v2157 = vpop.f32.mrf.mxu0
        %v2158 = vadd.f32 0.0, %v2157
        %2159 = vdwg.mxu0
        %2160 = vmatpush.msra.mxu0 0.0
        %2161 = vmatpush.msra.mxu0 0.0
        %2162 = vmatpush.msra.mxu0 0.0
        %2163 = vmatpush.msra.mxu0 0.0
        %2164 = vmatpush.msra.mxu0 0.0
        %2165 = vmatpush.msra.mxu0 0.0
        %2166 = vmatpush.msra.mxu0 0.0
        %2167 = vmatpush.msra.mxu0 0.0
        %2168 = vmatpush.msra.mxu0 0.0
        %2169 = vmatpush.msra.mxu0 0.0
        %2170 = vmatpush.msra.mxu0 0.0
        %2171 = vmatpush.msra.mxu0 0.0
        %2172 = vmatpush.msra.mxu0 0.0
        %2173 = vmatpush.msra.mxu0 0.0
        %2174 = vmatpush.msra.mxu0 %v2158
        %2175 = vmatpush.msra.mxu0 %v2155
        %2176 = vmatmul.f32.gmra.mxu0 %v1570
        %v2177 = vpop.f32.mrf.mxu0
        %v2178 = vadd.f32 0.0, %v2177
        %2179 = vmatmul.f32.gmra.mxu0 %v1573
        %v2180 = vpop.f32.mrf.mxu0
        %v2181 = vadd.f32 0.0, %v2180
        %2182 = vdwg.mxu0
        %v2183 = vadd.f32 %v2115, %v2178
        %v2184 = vadd.f32 %v2118, %v2181
        %v2186 = vperm.slane %v2017, 0
        %v2188 = vadd.f32 %v2183, %v2186
        %v2189 = vadd.f32 %v2184, %v2186
        %v2190 = vld [vmem:[%s25] sm:$0x3]
        %s2191 = scalar_lea.vmem [#allocation10], 128
        %v2192 = vld [vmem:[%s2191] sm:$0xff]
        %v2193 = vld [vmem:[%s2191 + $0x8] sm:$0xff]
        %v2194 = vld [vmem:[%s2191 + $0x10] sm:$0xff]
        %v2195 = vld [vmem:[%s2191 + $0x18] sm:$0xff]
        %v2196 = vld [vmem:[%s2191 + $0x20] sm:$0xff]
        %v2197 = vld [vmem:[%s2191 + $0x28] sm:$0xff]
        %v2198 = vld [vmem:[%s2191 + $0x30] sm:$0xff]
        %v2199 = vld [vmem:[%s2191 + $0x38] sm:$0xff]
        %v2200 = vld [vmem:[%s2191 + $0x40] sm:$0xff]
        %v2201 = vld [vmem:[%s2191 + $0x48] sm:$0xff]
        %v2202 = vld [vmem:[%s2191 + $0x50] sm:$0xff]
        %v2203 = vld [vmem:[%s2191 + $0x58] sm:$0xff]
        %v2204 = vld [vmem:[%s2191 + $0x60] sm:$0xff]
        %v2205 = vld [vmem:[%s2191 + $0x68] sm:$0xff]
        %v2206 = vld [vmem:[%s2191 + $0x70] sm:$0xff]
        %v2207 = vld [vmem:[%s2191 + $0x78] sm:$0xff]
        %s2208 = scalar_lea.vmem [#allocation11], 256
        %v2209 = vld [vmem:[%s2208] sm:$0xff]
        %v2210 = vld [vmem:[%s2208 + $0x8] sm:$0xff]
        %v2211 = vld [vmem:[%s2208 + $0x10] sm:$0xff]
        %v2212 = vld [vmem:[%s2208 + $0x18] sm:$0xff]
        %v2213 = vld [vmem:[%s2208 + $0x20] sm:$0xff]
        %v2214 = vld [vmem:[%s2208 + $0x28] sm:$0xff]
        %v2215 = vld [vmem:[%s2208 + $0x30] sm:$0xff]
        %v2216 = vld [vmem:[%s2208 + $0x38] sm:$0xff]
        %v2217 = vld [vmem:[%s2208 + $0x40] sm:$0xff]
        %v2218 = vld [vmem:[%s2208 + $0x48] sm:$0xff]
        %v2219 = vld [vmem:[%s2208 + $0x50] sm:$0xff]
        %v2220 = vld [vmem:[%s2208 + $0x58] sm:$0xff]
        %v2221 = vld [vmem:[%s2208 + $0x60] sm:$0xff]
        %v2222 = vld [vmem:[%s2208 + $0x68] sm:$0xff]
        %v2223 = vld [vmem:[%s2208 + $0x70] sm:$0xff]
        %v2224 = vld [vmem:[%s2208 + $0x78] sm:$0xff]
        %v2225 = vld [vmem:[%s2208 + $0x80] sm:$0xff]
        %v2226 = vld [vmem:[%s2208 + $0x88] sm:$0xff]
        %v2227 = vld [vmem:[%s2208 + $0x90] sm:$0xff]
        %v2228 = vld [vmem:[%s2208 + $0x98] sm:$0xff]
        %v2229 = vld [vmem:[%s2208 + $0xa0] sm:$0xff]
        %v2230 = vld [vmem:[%s2208 + $0xa8] sm:$0xff]
        %v2231 = vld [vmem:[%s2208 + $0xb0] sm:$0xff]
        %v2232 = vld [vmem:[%s2208 + $0xb8] sm:$0xff]
        %v2233 = vld [vmem:[%s2208 + $0xc0] sm:$0xff]
        %v2234 = vld [vmem:[%s2208 + $0xc8] sm:$0xff]
        %v2235 = vld [vmem:[%s2208 + $0xd0] sm:$0xff]
        %v2236 = vld [vmem:[%s2208 + $0xd8] sm:$0xff]
        %v2237 = vld [vmem:[%s2208 + $0xe0] sm:$0xff]
        %v2238 = vld [vmem:[%s2208 + $0xe8] sm:$0xff]
        %v2239 = vld [vmem:[%s2208 + $0xf0] sm:$0xff]
        %v2240 = vld [vmem:[%s2208 + $0xf8] sm:$0xff]
        %2241 = vmatpush.msra.mxu0 %v2239
        %2242 = vmatpush.msra.mxu0 %v2237
        %2243 = vmatpush.msra.mxu0 %v2235
        %2244 = vmatpush.msra.mxu0 %v2233
        %2245 = vmatpush.msra.mxu0 %v2231
        %2246 = vmatpush.msra.mxu0 %v2229
        %2247 = vmatpush.msra.mxu0 %v2227
        %2248 = vmatpush.msra.mxu0 %v2225
        %2249 = vmatpush.msra.mxu0 %v2223
        %2250 = vmatpush.msra.mxu0 %v2221
        %2251 = vmatpush.msra.mxu0 %v2219
        %2252 = vmatpush.msra.mxu0 %v2217
        %2253 = vmatpush.msra.mxu0 %v2215
        %2254 = vmatpush.msra.mxu0 %v2213
        %2255 = vmatpush.msra.mxu0 %v2211
        %2256 = vmatpush.msra.mxu0 %v2209
        %2257 = vmatmul.f32.gmra.mxu0 %v2188
        %v2258 = vpop.f32.mrf.mxu0
        %v2259 = vadd.f32 0.0, %v2258
        %2260 = vmatmul.f32.gmra.mxu0 %v2189
        %v2261 = vpop.f32.mrf.mxu0
        %v2262 = vadd.f32 0.0, %v2261
        %2263 = vdwg.mxu0
        %2264 = vmatpush.msra.mxu0 %v2240
        %2265 = vmatpush.msra.mxu0 %v2238
        %2266 = vmatpush.msra.mxu0 %v2236
        %2267 = vmatpush.msra.mxu0 %v2234
        %2268 = vmatpush.msra.mxu0 %v2232
        %2269 = vmatpush.msra.mxu0 %v2230
        %2270 = vmatpush.msra.mxu0 %v2228
        %2271 = vmatpush.msra.mxu0 %v2226
        %2272 = vmatpush.msra.mxu0 %v2224
        %2273 = vmatpush.msra.mxu0 %v2222
        %2274 = vmatpush.msra.mxu0 %v2220
        %2275 = vmatpush.msra.mxu0 %v2218
        %2276 = vmatpush.msra.mxu0 %v2216
        %2277 = vmatpush.msra.mxu0 %v2214
        %2278 = vmatpush.msra.mxu0 %v2212
        %2279 = vmatpush.msra.mxu0 %v2210
        %2280 = vmatmul.f32.gmra.mxu0 %v2188
        %v2281 = vpop.f32.mrf.mxu0
        %v2282 = vadd.f32 0.0, %v2281
        %2283 = vmatmul.f32.gmra.mxu0 %v2189
        %v2284 = vpop.f32.mrf.mxu0
        %v2285 = vadd.f32 0.0, %v2284
        %2286 = vdwg.mxu0
        %v2288 = vsel %vm1452, %v1762, 0
        %v2291 = vsel %vm1452, %v1763, 0
        %2293 = vmatpush.msra.mxu0 0.0
        %2294 = vmatpush.msra.mxu0 0.0
        %2295 = vmatpush.msra.mxu0 0.0
        %2296 = vmatpush.msra.mxu0 0.0
        %2297 = vmatpush.msra.mxu0 0.0
        %2298 = vmatpush.msra.mxu0 0.0
        %2299 = vmatpush.msra.mxu0 0.0
        %2300 = vmatpush.msra.mxu0 0.0
        %2301 = vmatpush.msra.mxu0 %v2206
        %2302 = vmatpush.msra.mxu0 %v2204
        %2303 = vmatpush.msra.mxu0 %v2202
        %2304 = vmatpush.msra.mxu0 %v2200
        %2305 = vmatpush.msra.mxu0 %v2198
        %2306 = vmatpush.msra.mxu0 %v2196
        %2307 = vmatpush.msra.mxu0 %v2194
        %2308 = vmatpush.msra.mxu0 %v2192
        %2309 = vmatmul.f32.gmra.mxu0 %v2288
        %v2310 = vpop.f32.mrf.mxu0
        %v2311 = vadd.f32 %v2259, %v2310
        %2312 = vmatmul.f32.gmra.mxu0 %v2291
        %v2313 = vpop.f32.mrf.mxu0
        %v2314 = vadd.f32 %v2262, %v2313
        %2315 = vdwg.mxu0
        %2316 = vmatpush.msra.mxu0 0.0
        %2317 = vmatpush.msra.mxu0 0.0
        %2318 = vmatpush.msra.mxu0 0.0
        %2319 = vmatpush.msra.mxu0 0.0
        %2320 = vmatpush.msra.mxu0 0.0
        %2321 = vmatpush.msra.mxu0 0.0
        %2322 = vmatpush.msra.mxu0 0.0
        %2323 = vmatpush.msra.mxu0 0.0
        %2324 = vmatpush.msra.mxu0 %v2207
        %2325 = vmatpush.msra.mxu0 %v2205
        %2326 = vmatpush.msra.mxu0 %v2203
        %2327 = vmatpush.msra.mxu0 %v2201
        %2328 = vmatpush.msra.mxu0 %v2199
        %2329 = vmatpush.msra.mxu0 %v2197
        %2330 = vmatpush.msra.mxu0 %v2195
        %2331 = vmatpush.msra.mxu0 %v2193
        %2332 = vmatmul.f32.gmra.mxu0 %v2288
        %v2333 = vpop.f32.mrf.mxu0
        %v2334 = vadd.f32 %v2282, %v2333
        %2335 = vmatmul.f32.gmra.mxu0 %v2291
        %v2336 = vpop.f32.mrf.mxu0
        %v2337 = vadd.f32 %v2285, %v2336
        %2338 = vdwg.mxu0
        %v2339 = vld [vmem:[#allocation10] sm:$0xff]
        %v2340 = vld [vmem:[#allocation10 + $0x8] sm:$0xff]
        %v2341 = vld [vmem:[#allocation10 + $0x10] sm:$0xff]
        %v2342 = vld [vmem:[#allocation10 + $0x18] sm:$0xff]
        %v2343 = vld [vmem:[#allocation10 + $0x20] sm:$0xff]
        %v2344 = vld [vmem:[#allocation10 + $0x28] sm:$0xff]
        %v2345 = vld [vmem:[#allocation10 + $0x30] sm:$0xff]
        %v2346 = vld [vmem:[#allocation10 + $0x38] sm:$0xff]
        %v2347 = vld [vmem:[#allocation10 + $0x40] sm:$0xff]
        %v2348 = vld [vmem:[#allocation10 + $0x48] sm:$0xff]
        %v2349 = vld [vmem:[#allocation10 + $0x50] sm:$0xff]
        %v2350 = vld [vmem:[#allocation10 + $0x58] sm:$0xff]
        %v2351 = vld [vmem:[#allocation10 + $0x60] sm:$0xff]
        %v2352 = vld [vmem:[#allocation10 + $0x68] sm:$0xff]
        %v2353 = vld [vmem:[#allocation10 + $0x70] sm:$0xff]
        %v2354 = vld [vmem:[#allocation10 + $0x78] sm:$0xff]
        %v2355 = vld [vmem:[#allocation11] sm:$0xff]
        %v2356 = vld [vmem:[#allocation11 + $0x8] sm:$0xff]
        %v2357 = vld [vmem:[#allocation11 + $0x10] sm:$0xff]
        %v2358 = vld [vmem:[#allocation11 + $0x18] sm:$0xff]
        %v2359 = vld [vmem:[#allocation11 + $0x20] sm:$0xff]
        %v2360 = vld [vmem:[#allocation11 + $0x28] sm:$0xff]
        %v2361 = vld [vmem:[#allocation11 + $0x30] sm:$0xff]
        %v2362 = vld [vmem:[#allocation11 + $0x38] sm:$0xff]
        %v2363 = vld [vmem:[#allocation11 + $0x40] sm:$0xff]
        %v2364 = vld [vmem:[#allocation11 + $0x48] sm:$0xff]
        %v2365 = vld [vmem:[#allocation11 + $0x50] sm:$0xff]
        %v2366 = vld [vmem:[#allocation11 + $0x58] sm:$0xff]
        %v2367 = vld [vmem:[#allocation11 + $0x60] sm:$0xff]
        %v2368 = vld [vmem:[#allocation11 + $0x68] sm:$0xff]
        %v2369 = vld [vmem:[#allocation11 + $0x70] sm:$0xff]
        %v2370 = vld [vmem:[#allocation11 + $0x78] sm:$0xff]
        %v2371 = vld [vmem:[#allocation11 + $0x80] sm:$0xff]
        %v2372 = vld [vmem:[#allocation11 + $0x88] sm:$0xff]
        %v2373 = vld [vmem:[#allocation11 + $0x90] sm:$0xff]
        %v2374 = vld [vmem:[#allocation11 + $0x98] sm:$0xff]
        %v2375 = vld [vmem:[#allocation11 + $0xa0] sm:$0xff]
        %v2376 = vld [vmem:[#allocation11 + $0xa8] sm:$0xff]
        %v2377 = vld [vmem:[#allocation11 + $0xb0] sm:$0xff]
        %v2378 = vld [vmem:[#allocation11 + $0xb8] sm:$0xff]
        %v2379 = vld [vmem:[#allocation11 + $0xc0] sm:$0xff]
        %v2380 = vld [vmem:[#allocation11 + $0xc8] sm:$0xff]
        %v2381 = vld [vmem:[#allocation11 + $0xd0] sm:$0xff]
        %v2382 = vld [vmem:[#allocation11 + $0xd8] sm:$0xff]
        %v2383 = vld [vmem:[#allocation11 + $0xe0] sm:$0xff]
        %v2384 = vld [vmem:[#allocation11 + $0xe8] sm:$0xff]
        %v2385 = vld [vmem:[#allocation11 + $0xf0] sm:$0xff]
        %v2386 = vld [vmem:[#allocation11 + $0xf8] sm:$0xff]
        %2387 = vmatpush.msra.mxu0 %v2385
        %2388 = vmatpush.msra.mxu0 %v2383
        %2389 = vmatpush.msra.mxu0 %v2381
        %2390 = vmatpush.msra.mxu0 %v2379
        %2391 = vmatpush.msra.mxu0 %v2377
        %2392 = vmatpush.msra.mxu0 %v2375
        %2393 = vmatpush.msra.mxu0 %v2373
        %2394 = vmatpush.msra.mxu0 %v2371
        %2395 = vmatpush.msra.mxu0 %v2369
        %2396 = vmatpush.msra.mxu0 %v2367
        %2397 = vmatpush.msra.mxu0 %v2365
        %2398 = vmatpush.msra.mxu0 %v2363
        %2399 = vmatpush.msra.mxu0 %v2361
        %2400 = vmatpush.msra.mxu0 %v2359
        %2401 = vmatpush.msra.mxu0 %v2357
        %2402 = vmatpush.msra.mxu0 %v2355
        %2403 = vmatmul.f32.gmra.mxu0 %v2188
        %v2404 = vpop.f32.mrf.mxu0
        %v2405 = vadd.f32 0.0, %v2404
        %2406 = vmatmul.f32.gmra.mxu0 %v2189
        %v2407 = vpop.f32.mrf.mxu0
        %v2408 = vadd.f32 0.0, %v2407
        %2409 = vdwg.mxu0
        %2410 = vmatpush.msra.mxu0 %v2386
        %2411 = vmatpush.msra.mxu0 %v2384
        %2412 = vmatpush.msra.mxu0 %v2382
        %2413 = vmatpush.msra.mxu0 %v2380
        %2414 = vmatpush.msra.mxu0 %v2378
        %2415 = vmatpush.msra.mxu0 %v2376
        %2416 = vmatpush.msra.mxu0 %v2374
        %2417 = vmatpush.msra.mxu0 %v2372
        %2418 = vmatpush.msra.mxu0 %v2370
        %2419 = vmatpush.msra.mxu0 %v2368
        %2420 = vmatpush.msra.mxu0 %v2366
        %2421 = vmatpush.msra.mxu0 %v2364
        %2422 = vmatpush.msra.mxu0 %v2362
        %2423 = vmatpush.msra.mxu0 %v2360
        %2424 = vmatpush.msra.mxu0 %v2358
        %2425 = vmatpush.msra.mxu0 %v2356
        %2426 = vmatmul.f32.gmra.mxu0 %v2188
        %v2427 = vpop.f32.mrf.mxu0
        %v2428 = vadd.f32 0.0, %v2427
        %2429 = vmatmul.f32.gmra.mxu0 %v2189
        %v2430 = vpop.f32.mrf.mxu0
        %v2431 = vadd.f32 0.0, %v2430
        %2432 = vdwg.mxu0
        %2433 = vmatpush.msra.mxu0 0.0
        %2434 = vmatpush.msra.mxu0 0.0
        %2435 = vmatpush.msra.mxu0 0.0
        %2436 = vmatpush.msra.mxu0 0.0
        %2437 = vmatpush.msra.mxu0 0.0
        %2438 = vmatpush.msra.mxu0 0.0
        %2439 = vmatpush.msra.mxu0 0.0
        %2440 = vmatpush.msra.mxu0 0.0
        %2441 = vmatpush.msra.mxu0 %v2353
        %2442 = vmatpush.msra.mxu0 %v2351
        %2443 = vmatpush.msra.mxu0 %v2349
        %2444 = vmatpush.msra.mxu0 %v2347
        %2445 = vmatpush.msra.mxu0 %v2345
        %2446 = vmatpush.msra.mxu0 %v2343
        %2447 = vmatpush.msra.mxu0 %v2341
        %2448 = vmatpush.msra.mxu0 %v2339
        %2449 = vmatmul.f32.gmra.mxu0 %v2288
        %v2450 = vpop.f32.mrf.mxu0
        %v2451 = vadd.f32 %v2405, %v2450
        %2452 = vmatmul.f32.gmra.mxu0 %v2291
        %v2453 = vpop.f32.mrf.mxu0
        %v2454 = vadd.f32 %v2408, %v2453
        %2455 = vdwg.mxu0
        %2456 = vmatpush.msra.mxu0 0.0
        %2457 = vmatpush.msra.mxu0 0.0
        %2458 = vmatpush.msra.mxu0 0.0
        %2459 = vmatpush.msra.mxu0 0.0
        %2460 = vmatpush.msra.mxu0 0.0
        %2461 = vmatpush.msra.mxu0 0.0
        %2462 = vmatpush.msra.mxu0 0.0
        %2463 = vmatpush.msra.mxu0 0.0
        %2464 = vmatpush.msra.mxu0 %v2354
        %2465 = vmatpush.msra.mxu0 %v2352
        %2466 = vmatpush.msra.mxu0 %v2350
        %2467 = vmatpush.msra.mxu0 %v2348
        %2468 = vmatpush.msra.mxu0 %v2346
        %2469 = vmatpush.msra.mxu0 %v2344
        %2470 = vmatpush.msra.mxu0 %v2342
        %2471 = vmatpush.msra.mxu0 %v2340
        %2472 = vmatmul.f32.gmra.mxu0 %v2288
        %v2473 = vpop.f32.mrf.mxu0
        %v2474 = vadd.f32 %v2428, %v2473
        %2475 = vmatmul.f32.gmra.mxu0 %v2291
        %v2476 = vpop.f32.mrf.mxu0
        %v2477 = vadd.f32 %v2431, %v2476
        %2478 = vdwg.mxu0
        %2479 = vmatpush.msra.mxu0 0.0
        %2480 = vmatpush.msra.mxu0 0.0
        %2481 = vmatpush.msra.mxu0 0.0
        %2482 = vmatpush.msra.mxu0 0.0
        %2483 = vmatpush.msra.mxu0 0.0
        %2484 = vmatpush.msra.mxu0 0.0
        %2485 = vmatpush.msra.mxu0 0.0
        %2486 = vmatpush.msra.mxu0 0.0
        %2487 = vmatpush.msra.mxu0 0.0
        %2488 = vmatpush.msra.mxu0 0.0
        %2489 = vmatpush.msra.mxu0 0.0
        %2490 = vmatpush.msra.mxu0 0.0
        %2491 = vmatpush.msra.mxu0 0.0
        %2492 = vmatpush.msra.mxu0 0.0
        %2493 = vmatpush.msra.mxu0 %v2454
        %2494 = vmatpush.msra.mxu0 %v2451
        %2495 = vmatmul.f32.gmra.mxu0 %v1483
        %v2496 = vpop.f32.mrf.mxu0
        %v2497 = vadd.f32 0.0, %v2496
        %2498 = vmatmul.f32.gmra.mxu0 %v1486
        %v2499 = vpop.f32.mrf.mxu0
        %v2500 = vadd.f32 0.0, %v2499
        %2501 = vdwg.mxu0
        %2502 = vmatpush.msra.mxu0 0.0
        %2503 = vmatpush.msra.mxu0 0.0
        %2504 = vmatpush.msra.mxu0 0.0
        %2505 = vmatpush.msra.mxu0 0.0
        %2506 = vmatpush.msra.mxu0 0.0
        %2507 = vmatpush.msra.mxu0 0.0
        %2508 = vmatpush.msra.mxu0 0.0
        %2509 = vmatpush.msra.mxu0 0.0
        %2510 = vmatpush.msra.mxu0 0.0
        %2511 = vmatpush.msra.mxu0 0.0
        %2512 = vmatpush.msra.mxu0 0.0
        %2513 = vmatpush.msra.mxu0 0.0
        %2514 = vmatpush.msra.mxu0 0.0
        %2515 = vmatpush.msra.mxu0 0.0
        %2516 = vmatpush.msra.mxu0 %v2477
        %2517 = vmatpush.msra.mxu0 %v2474
        %2518 = vmatmul.f32.gmra.mxu0 %v1483
        %v2519 = vpop.f32.mrf.mxu0
        %v2520 = vadd.f32 0.0, %v2519
        %2521 = vmatmul.f32.gmra.mxu0 %v1486
        %v2522 = vpop.f32.mrf.mxu0
        %v2523 = vadd.f32 0.0, %v2522
        %2524 = vdwg.mxu0
        %v2525 = vadd.f32 %v2311, %v2497
        %v2526 = vadd.f32 %v2334, %v2520
        %v2527 = vadd.f32 %v2314, %v2500
        %v2528 = vadd.f32 %v2337, %v2523
        %s2529 = scalar_lea.vmem [#allocation10], 256
        %v2530 = vld [vmem:[%s2529] sm:$0xff]
        %v2531 = vld [vmem:[%s2529 + $0x8] sm:$0xff]
        %v2532 = vld [vmem:[%s2529 + $0x10] sm:$0xff]
        %v2533 = vld [vmem:[%s2529 + $0x18] sm:$0xff]
        %v2534 = vld [vmem:[%s2529 + $0x20] sm:$0xff]
        %v2535 = vld [vmem:[%s2529 + $0x28] sm:$0xff]
        %v2536 = vld [vmem:[%s2529 + $0x30] sm:$0xff]
        %v2537 = vld [vmem:[%s2529 + $0x38] sm:$0xff]
        %v2538 = vld [vmem:[%s2529 + $0x40] sm:$0xff]
        %v2539 = vld [vmem:[%s2529 + $0x48] sm:$0xff]
        %v2540 = vld [vmem:[%s2529 + $0x50] sm:$0xff]
        %v2541 = vld [vmem:[%s2529 + $0x58] sm:$0xff]
        %v2542 = vld [vmem:[%s2529 + $0x60] sm:$0xff]
        %v2543 = vld [vmem:[%s2529 + $0x68] sm:$0xff]
        %v2544 = vld [vmem:[%s2529 + $0x70] sm:$0xff]
        %v2545 = vld [vmem:[%s2529 + $0x78] sm:$0xff]
        %s2546 = scalar_lea.vmem [#allocation11], 512
        %v2547 = vld [vmem:[%s2546] sm:$0xff]
        %v2548 = vld [vmem:[%s2546 + $0x8] sm:$0xff]
        %v2549 = vld [vmem:[%s2546 + $0x10] sm:$0xff]
        %v2550 = vld [vmem:[%s2546 + $0x18] sm:$0xff]
        %v2551 = vld [vmem:[%s2546 + $0x20] sm:$0xff]
        %v2552 = vld [vmem:[%s2546 + $0x28] sm:$0xff]
        %v2553 = vld [vmem:[%s2546 + $0x30] sm:$0xff]
        %v2554 = vld [vmem:[%s2546 + $0x38] sm:$0xff]
        %v2555 = vld [vmem:[%s2546 + $0x40] sm:$0xff]
        %v2556 = vld [vmem:[%s2546 + $0x48] sm:$0xff]
        %v2557 = vld [vmem:[%s2546 + $0x50] sm:$0xff]
        %v2558 = vld [vmem:[%s2546 + $0x58] sm:$0xff]
        %v2559 = vld [vmem:[%s2546 + $0x60] sm:$0xff]
        %v2560 = vld [vmem:[%s2546 + $0x68] sm:$0xff]
        %v2561 = vld [vmem:[%s2546 + $0x70] sm:$0xff]
        %v2562 = vld [vmem:[%s2546 + $0x78] sm:$0xff]
        %v2563 = vld [vmem:[%s2546 + $0x80] sm:$0xff]
        %v2564 = vld [vmem:[%s2546 + $0x88] sm:$0xff]
        %v2565 = vld [vmem:[%s2546 + $0x90] sm:$0xff]
        %v2566 = vld [vmem:[%s2546 + $0x98] sm:$0xff]
        %v2567 = vld [vmem:[%s2546 + $0xa0] sm:$0xff]
        %v2568 = vld [vmem:[%s2546 + $0xa8] sm:$0xff]
        %v2569 = vld [vmem:[%s2546 + $0xb0] sm:$0xff]
        %v2570 = vld [vmem:[%s2546 + $0xb8] sm:$0xff]
        %v2571 = vld [vmem:[%s2546 + $0xc0] sm:$0xff]
        %v2572 = vld [vmem:[%s2546 + $0xc8] sm:$0xff]
        %v2573 = vld [vmem:[%s2546 + $0xd0] sm:$0xff]
        %v2574 = vld [vmem:[%s2546 + $0xd8] sm:$0xff]
        %v2575 = vld [vmem:[%s2546 + $0xe0] sm:$0xff]
        %v2576 = vld [vmem:[%s2546 + $0xe8] sm:$0xff]
        %v2577 = vld [vmem:[%s2546 + $0xf0] sm:$0xff]
        %v2578 = vld [vmem:[%s2546 + $0xf8] sm:$0xff]
        %2579 = vmatpush.msra.mxu0 %v2577
        %2580 = vmatpush.msra.mxu0 %v2575
        %2581 = vmatpush.msra.mxu0 %v2573
        %2582 = vmatpush.msra.mxu0 %v2571
        %2583 = vmatpush.msra.mxu0 %v2569
        %2584 = vmatpush.msra.mxu0 %v2567
        %2585 = vmatpush.msra.mxu0 %v2565
        %2586 = vmatpush.msra.mxu0 %v2563
        %2587 = vmatpush.msra.mxu0 %v2561
        %2588 = vmatpush.msra.mxu0 %v2559
        %2589 = vmatpush.msra.mxu0 %v2557
        %2590 = vmatpush.msra.mxu0 %v2555
        %2591 = vmatpush.msra.mxu0 %v2553
        %2592 = vmatpush.msra.mxu0 %v2551
        %2593 = vmatpush.msra.mxu0 %v2549
        %2594 = vmatpush.msra.mxu0 %v2547
        %2595 = vmatmul.f32.gmra.mxu0 %v2188
        %v2596 = vpop.f32.mrf.mxu0
        %v2597 = vadd.f32 0.0, %v2596
        %2598 = vmatmul.f32.gmra.mxu0 %v2189
        %v2599 = vpop.f32.mrf.mxu0
        %v2600 = vadd.f32 0.0, %v2599
        %2601 = vdwg.mxu0
        %2602 = vmatpush.msra.mxu0 %v2578
        %2603 = vmatpush.msra.mxu0 %v2576
        %2604 = vmatpush.msra.mxu0 %v2574
        %2605 = vmatpush.msra.mxu0 %v2572
        %2606 = vmatpush.msra.mxu0 %v2570
        %2607 = vmatpush.msra.mxu0 %v2568
        %2608 = vmatpush.msra.mxu0 %v2566
        %2609 = vmatpush.msra.mxu0 %v2564
        %2610 = vmatpush.msra.mxu0 %v2562
        %2611 = vmatpush.msra.mxu0 %v2560
        %2612 = vmatpush.msra.mxu0 %v2558
        %2613 = vmatpush.msra.mxu0 %v2556
        %2614 = vmatpush.msra.mxu0 %v2554
        %2615 = vmatpush.msra.mxu0 %v2552
        %2616 = vmatpush.msra.mxu0 %v2550
        %2617 = vmatpush.msra.mxu0 %v2548
        %2618 = vmatmul.f32.gmra.mxu0 %v2188
        %v2619 = vpop.f32.mrf.mxu0
        %v2620 = vadd.f32 0.0, %v2619
        %2621 = vmatmul.f32.gmra.mxu0 %v2189
        %v2622 = vpop.f32.mrf.mxu0
        %v2623 = vadd.f32 0.0, %v2622
        %2624 = vdwg.mxu0
        %2625 = vmatpush.msra.mxu0 0.0
        %2626 = vmatpush.msra.mxu0 0.0
        %2627 = vmatpush.msra.mxu0 0.0
        %2628 = vmatpush.msra.mxu0 0.0
        %2629 = vmatpush.msra.mxu0 0.0
        %2630 = vmatpush.msra.mxu0 0.0
        %2631 = vmatpush.msra.mxu0 0.0
        %2632 = vmatpush.msra.mxu0 0.0
        %2633 = vmatpush.msra.mxu0 %v2544
        %2634 = vmatpush.msra.mxu0 %v2542
        %2635 = vmatpush.msra.mxu0 %v2540
        %2636 = vmatpush.msra.mxu0 %v2538
        %2637 = vmatpush.msra.mxu0 %v2536
        %2638 = vmatpush.msra.mxu0 %v2534
        %2639 = vmatpush.msra.mxu0 %v2532
        %2640 = vmatpush.msra.mxu0 %v2530
        %2641 = vmatmul.f32.gmra.mxu0 %v2288
        %v2642 = vpop.f32.mrf.mxu0
        %v2643 = vadd.f32 %v2597, %v2642
        %2644 = vmatmul.f32.gmra.mxu0 %v2291
        %v2645 = vpop.f32.mrf.mxu0
        %v2646 = vadd.f32 %v2600, %v2645
        %2647 = vdwg.mxu0
        %2648 = vmatpush.msra.mxu0 0.0
        %2649 = vmatpush.msra.mxu0 0.0
        %2650 = vmatpush.msra.mxu0 0.0
        %2651 = vmatpush.msra.mxu0 0.0
        %2652 = vmatpush.msra.mxu0 0.0
        %2653 = vmatpush.msra.mxu0 0.0
        %2654 = vmatpush.msra.mxu0 0.0
        %2655 = vmatpush.msra.mxu0 0.0
        %2656 = vmatpush.msra.mxu0 %v2545
        %2657 = vmatpush.msra.mxu0 %v2543
        %2658 = vmatpush.msra.mxu0 %v2541
        %2659 = vmatpush.msra.mxu0 %v2539
        %2660 = vmatpush.msra.mxu0 %v2537
        %2661 = vmatpush.msra.mxu0 %v2535
        %2662 = vmatpush.msra.mxu0 %v2533
        %2663 = vmatpush.msra.mxu0 %v2531
        %2664 = vmatmul.f32.gmra.mxu0 %v2288
        %v2665 = vpop.f32.mrf.mxu0
        %v2666 = vadd.f32 %v2620, %v2665
        %2667 = vmatmul.f32.gmra.mxu0 %v2291
        %v2668 = vpop.f32.mrf.mxu0
        %v2669 = vadd.f32 %v2623, %v2668
        %2670 = vdwg.mxu0
        %2671 = vmatpush.msra.mxu0 0.0
        %2672 = vmatpush.msra.mxu0 0.0
        %2673 = vmatpush.msra.mxu0 0.0
        %2674 = vmatpush.msra.mxu0 0.0
        %2675 = vmatpush.msra.mxu0 0.0
        %2676 = vmatpush.msra.mxu0 0.0
        %2677 = vmatpush.msra.mxu0 0.0
        %2678 = vmatpush.msra.mxu0 0.0
        %2679 = vmatpush.msra.mxu0 0.0
        %2680 = vmatpush.msra.mxu0 0.0
        %2681 = vmatpush.msra.mxu0 0.0
        %2682 = vmatpush.msra.mxu0 0.0
        %2683 = vmatpush.msra.mxu0 0.0
        %2684 = vmatpush.msra.mxu0 0.0
        %2685 = vmatpush.msra.mxu0 %v2646
        %2686 = vmatpush.msra.mxu0 %v2643
        %2687 = vmatmul.f32.gmra.mxu0 %v1570
        %v2688 = vpop.f32.mrf.mxu0
        %v2689 = vadd.f32 0.0, %v2688
        %2690 = vmatmul.f32.gmra.mxu0 %v1573
        %v2691 = vpop.f32.mrf.mxu0
        %v2692 = vadd.f32 0.0, %v2691
        %2693 = vdwg.mxu0
        %2694 = vmatpush.msra.mxu0 0.0
        %2695 = vmatpush.msra.mxu0 0.0
        %2696 = vmatpush.msra.mxu0 0.0
        %2697 = vmatpush.msra.mxu0 0.0
        %2698 = vmatpush.msra.mxu0 0.0
        %2699 = vmatpush.msra.mxu0 0.0
        %2700 = vmatpush.msra.mxu0 0.0
        %2701 = vmatpush.msra.mxu0 0.0
        %2702 = vmatpush.msra.mxu0 0.0
        %2703 = vmatpush.msra.mxu0 0.0
        %2704 = vmatpush.msra.mxu0 0.0
        %2705 = vmatpush.msra.mxu0 0.0
        %2706 = vmatpush.msra.mxu0 0.0
        %2707 = vmatpush.msra.mxu0 0.0
        %2708 = vmatpush.msra.mxu0 %v2669
        %2709 = vmatpush.msra.mxu0 %v2666
        %2710 = vmatmul.f32.gmra.mxu0 %v1570
        %v2711 = vpop.f32.mrf.mxu0
        %v2712 = vadd.f32 0.0, %v2711
        %2713 = vmatmul.f32.gmra.mxu0 %v1573
        %v2714 = vpop.f32.mrf.mxu0
        %v2715 = vadd.f32 0.0, %v2714
        %2716 = vdwg.mxu0
        %v2717 = vadd.f32 %v2525, %v2689
        %v2718 = vadd.f32 %v2526, %v2712
        %v2719 = vadd.f32 %v2527, %v2692
        %v2720 = vadd.f32 %v2528, %v2715
        %v2722 = vperm.slane %v2190, 0
        %v2723 = vperm.slane %v2190, 1
        %v2726 = vadd.f32 %v2717, %v2722
        %v2727 = vadd.f32 %v2718, %v2723
        %v2728 = vadd.f32 %v2719, %v2722
        %v2729 = vadd.f32 %v2720, %v2723
        %v2730 = vld [vmem:[%s27] sm:$0x1]
        %s2731 = scalar_lea.vmem [#allocation13], 192
        %v2732 = vld [vmem:[%s2731] sm:$0xff]
        %v2733 = vld [vmem:[%s2731 + $0x8] sm:$0xff]
        %v2734 = vld [vmem:[%s2731 + $0x10] sm:$0xff]
        %v2735 = vld [vmem:[%s2731 + $0x18] sm:$0xff]
        %v2736 = vld [vmem:[%s2731 + $0x20] sm:$0xff]
        %v2737 = vld [vmem:[%s2731 + $0x28] sm:$0xff]
        %v2738 = vld [vmem:[%s2731 + $0x30] sm:$0xff]
        %v2739 = vld [vmem:[%s2731 + $0x38] sm:$0xff]
        %v2740 = vld [vmem:[%s2731 + $0x40] sm:$0xff]
        %v2741 = vld [vmem:[%s2731 + $0x48] sm:$0xff]
        %v2742 = vld [vmem:[%s2731 + $0x50] sm:$0xff]
        %v2743 = vld [vmem:[%s2731 + $0x58] sm:$0xff]
        %v2744 = vld [vmem:[%s2731 + $0x60] sm:$0xff]
        %v2745 = vld [vmem:[%s2731 + $0x68] sm:$0xff]
        %v2746 = vld [vmem:[%s2731 + $0x70] sm:$0xff]
        %v2747 = vld [vmem:[%s2731 + $0x78] sm:$0xff]
        %v2748 = vld [vmem:[%s2731 + $0x80] sm:$0xff]
        %v2749 = vld [vmem:[%s2731 + $0x88] sm:$0xff]
        %v2750 = vld [vmem:[%s2731 + $0x90] sm:$0xff]
        %v2751 = vld [vmem:[%s2731 + $0x98] sm:$0xff]
        %v2752 = vld [vmem:[%s2731 + $0xa0] sm:$0xff]
        %v2753 = vld [vmem:[%s2731 + $0xa8] sm:$0xff]
        %v2754 = vld [vmem:[%s2731 + $0xb0] sm:$0xff]
        %v2755 = vld [vmem:[%s2731 + $0xb8] sm:$0xff]
        %v2756 = vld [vmem:[#allocation13] sm:$0xff]
        %v2757 = vld [vmem:[#allocation13 + $0x8] sm:$0xff]
        %v2758 = vld [vmem:[#allocation13 + $0x10] sm:$0xff]
        %v2759 = vld [vmem:[#allocation13 + $0x18] sm:$0xff]
        %v2760 = vld [vmem:[#allocation13 + $0x20] sm:$0xff]
        %v2761 = vld [vmem:[#allocation13 + $0x28] sm:$0xff]
        %v2762 = vld [vmem:[#allocation13 + $0x30] sm:$0xff]
        %v2763 = vld [vmem:[#allocation13 + $0x38] sm:$0xff]
        %v2764 = vld [vmem:[#allocation13 + $0x40] sm:$0xff]
        %v2765 = vld [vmem:[#allocation13 + $0x48] sm:$0xff]
        %v2766 = vld [vmem:[#allocation13 + $0x50] sm:$0xff]
        %v2767 = vld [vmem:[#allocation13 + $0x58] sm:$0xff]
        %v2768 = vld [vmem:[#allocation13 + $0x60] sm:$0xff]
        %v2769 = vld [vmem:[#allocation13 + $0x68] sm:$0xff]
        %v2770 = vld [vmem:[#allocation13 + $0x70] sm:$0xff]
        %v2771 = vld [vmem:[#allocation13 + $0x78] sm:$0xff]
        %v2772 = vld [vmem:[#allocation13 + $0x80] sm:$0xff]
        %v2773 = vld [vmem:[#allocation13 + $0x88] sm:$0xff]
        %v2774 = vld [vmem:[#allocation13 + $0x90] sm:$0xff]
        %v2775 = vld [vmem:[#allocation13 + $0x98] sm:$0xff]
        %v2776 = vld [vmem:[#allocation13 + $0xa0] sm:$0xff]
        %v2777 = vld [vmem:[#allocation13 + $0xa8] sm:$0xff]
        %v2778 = vld [vmem:[#allocation13 + $0xb0] sm:$0xff]
        %v2779 = vld [vmem:[#allocation13 + $0xb8] sm:$0xff]
        %v2781 = vsel %vm1452, %v2727, 0
        %v2784 = vsel %vm1452, %v2729, 0
        %2786 = vmatpush.msra.mxu0 %v2771
        %2787 = vmatpush.msra.mxu0 %v2770
        %2788 = vmatpush.msra.mxu0 %v2769
        %2789 = vmatpush.msra.mxu0 %v2768
        %2790 = vmatpush.msra.mxu0 %v2767
        %2791 = vmatpush.msra.mxu0 %v2766
        %2792 = vmatpush.msra.mxu0 %v2765
        %2793 = vmatpush.msra.mxu0 %v2764
        %2794 = vmatpush.msra.mxu0 %v2763
        %2795 = vmatpush.msra.mxu0 %v2762
        %2796 = vmatpush.msra.mxu0 %v2761
        %2797 = vmatpush.msra.mxu0 %v2760
        %2798 = vmatpush.msra.mxu0 %v2759
        %2799 = vmatpush.msra.mxu0 %v2758
        %2800 = vmatpush.msra.mxu0 %v2757
        %2801 = vmatpush.msra.mxu0 %v2756
        %2802 = vmatmul.f32.gmra.mxu0 %v2726
        %v2803 = vpop.f32.mrf.mxu0
        %v2804 = vadd.f32 0.0, %v2803
        %2805 = vmatmul.f32.gmra.mxu0 %v2728
        %v2806 = vpop.f32.mrf.mxu0
        %v2807 = vadd.f32 0.0, %v2806
        %2808 = vdwg.mxu0
        %2809 = vmatpush.msra.mxu0 0.0
        %2810 = vmatpush.msra.mxu0 0.0
        %2811 = vmatpush.msra.mxu0 0.0
        %2812 = vmatpush.msra.mxu0 0.0
        %2813 = vmatpush.msra.mxu0 0.0
        %2814 = vmatpush.msra.mxu0 0.0
        %2815 = vmatpush.msra.mxu0 0.0
        %2816 = vmatpush.msra.mxu0 0.0
        %2817 = vmatpush.msra.mxu0 %v2779
        %2818 = vmatpush.msra.mxu0 %v2778
        %2819 = vmatpush.msra.mxu0 %v2777
        %2820 = vmatpush.msra.mxu0 %v2776
        %2821 = vmatpush.msra.mxu0 %v2775
        %2822 = vmatpush.msra.mxu0 %v2774
        %2823 = vmatpush.msra.mxu0 %v2773
        %2824 = vmatpush.msra.mxu0 %v2772
        %2825 = vmatmul.f32.gmra.mxu0 %v2781
        %v2826 = vpop.f32.mrf.mxu0
        %v2827 = vadd.f32 %v2804, %v2826
        %2828 = vmatmul.f32.gmra.mxu0 %v2784
        %v2829 = vpop.f32.mrf.mxu0
        %v2830 = vadd.f32 %v2807, %v2829
        %2831 = vdwg.mxu0
        %2832 = vmatpush.msra.mxu0 0.0
        %2833 = vmatpush.msra.mxu0 0.0
        %2834 = vmatpush.msra.mxu0 0.0
        %2835 = vmatpush.msra.mxu0 0.0
        %2836 = vmatpush.msra.mxu0 0.0
        %2837 = vmatpush.msra.mxu0 0.0
        %2838 = vmatpush.msra.mxu0 0.0
        %2839 = vmatpush.msra.mxu0 0.0
        %2840 = vmatpush.msra.mxu0 0.0
        %2841 = vmatpush.msra.mxu0 0.0
        %2842 = vmatpush.msra.mxu0 0.0
        %2843 = vmatpush.msra.mxu0 0.0
        %2844 = vmatpush.msra.mxu0 0.0
        %2845 = vmatpush.msra.mxu0 0.0
        %2846 = vmatpush.msra.mxu0 %v2830
        %2847 = vmatpush.msra.mxu0 %v2827
        %2848 = vmatmul.f32.gmra.mxu0 %v1483
        %v2849 = vpop.f32.mrf.mxu0
        %v2850 = vadd.f32 0.0, %v2849
        %2851 = vmatmul.f32.gmra.mxu0 %v1486
        %v2852 = vpop.f32.mrf.mxu0
        %v2853 = vadd.f32 0.0, %v2852
        %2854 = vdwg.mxu0
        %2855 = vmatpush.msra.mxu0 %v2747
        %2856 = vmatpush.msra.mxu0 %v2746
        %2857 = vmatpush.msra.mxu0 %v2745
        %2858 = vmatpush.msra.mxu0 %v2744
        %2859 = vmatpush.msra.mxu0 %v2743
        %2860 = vmatpush.msra.mxu0 %v2742
        %2861 = vmatpush.msra.mxu0 %v2741
        %2862 = vmatpush.msra.mxu0 %v2740
        %2863 = vmatpush.msra.mxu0 %v2739
        %2864 = vmatpush.msra.mxu0 %v2738
        %2865 = vmatpush.msra.mxu0 %v2737
        %2866 = vmatpush.msra.mxu0 %v2736
        %2867 = vmatpush.msra.mxu0 %v2735
        %2868 = vmatpush.msra.mxu0 %v2734
        %2869 = vmatpush.msra.mxu0 %v2733
        %2870 = vmatpush.msra.mxu0 %v2732
        %2871 = vmatmul.f32.gmra.mxu0 %v2726
        %v2872 = vpop.f32.mrf.mxu0
        %v2873 = vadd.f32 %v2850, %v2872
        %2874 = vmatmul.f32.gmra.mxu0 %v2728
        %v2875 = vpop.f32.mrf.mxu0
        %v2876 = vadd.f32 %v2853, %v2875
        %2877 = vdwg.mxu0
        %2878 = vmatpush.msra.mxu0 0.0
        %2879 = vmatpush.msra.mxu0 0.0
        %2880 = vmatpush.msra.mxu0 0.0
        %2881 = vmatpush.msra.mxu0 0.0
        %2882 = vmatpush.msra.mxu0 0.0
        %2883 = vmatpush.msra.mxu0 0.0
        %2884 = vmatpush.msra.mxu0 0.0
        %2885 = vmatpush.msra.mxu0 0.0
        %2886 = vmatpush.msra.mxu0 %v2755
        %2887 = vmatpush.msra.mxu0 %v2754
        %2888 = vmatpush.msra.mxu0 %v2753
        %2889 = vmatpush.msra.mxu0 %v2752
        %2890 = vmatpush.msra.mxu0 %v2751
        %2891 = vmatpush.msra.mxu0 %v2750
        %2892 = vmatpush.msra.mxu0 %v2749
        %2893 = vmatpush.msra.mxu0 %v2748
        %2894 = vmatmul.f32.gmra.mxu0 %v2781
        %v2895 = vpop.f32.mrf.mxu0
        %v2896 = vadd.f32 %v2873, %v2895
        %2897 = vmatmul.f32.gmra.mxu0 %v2784
        %v2898 = vpop.f32.mrf.mxu0
        %v2899 = vadd.f32 %v2876, %v2898
        %2900 = vdwg.mxu0
        %s2901 = scalar_lea.vmem [#allocation13], 384
        %v2902 = vld [vmem:[%s2901] sm:$0xff]
        %v2903 = vld [vmem:[%s2901 + $0x8] sm:$0xff]
        %v2904 = vld [vmem:[%s2901 + $0x10] sm:$0xff]
        %v2905 = vld [vmem:[%s2901 + $0x18] sm:$0xff]
        %v2906 = vld [vmem:[%s2901 + $0x20] sm:$0xff]
        %v2907 = vld [vmem:[%s2901 + $0x28] sm:$0xff]
        %v2908 = vld [vmem:[%s2901 + $0x30] sm:$0xff]
        %v2909 = vld [vmem:[%s2901 + $0x38] sm:$0xff]
        %v2910 = vld [vmem:[%s2901 + $0x40] sm:$0xff]
        %v2911 = vld [vmem:[%s2901 + $0x48] sm:$0xff]
        %v2912 = vld [vmem:[%s2901 + $0x50] sm:$0xff]
        %v2913 = vld [vmem:[%s2901 + $0x58] sm:$0xff]
        %v2914 = vld [vmem:[%s2901 + $0x60] sm:$0xff]
        %v2915 = vld [vmem:[%s2901 + $0x68] sm:$0xff]
        %v2916 = vld [vmem:[%s2901 + $0x70] sm:$0xff]
        %v2917 = vld [vmem:[%s2901 + $0x78] sm:$0xff]
        %v2918 = vld [vmem:[%s2901 + $0x80] sm:$0xff]
        %v2919 = vld [vmem:[%s2901 + $0x88] sm:$0xff]
        %v2920 = vld [vmem:[%s2901 + $0x90] sm:$0xff]
        %v2921 = vld [vmem:[%s2901 + $0x98] sm:$0xff]
        %v2922 = vld [vmem:[%s2901 + $0xa0] sm:$0xff]
        %v2923 = vld [vmem:[%s2901 + $0xa8] sm:$0xff]
        %v2924 = vld [vmem:[%s2901 + $0xb0] sm:$0xff]
        %v2925 = vld [vmem:[%s2901 + $0xb8] sm:$0xff]
        %2926 = vmatpush.msra.mxu0 %v2917
        %2927 = vmatpush.msra.mxu0 %v2916
        %2928 = vmatpush.msra.mxu0 %v2915
        %2929 = vmatpush.msra.mxu0 %v2914
        %2930 = vmatpush.msra.mxu0 %v2913
        %2931 = vmatpush.msra.mxu0 %v2912
        %2932 = vmatpush.msra.mxu0 %v2911
        %2933 = vmatpush.msra.mxu0 %v2910
        %2934 = vmatpush.msra.mxu0 %v2909
        %2935 = vmatpush.msra.mxu0 %v2908
        %2936 = vmatpush.msra.mxu0 %v2907
        %2937 = vmatpush.msra.mxu0 %v2906
        %2938 = vmatpush.msra.mxu0 %v2905
        %2939 = vmatpush.msra.mxu0 %v2904
        %2940 = vmatpush.msra.mxu0 %v2903
        %2941 = vmatpush.msra.mxu0 %v2902
        %2942 = vmatmul.f32.gmra.mxu0 %v2726
        %v2943 = vpop.f32.mrf.mxu0
        %v2944 = vadd.f32 0.0, %v2943
        %2945 = vmatmul.f32.gmra.mxu0 %v2728
        %v2946 = vpop.f32.mrf.mxu0
        %v2947 = vadd.f32 0.0, %v2946
        %2948 = vdwg.mxu0
        %2949 = vmatpush.msra.mxu0 0.0
        %2950 = vmatpush.msra.mxu0 0.0
        %2951 = vmatpush.msra.mxu0 0.0
        %2952 = vmatpush.msra.mxu0 0.0
        %2953 = vmatpush.msra.mxu0 0.0
        %2954 = vmatpush.msra.mxu0 0.0
        %2955 = vmatpush.msra.mxu0 0.0
        %2956 = vmatpush.msra.mxu0 0.0
        %2957 = vmatpush.msra.mxu0 %v2925
        %2958 = vmatpush.msra.mxu0 %v2924
        %2959 = vmatpush.msra.mxu0 %v2923
        %2960 = vmatpush.msra.mxu0 %v2922
        %2961 = vmatpush.msra.mxu0 %v2921
        %2962 = vmatpush.msra.mxu0 %v2920
        %2963 = vmatpush.msra.mxu0 %v2919
        %2964 = vmatpush.msra.mxu0 %v2918
        %2965 = vmatmul.f32.gmra.mxu0 %v2781
        %v2966 = vpop.f32.mrf.mxu0
        %v2967 = vadd.f32 %v2944, %v2966
        %2968 = vmatmul.f32.gmra.mxu0 %v2784
        %v2969 = vpop.f32.mrf.mxu0
        %v2970 = vadd.f32 %v2947, %v2969
        %2971 = vdwg.mxu0
        %2972 = vmatpush.msra.mxu0 0.0
        %2973 = vmatpush.msra.mxu0 0.0
        %2974 = vmatpush.msra.mxu0 0.0
        %2975 = vmatpush.msra.mxu0 0.0
        %2976 = vmatpush.msra.mxu0 0.0
        %2977 = vmatpush.msra.mxu0 0.0
        %2978 = vmatpush.msra.mxu0 0.0
        %2979 = vmatpush.msra.mxu0 0.0
        %2980 = vmatpush.msra.mxu0 0.0
        %2981 = vmatpush.msra.mxu0 0.0
        %2982 = vmatpush.msra.mxu0 0.0
        %2983 = vmatpush.msra.mxu0 0.0
        %2984 = vmatpush.msra.mxu0 0.0
        %2985 = vmatpush.msra.mxu0 0.0
        %2986 = vmatpush.msra.mxu0 %v2970
        %2987 = vmatpush.msra.mxu0 %v2967
        %2988 = vmatmul.f32.gmra.mxu0 %v1570
        %v2989 = vpop.f32.mrf.mxu0
        %v2990 = vadd.f32 0.0, %v2989
        %2991 = vmatmul.f32.gmra.mxu0 %v1573
        %v2992 = vpop.f32.mrf.mxu0
        %v2993 = vadd.f32 0.0, %v2992
        %2994 = vdwg.mxu0
        %v2995 = vadd.f32 %v2896, %v2990
        %v2996 = vadd.f32 %v2899, %v2993
        %v2998 = vperm.slane %v2730, 0
        %v3000 = vadd.f32 %v2995, %v2998
        %v3001 = vadd.f32 %v2996, %v2998
        %3002 = vst.msk [vmem:[%s980] sm:$0xff] %vm1043, %v3000
        %3003 = vst.msk [vmem:[%s980 + $0x8] sm:$0xff] %vm1043, %v3001
        %s3004 = sand.u32 %s657, 1
        %s3005 = scalar_lea.sflag [#allocation4], %s3004
        %s3006 = sand.u32 %s657, 1
        %s3007 = smul.addr %s3006, 16
        %s3008 = scalar_lea.vmem [#allocation14], %s3007
        // Predicated region
        $region161: #{aggregation_forward.1} parent=131 // pred_check
          %p3009 = pneg %p667
        $region162: #{aggregation_forward.1} parent=131 // pred_check_branch
          %3011 = sbr.rel (%p3009) target = $region164
        $region163: #{aggregation_forward.1} parent=131 // pred_region
          %3013 = vsyncadd %s3005, 0
          %s3014 = smul.addr %s46, 2
          %s3015 = smul.addr %s3014, 8
          %s3016 = scalar_lea.hbm %s28, %s3015
          %s3017 = sshll.u32 %s3008, 4
          %s3018 = int_to_ptr.vmem [resolvable:$true] %s3017
          %s3019 = sshll.u32 %s3016, 4
          %s3020 = int_to_ptr.hbm [resolvable:$true] %s3019
          %3025 = dma.vmem_to_hbm [thread:$0]  %s3018, 256, %s3020, %s3005, 128, 128, 8
        $region164: #{aggregation_forward.1} parent=131 // pred_fallthru
          _
      $region132: #{aggregation_forward.1} parent=5 // pred_fallthru
        _
      %p3026 = scmp.le.s32.totalorder 2, %s41
      // Predicated region
      $region165: #{aggregation_forward.1} parent=5 // pred_check
        %p3027 = pneg %p3026
      $region166: #{aggregation_forward.1} parent=5 // pred_check_branch
        %3029 = sbr.rel (%p3027) target = $region168
      $region167: #{aggregation_forward.1} parent=5 // pred_region
        %s3030 = ssub.s32 %s41, 2
        // Predicated region
        $region169: #{aggregation_forward.1} parent=167 // pred_check
          %p3031 = pneg %p673
        $region170: #{aggregation_forward.1} parent=167 // pred_check_branch
          %3033 = sbr.rel (%p3031) target = $region172
        $region171: #{aggregation_forward.1} parent=167 // pred_region
          %s3034 = sand.u32 %s658, 1
          %s3035 = scalar_lea.sflag [#allocation4], %s3034
          %s3036 = sand.u32 %s658, 1
          %s3037 = smul.addr %s3036, 16
          %s3038 = scalar_lea.vmem [#allocation14], %s3037
          %3040 = dma.done %s3035, 256
        $region172: #{aggregation_forward.1} parent=167 // pred_fallthru
          _
      $region168: #{aggregation_forward.1} parent=5 // pred_fallthru
        _
    $region6: #{aggregation_forward.1} parent=1 // loop_footer
      %s45 = sadd.s32 1, %s41
    $region7: #{aggregation_forward.1} parent=1 // loop_footer_branch
      %40 = sbr.rel target = $region3
    $region8: #{aggregation_forward.1} parent=1 // loop_exit
      _
    %3041 = vsyncpa [#allocation3], 1
    %s3042 = scalar_lea.sflag [#allocation3], 1
    %3043 = vsyncpa %s3042, 1
    %3044 = vsyncpa [#allocation6], 1
    %3045 = vsyncpa [#allocation9], 1
    %3046 = vsyncpa [#allocation12], 1
    %3047 = vsyncpa [#allocation4], 1
    %s3048 = scalar_lea.sflag [#allocation4], 1
    %3049 = vsyncpa %s3048, 1

</llo_original>
